<compile_context>
chip_gen: v7x
topology: tpu7x:2x2x1
jax: 0.10.0
libtpu: 0.0.40
codegen_flags: <defaults>
</compile_context>

<pallas_src>
import functools

import jax
import jax.numpy as jnp
from jax import lax
from jax.experimental import pallas as pl
from jax.experimental.pallas import tpu as pltpu

EPS = 1e-5


def _round_up(x, m):
    return (x + m - 1) // m * m


def _vmem_limit_bytes(need_bytes):
    # generous headroom, capped below v7x's 64 MiB physical VMEM
    return int(min(56 * 1024 * 1024, max(32 * 1024 * 1024, 2 * need_bytes)))


# ----------------------------------------------------------------------------
# Kernel 1: in-kernel conv (K*K shifted bf16 matmuls, f32 accumulation)
#           + BN batch statistics + finalize scale/shift.
# Grid: (Cout tiles ["parallel"], images ["arbitrary" -> stats accumulate]).
# ----------------------------------------------------------------------------
def _conv_stats_kernel(x_ref, w_ref, gamma_ref, beta_ref,
                       y_ref, scale_ref, shift_ref,
                       sum_sc, sq_sc, *, k, width, wo, how, m_valid):
    n = pl.program_id(1)

    @pl.when(n == 0)
    def _():
        sum_sc[...] = jnp.zeros_like(sum_sc)
        sq_sc[...] = jnp.zeros_like(sq_sc)

    # Whole zero-padded image (flat H*W rows, Cin lanes).  Upcast once so the
    # K*K shifted row-window slices are plain f32 sublane shifts; downcast the
    # slice for the MXU.
    xv = x_ref[...].astype(jnp.float32)                      # (hw_p, cin_p)

    acc = None
    for kh in range(k):
        for kw in range(k):
            off = kh * width + kw                            # static offset
            a = xv[off:off + how, :].astype(jnp.bfloat16)    # (how, cin_p)
            d = jnp.dot(a, w_ref[kh * k + kw],               # (cin_p, tn)
                        preferred_element_type=jnp.float32)
            acc = d if acc is None else acc + d              # (how, tn) f32

    y_ref[...] = acc.astype(y_ref.dtype)                     # bf16 intermediate

    # Columns w >= wo of each output row are windows that ran off the right
    # image edge -> exclude them from the batch statistics.
    col = lax.broadcasted_iota(jnp.int32, (how, 1), 0) % width
    msk = (col < wo).astype(jnp.float32)
    ym = acc * msk
    sum_sc[...] += jnp.sum(ym, axis=0, keepdims=True)
    sq_sc[...] += jnp.sum(ym * acc, axis=0, keepdims=True)   # sum of y^2 (masked)

    @pl.when(n == pl.num_programs(1) - 1)
    def _():
        inv_n = jnp.float32(1.0 / m_valid)
        mean = sum_sc[...] * inv_n
        var = jnp.maximum(sq_sc[...] * inv_n - mean * mean, 0.0)   # clamp >= 0
        scale = gamma_ref[...] * lax.rsqrt(var + EPS)
        scale_ref[...] = scale
        shift_ref[...] = beta_ref[...] - mean * scale


def conv_stats(x_flat, w2, gamma_p, beta_p, *, k, width, wo, how, tn, m_valid):
    n_img, hw_p, cin_p = x_flat.shape
    cout_pad = w2.shape[-1]
    grid = (cout_pad // tn, n_img)

    kern = functools.partial(_conv_stats_kernel, k=k, width=width, wo=wo,
                             how=how, m_valid=m_valid)

    need = (2 * hw_p * cin_p * 2 +          # x block (bf16), double buffered
            2 * k * k * cin_p * tn * 2 +    # weight block (bf16)
            2 * how * tn * 2 +              # y block (bf16)
            hw_p * cin_p * 4 +              # f32 image value
            4 * how * tn * 4)               # f32 accumulator + temps
    vec = pl.BlockSpec((1, tn), lambda j, n: (0, j))

    return pl.pallas_call(
        kern,
        out_shape=(jax.ShapeDtypeStruct((n_img, how, cout_pad), jnp.bfloat16),
                   jax.ShapeDtypeStruct((1, cout_pad), jnp.float32),
                   jax.ShapeDtypeStruct((1, cout_pad), jnp.float32)),
        grid_spec=pltpu.PrefetchScalarGridSpec(
            num_scalar_prefetch=0,
            grid=grid,
            in_specs=[
                pl.BlockSpec((None, hw_p, cin_p), lambda j, n: (n, 0, 0)),  # x
                pl.BlockSpec((k * k, cin_p, tn), lambda j, n: (0, 0, j)),   # w
                vec,                         # gamma
                vec,                         # beta
            ],
            out_specs=[
                pl.BlockSpec((None, how, tn), lambda j, n: (n, 0, j)),      # y
                vec,                         # scale
                vec,                         # shift
            ],
            scratch_shapes=[pltpu.VMEM((1, tn), jnp.float32),
                            pltpu.VMEM((1, tn), jnp.float32)],
        ),
        compiler_params=pltpu.CompilerParams(
            dimension_semantics=("parallel", "arbitrary"),
            vmem_limit_bytes=_vmem_limit_bytes(need)),
    )(x_flat, w2, gamma_p, beta_p)


# ----------------------------------------------------------------------------
# Kernel 2: out = max(y * scale + shift, 0), transposed to channel-major so
#           the NCHW relayout never hits XLA (only a thin unpad slice remains).
# ----------------------------------------------------------------------------
def _bn_relu_kernel(y_ref, scale_ref, shift_ref, o_ref):
    y = y_ref[...].astype(jnp.float32)                        # (how, tn)
    z = jnp.maximum(y * scale_ref[...] + shift_ref[...], jnp.float32(0.0))
    o_ref[...] = z.T.astype(o_ref.dtype)                      # (tn, how)


def bn_relu_apply(y, scale, shift, *, tn):
    n_img, how, cout_pad = y.shape
    grid = (n_img, cout_pad // tn)
    vec = pl.BlockSpec((1, tn), lambda n, j: (0, j))
    need = 2 * how * tn * 2 + 2 * tn * how * 4 + 2 * how * tn * 4

    return pl.pallas_call(
        _bn_relu_kernel,
        out_shape=jax.ShapeDtypeStruct((n_img, cout_pad, how), jnp.float32),
        grid_spec=pltpu.PrefetchScalarGridSpec(
            num_scalar_prefetch=0,
            grid=grid,
            in_specs=[pl.BlockSpec((None, how, tn), lambda n, j: (n, 0, j)),
                      vec, vec],
            out_specs=pl.BlockSpec((None, tn, how), lambda n, j: (n, j, 0)),
        ),
        compiler_params=pltpu.CompilerParams(
            dimension_semantics=("parallel", "parallel"),
            vmem_limit_bytes=_vmem_limit_bytes(need)),
    )(y, scale, shift)


# ----------------------------------------------------------------------------
# JAX wrapper reproducing Conv2d.forward: conv (k=3, s=1, no bias) -> BN -> ReLU
# ----------------------------------------------------------------------------
@jax.jit
def conv2d_bn_relu(x, weight, gamma, beta):
    """x: (N, Cin, H, W) NCHW; weight: (Cout, Cin, K, K). Returns NCHW."""
    n, cin, h, w = x.shape
    cout, _, k, _ = weight.shape
    ho, wo = h - k + 1, w - k + 1
    how = ho * w                              # output kept on the full-W grid
    hw_p = _round_up(h * w + (k - 1), 8)      # room for the largest tap shift
    cin_p = _round_up(cin, 16)
    cout_pad = _round_up(cout, 256) if cout > 128 else _round_up(cout, 128)
    tn = 256 if cout_pad >= 256 else 128
    m_valid = n * ho * wo

    # NHWC, bf16 before any relayout, flattened spatial rows, zero padded.
    x_flat = x.astype(jnp.bfloat16).transpose(0, 2, 3, 1).reshape(n, h * w, cin)
    x_flat = jnp.pad(x_flat, ((0, 0), (0, hw_p - h * w), (0, cin_p - cin)))

    # (Cout, Cin, Kh, Kw) -> (Kh*Kw, Cin_p, Cout_pad), taps ordered (kh, kw).
    w2 = weight.astype(jnp.bfloat16).transpose(2, 3, 1, 0).reshape(k * k, cin, cout)
    w2 = jnp.pad(w2, ((0, 0), (0, cin_p - cin), (0, cout_pad - cout)))

    gamma_p = jnp.pad(gamma.astype(jnp.float32),
                      (0, cout_pad - cout)).reshape(1, cout_pad)
    beta_p = jnp.pad(beta.astype(jnp.float32),
                     (0, cout_pad - cout)).reshape(1, cout_pad)

    y, scale, shift = conv_stats(x_flat, w2, gamma_p, beta_p, k=k, width=w,
                                 wo=wo, how=how, tn=tn, m_valid=m_valid)
    out = bn_relu_apply(y, scale, shift, tn=tn)     # (N, Cout_pad, Ho*W) f32

    # Thin unpad only: drop padded channels and the invalid right-edge columns.
    out = out[:, :cout, :].reshape(n, cout, ho, w)[:, :, :, :wo]
    return out


# ----------------------------------------------------------------------------
# Reference (plain JAX).  Conv inputs rounded to bf16 and y quantized to bf16
# before the BN apply to mirror the kernel's precision; stats stay f32.
# ----------------------------------------------------------------------------
def _reference(x, weight, gamma, beta):
    xq = x.astype(jnp.bfloat16).astype(jnp.float32)
    wq = weight.astype(jnp.bfloat16).astype(jnp.float32)
    y = lax.conv_general_dilated(
        xq, wq, window_strides=(1, 1), padding='VALID',
        dimension_numbers=('NCHW', 'OIHW', 'NCHW'))
    mean = jnp.mean(y, axis=(0, 2, 3), keepdims=True)
    var = jnp.var(y, axis=(0, 2, 3), keepdims=True)        # biased (train BN)
    yq = y.astype(jnp.bfloat16).astype(jnp.float32)        # kernel stores y bf16
    yhat = (yq - mean) * lax.rsqrt(var + EPS)
    yhat = yhat * gamma.reshape(1, -1, 1, 1) + beta.reshape(1, -1, 1, 1)
    return jnp.maximum(yhat, 0.0)


if __name__ == "__main__":
    key = jax.random.PRNGKey(0)
    kx, kw_key = jax.random.split(key)

    N, CIN, H, W = 2, 4, 16, 16
    COUT, K = 8, 3

    x = jax.random.normal(kx, (N, CIN, H, W), dtype=jnp.float32)
    # deterministic kaiming-style uniform init for the conv weight
    fan_in = CIN * K * K
    bound = (6.0 / fan_in) ** 0.5
    weight = jax.random.uniform(kw_key, (COUT, CIN, K, K), dtype=jnp.float32,
                                minval=-bound, maxval=bound)
    gamma = jnp.ones((COUT,), jnp.float32)    # init_bn: ones
    beta = jnp.zeros((COUT,), jnp.float32)    # init_bn: zeros

    out = jax.block_until_ready(conv2d_bn_relu(x, weight, gamma, beta))

    ref = _reference(x, weight, gamma, beta)
    assert out.shape == (N, COUT, H - K + 1, W - K + 1), out.shape
    max_err = float(jnp.max(jnp.abs(out - ref)))
    assert jnp.allclose(out, ref, atol=5e-3, rtol=5e-3), max_err

    print("KERNEL_OK")
</pallas_src>

<mosaic_0001>
module attributes {stable_mosaic.version = 11 : i64} {
  func.func @_bn_relu_kernel(%arg0: i32, %arg1: i32, %arg2: memref<1x224x128xbf16, #tpu.memory_space<vmem>>, %arg3: memref<1x128xf32, #tpu.memory_space<vmem>>, %arg4: memref<1x128xf32, #tpu.memory_space<vmem>>, %arg5: memref<1x128x224xf32, #tpu.memory_space<vmem>>) attributes {dimension_semantics = [#tpu.dimension_semantics<parallel>, #tpu.dimension_semantics<parallel>], iteration_bounds = array<i64: 2, 1>, scalar_prefetch = 0 : i64, scratch_operands = 0 : i64, tpu.core_type = #tpu.core_type<tc>, window_params = [{transform_indices = @transform_0, window_bounds = array<i64: 1, 224, 128>}, {transform_indices = @transform_1, window_bounds = array<i64: 1, 128>}, {transform_indices = @transform_2, window_bounds = array<i64: 1, 128>}, {transform_indices = @transform_3, window_bounds = array<i64: 1, 128, 224>}]} {
    %c0 = arith.constant 0 : index
    %c0_0 = arith.constant 0 : index
    %c0_1 = arith.constant 0 : index
    %0 = vector.load %arg2[%c0, %c0_0, %c0_1] : memref<1x224x128xbf16, #tpu.memory_space<vmem>>, vector<1x224x128xbf16>
    %1 = vector.shape_cast %0 : vector<1x224x128xbf16> to vector<224x128xbf16>
    %2 = arith.extf %1 : vector<224x128xbf16> to vector<224x128xf32>
    %c0_2 = arith.constant 0 : index
    %c0_3 = arith.constant 0 : index
    %3 = vector.load %arg3[%c0_2, %c0_3] : memref<1x128xf32, #tpu.memory_space<vmem>>, vector<1x128xf32>
    %4 = vector.broadcast %3 : vector<1x128xf32> to vector<224x128xf32>
    %5 = arith.mulf %2, %4 : vector<224x128xf32>
    %c0_4 = arith.constant 0 : index
    %c0_5 = arith.constant 0 : index
    %6 = vector.load %arg4[%c0_4, %c0_5] : memref<1x128xf32, #tpu.memory_space<vmem>>, vector<1x128xf32>
    %7 = vector.broadcast %6 : vector<1x128xf32> to vector<224x128xf32>
    %8 = arith.addf %5, %7 : vector<224x128xf32>
    %cst = arith.constant 0.000000e+00 : f32
    %9 = vector.broadcast %cst : f32 to vector<224x128xf32>
    %10 = arith.maximumf %8, %9 : vector<224x128xf32>
    %11 = tpu.transpose %10, [1, 0] : vector<224x128xf32> -> vector<128x224xf32>
    %c0_6 = arith.constant 0 : index
    %c0_7 = arith.constant 0 : index
    %c0_8 = arith.constant 0 : index
    %12 = vector.load %arg5[%c0_6, %c0_7, %c0_8] : memref<1x128x224xf32, #tpu.memory_space<vmem>>, vector<1x128x224xf32>
    %13 = vector.shape_cast %12 : vector<1x128x224xf32> to vector<128x224xf32>
    %14 = vector.shape_cast %11 : vector<128x224xf32> to vector<1x128x224xf32>
    tpu.vector_store %arg5[%c0_6, %c0_7, %c0_8], %14 {strides = array<i32>} : memref<1x128x224xf32, #tpu.memory_space<vmem>>, vector<1x128x224xf32>,
    return
  }
  func.func @transform_0(%arg0: i32, %arg1: i32) -> (i32, i32, i32) {
    %c0_i32 = arith.constant 0 : i32
    %c0_i32_0 = arith.constant 0 : i32
    return %arg0, %c0_i32, %arg1 : i32, i32, i32
  }
  func.func @transform_1(%arg0: i32, %arg1: i32) -> (i32, i32) {
    %c0_i32 = arith.constant 0 : i32
    %c0_i32_0 = arith.constant 0 : i32
    return %c0_i32, %arg1 : i32, i32
  }
  func.func @transform_2(%arg0: i32, %arg1: i32) -> (i32, i32) {
    %c0_i32 = arith.constant 0 : i32
    %c0_i32_0 = arith.constant 0 : i32
    return %c0_i32, %arg1 : i32, i32
  }
  func.func @transform_3(%arg0: i32, %arg1: i32) -> (i32, i32, i32) {
    %c0_i32 = arith.constant 0 : i32
    %c0_i32_0 = arith.constant 0 : i32
    return %arg0, %arg1, %c0_i32 : i32, i32, i32
  }
}

module attributes {stable_mosaic.version = 11 : i64} {
  func.func @_conv_stats_kernel(%arg0: i32, %arg1: i32, %arg2: memref<1x264x16xbf16, #tpu.memory_space<vmem>>, %arg3: memref<9x16x128xbf16, #tpu.memory_space<vmem>>, %arg4: memref<1x128xf32, #tpu.memory_space<vmem>>, %arg5: memref<1x128xf32, #tpu.memory_space<vmem>>, %arg6: memref<1x224x128xbf16, #tpu.memory_space<vmem>>, %arg7: memref<1x128xf32, #tpu.memory_space<vmem>>, %arg8: memref<1x128xf32, #tpu.memory_space<vmem>>, %arg9: memref<1x128xf32, #tpu.memory_space<vmem>>, %arg10: memref<1x128xf32, #tpu.memory_space<vmem>>) attributes {dimension_semantics = [#tpu.dimension_semantics<parallel>, #tpu.dimension_semantics<arbitrary>], iteration_bounds = array<i64: 1, 2>, scalar_prefetch = 0 : i64, scratch_operands = 2 : i64, tpu.core_type = #tpu.core_type<tc>, window_params = [{transform_indices = @transform_0, window_bounds = array<i64: 1, 264, 16>}, {transform_indices = @transform_1, window_bounds = array<i64: 9, 16, 128>}, {transform_indices = @transform_2, window_bounds = array<i64: 1, 128>}, {transform_indices = @transform_3, window_bounds = array<i64: 1, 128>}, {transform_indices = @transform_4, window_bounds = array<i64: 1, 224, 128>}, {transform_indices = @transform_5, window_bounds = array<i64: 1, 128>}, {transform_indices = @transform_6, window_bounds = array<i64: 1, 128>}]} {
    %c0_i32 = arith.constant 0 : i32
    %0 = arith.cmpi eq, %arg1, %c0_i32 : i32
    %1 = arith.extui %0 : i1 to i32
    %c0_i32_0 = arith.constant 0 : i32
    %2 = arith.cmpi ne, %1, %c0_i32_0 : i32
    scf.if %2 {
      %cst_49 = arith.constant 0.000000e+00 : f32
      %100 = vector.broadcast %cst_49 : f32 to vector<1x128xf32>
      %c0_50 = arith.constant 0 : index
      %c0_51 = arith.constant 0 : index
      %101 = vector.load %arg9[%c0_50, %c0_51] : memref<1x128xf32, #tpu.memory_space<vmem>>, vector<1x128xf32>
      tpu.vector_store %arg9[%c0_50, %c0_51], %100 {strides = array<i32>} : memref<1x128xf32, #tpu.memory_space<vmem>>, vector<1x128xf32>,
      %cst_52 = arith.constant 0.000000e+00 : f32
      %102 = vector.broadcast %cst_52 : f32 to vector<1x128xf32>
      %c0_53 = arith.constant 0 : index
      %c0_54 = arith.constant 0 : index
      %103 = vector.load %arg10[%c0_53, %c0_54] : memref<1x128xf32, #tpu.memory_space<vmem>>, vector<1x128xf32>
      tpu.vector_store %arg10[%c0_53, %c0_54], %102 {strides = array<i32>} : memref<1x128xf32, #tpu.memory_space<vmem>>, vector<1x128xf32>,
    } else {
    }
    %c0 = arith.constant 0 : index
    %c0_1 = arith.constant 0 : index
    %c0_2 = arith.constant 0 : index
    %3 = vector.load %arg2[%c0, %c0_1, %c0_2] : memref<1x264x16xbf16, #tpu.memory_space<vmem>>, vector<1x264x16xbf16>
    %4 = vector.shape_cast %3 : vector<1x264x16xbf16> to vector<264x16xbf16>
    %5 = arith.extf %4 : vector<264x16xbf16> to vector<264x16xf32>
    %6 = vector.extract_strided_slice %5 {offsets = [0, 0], sizes = [224, 16], strides = [1, 1]} : vector<264x16xf32> to vector<224x16xf32>
    %7 = arith.truncf %6 : vector<224x16xf32> to vector<224x16xbf16>
    %c0_3 = arith.constant 0 : index
    %c0_4 = arith.constant 0 : index
    %c0_5 = arith.constant 0 : index
    %8 = vector.load %arg3[%c0_3, %c0_4, %c0_5] : memref<9x16x128xbf16, #tpu.memory_space<vmem>>, vector<1x16x128xbf16>
    %9 = vector.shape_cast %8 : vector<1x16x128xbf16> to vector<16x128xbf16>
    %cst = arith.constant dense<0.000000e+00> : vector<224x128xf32>
    %10 = tpu.matmul %7, %9, %cst {dimension_numbers = #tpu.dot_dimension_numbers<[1], [0], [0], [1], [0, 0, 1, 1], [], []>} : vector<224x16xbf16>, vector<16x128xbf16>, vector<224x128xf32> -> vector<224x128xf32>
    %11 = vector.extract_strided_slice %5 {offsets = [1, 0], sizes = [224, 16], strides = [1, 1]} : vector<264x16xf32> to vector<224x16xf32>
    %12 = arith.truncf %11 : vector<224x16xf32> to vector<224x16xbf16>
    %c1 = arith.constant 1 : index
    %c0_6 = arith.constant 0 : index
    %c0_7 = arith.constant 0 : index
    %13 = vector.load %arg3[%c1, %c0_6, %c0_7] : memref<9x16x128xbf16, #tpu.memory_space<vmem>>, vector<1x16x128xbf16>
    %14 = vector.shape_cast %13 : vector<1x16x128xbf16> to vector<16x128xbf16>
    %cst_8 = arith.constant dense<0.000000e+00> : vector<224x128xf32>
    %15 = tpu.matmul %12, %14, %cst_8 {dimension_numbers = #tpu.dot_dimension_numbers<[1], [0], [0], [1], [0, 0, 1, 1], [], []>} : vector<224x16xbf16>, vector<16x128xbf16>, vector<224x128xf32> -> vector<224x128xf32>
    %16 = arith.addf %10, %15 : vector<224x128xf32>
    %17 = vector.extract_strided_slice %5 {offsets = [2, 0], sizes = [224, 16], strides = [1, 1]} : vector<264x16xf32> to vector<224x16xf32>
    %18 = arith.truncf %17 : vector<224x16xf32> to vector<224x16xbf16>
    %c2 = arith.constant 2 : index
    %c0_9 = arith.constant 0 : index
    %c0_10 = arith.constant 0 : index
    %19 = vector.load %arg3[%c2, %c0_9, %c0_10] : memref<9x16x128xbf16, #tpu.memory_space<vmem>>, vector<1x16x128xbf16>
    %20 = vector.shape_cast %19 : vector<1x16x128xbf16> to vector<16x128xbf16>
    %cst_11 = arith.constant dense<0.000000e+00> : vector<224x128xf32>
    %21 = tpu.matmul %18, %20, %cst_11 {dimension_numbers = #tpu.dot_dimension_numbers<[1], [0], [0], [1], [0, 0, 1, 1], [], []>} : vector<224x16xbf16>, vector<16x128xbf16>, vector<224x128xf32> -> vector<224x128xf32>
    %22 = arith.addf %16, %21 : vector<224x128xf32>
    %23 = vector.extract_strided_slice %5 {offsets = [16, 0], sizes = [224, 16], strides = [1, 1]} : vector<264x16xf32> to vector<224x16xf32>
    %24 = arith.truncf %23 : vector<224x16xf32> to vector<224x16xbf16>
    %c3 = arith.constant 3 : index
    %c0_12 = arith.constant 0 : index
    %c0_13 = arith.constant 0 : index
    %25 = vector.load %arg3[%c3, %c0_12, %c0_13] : memref<9x16x128xbf16, #tpu.memory_space<vmem>>, vector<1x16x128xbf16>
    %26 = vector.shape_cast %25 : vector<1x16x128xbf16> to vector<16x128xbf16>
    %cst_14 = arith.constant dense<0.000000e+00> : vector<224x128xf32>
    %27 = tpu.matmul %24, %26, %cst_14 {dimension_numbers = #tpu.dot_dimension_numbers<[1], [0], [0], [1], [0, 0, 1, 1], [], []>} : vector<224x16xbf16>, vector<16x128xbf16>, vector<224x128xf32> -> vector<224x128xf32>
    %28 = arith.addf %22, %27 : vector<224x128xf32>
    %29 = vector.extract_strided_slice %5 {offsets = [17, 0], sizes = [224, 16], strides = [1, 1]} : vector<264x16xf32> to vector<224x16xf32>
    %30 = arith.truncf %29 : vector<224x16xf32> to vector<224x16xbf16>
    %c4 = arith.constant 4 : index
    %c0_15 = arith.constant 0 : index
    %c0_16 = arith.constant 0 : index
    %31 = vector.load %arg3[%c4, %c0_15, %c0_16] : memref<9x16x128xbf16, #tpu.memory_space<vmem>>, vector<1x16x128xbf16>
    %32 = vector.shape_cast %31 : vector<1x16x128xbf16> to vector<16x128xbf16>
    %cst_17 = arith.constant dense<0.000000e+00> : vector<224x128xf32>
    %33 = tpu.matmul %30, %32, %cst_17 {dimension_numbers = #tpu.dot_dimension_numbers<[1], [0], [0], [1], [0, 0, 1, 1], [], []>} : vector<224x16xbf16>, vector<16x128xbf16>, vector<224x128xf32> -> vector<224x128xf32>
    %34 = arith.addf %28, %33 : vector<224x128xf32>
    %35 = vector.extract_strided_slice %5 {offsets = [18, 0], sizes = [224, 16], strides = [1, 1]} : vector<264x16xf32> to vector<224x16xf32>
    %36 = arith.truncf %35 : vector<224x16xf32> to vector<224x16xbf16>
    %c5 = arith.constant 5 : index
    %c0_18 = arith.constant 0 : index
    %c0_19 = arith.constant 0 : index
    %37 = vector.load %arg3[%c5, %c0_18, %c0_19] : memref<9x16x128xbf16, #tpu.memory_space<vmem>>, vector<1x16x128xbf16>
    %38 = vector.shape_cast %37 : vector<1x16x128xbf16> to vector<16x128xbf16>
    %cst_20 = arith.constant dense<0.000000e+00> : vector<224x128xf32>
    %39 = tpu.matmul %36, %38, %cst_20 {dimension_numbers = #tpu.dot_dimension_numbers<[1], [0], [0], [1], [0, 0, 1, 1], [], []>} : vector<224x16xbf16>, vector<16x128xbf16>, vector<224x128xf32> -> vector<224x128xf32>
    %40 = arith.addf %34, %39 : vector<224x128xf32>
    %41 = vector.extract_strided_slice %5 {offsets = [32, 0], sizes = [224, 16], strides = [1, 1]} : vector<264x16xf32> to vector<224x16xf32>
    %42 = arith.truncf %41 : vector<224x16xf32> to vector<224x16xbf16>
    %c6 = arith.constant 6 : index
    %c0_21 = arith.constant 0 : index
    %c0_22 = arith.constant 0 : index
    %43 = vector.load %arg3[%c6, %c0_21, %c0_22] : memref<9x16x128xbf16, #tpu.memory_space<vmem>>, vector<1x16x128xbf16>
    %44 = vector.shape_cast %43 : vector<1x16x128xbf16> to vector<16x128xbf16>
    %cst_23 = arith.constant dense<0.000000e+00> : vector<224x128xf32>
    %45 = tpu.matmul %42, %44, %cst_23 {dimension_numbers = #tpu.dot_dimension_numbers<[1], [0], [0], [1], [0, 0, 1, 1], [], []>} : vector<224x16xbf16>, vector<16x128xbf16>, vector<224x128xf32> -> vector<224x128xf32>
    %46 = arith.addf %40, %45 : vector<224x128xf32>
    %47 = vector.extract_strided_slice %5 {offsets = [33, 0], sizes = [224, 16], strides = [1, 1]} : vector<264x16xf32> to vector<224x16xf32>
    %48 = arith.truncf %47 : vector<224x16xf32> to vector<224x16xbf16>
    %c7 = arith.constant 7 : index
    %c0_24 = arith.constant 0 : index
    %c0_25 = arith.constant 0 : index
    %49 = vector.load %arg3[%c7, %c0_24, %c0_25] : memref<9x16x128xbf16, #tpu.memory_space<vmem>>, vector<1x16x128xbf16>
    %50 = vector.shape_cast %49 : vector<1x16x128xbf16> to vector<16x128xbf16>
    %cst_26 = arith.constant dense<0.000000e+00> : vector<224x128xf32>
    %51 = tpu.matmul %48, %50, %cst_26 {dimension_numbers = #tpu.dot_dimension_numbers<[1], [0], [0], [1], [0, 0, 1, 1], [], []>} : vector<224x16xbf16>, vector<16x128xbf16>, vector<224x128xf32> -> vector<224x128xf32>
    %52 = arith.addf %46, %51 : vector<224x128xf32>
    %53 = vector.extract_strided_slice %5 {offsets = [34, 0], sizes = [224, 16], strides = [1, 1]} : vector<264x16xf32> to vector<224x16xf32>
    %54 = arith.truncf %53 : vector<224x16xf32> to vector<224x16xbf16>
    %c8 = arith.constant 8 : index
    %c0_27 = arith.constant 0 : index
    %c0_28 = arith.constant 0 : index
    %55 = vector.load %arg3[%c8, %c0_27, %c0_28] : memref<9x16x128xbf16, #tpu.memory_space<vmem>>, vector<1x16x128xbf16>
    %56 = vector.shape_cast %55 : vector<1x16x128xbf16> to vector<16x128xbf16>
    %cst_29 = arith.constant dense<0.000000e+00> : vector<224x128xf32>
    %57 = tpu.matmul %54, %56, %cst_29 {dimension_numbers = #tpu.dot_dimension_numbers<[1], [0], [0], [1], [0, 0, 1, 1], [], []>} : vector<224x16xbf16>, vector<16x128xbf16>, vector<224x128xf32> -> vector<224x128xf32>
    %58 = arith.addf %52, %57 : vector<224x128xf32>
    %59 = arith.truncf %58 : vector<224x128xf32> to vector<224x128xbf16>
    %c0_30 = arith.constant 0 : index
    %c0_31 = arith.constant 0 : index
    %c0_32 = arith.constant 0 : index
    %60 = vector.load %arg6[%c0_30, %c0_31, %c0_32] : memref<1x224x128xbf16, #tpu.memory_space<vmem>>, vector<1x224x128xbf16>
    %61 = vector.shape_cast %60 : vector<1x224x128xbf16> to vector<224x128xbf16>
    %62 = vector.shape_cast %59 : vector<224x128xbf16> to vector<1x224x128xbf16>
    tpu.vector_store %arg6[%c0_30, %c0_31, %c0_32], %62 {strides = array<i32>} : memref<1x224x128xbf16, #tpu.memory_space<vmem>>, vector<1x224x128xbf16>,
    %63 = tpu.iota {dimensions = array<i32: 0>} : vector<224x1xi32>
    %c16_i32 = arith.constant 16 : i32
    %c0_i32_33 = arith.constant 0 : i32
    %64 = arith.cmpi eq, %c16_i32, %c0_i32_33 : i32
    %c1_i32 = arith.constant 1 : i32
    %65 = arith.select %64, %c1_i32, %c16_i32 : i32
    %66 = vector.broadcast %65 : i32 to vector<224x1xi32>
    %67 = arith.remsi %63, %66 : vector<224x1xi32>
    %c0_i32_34 = arith.constant 0 : i32
    %68 = vector.broadcast %c0_i32_34 : i32 to vector<224x1xi32>
    %69 = arith.cmpi ne, %67, %68 : vector<224x1xi32>
    %c0_i32_35 = arith.constant 0 : i32
    %70 = vector.broadcast %c0_i32_35 : i32 to vector<224x1xi32>
    %71 = arith.cmpi slt, %67, %70 : vector<224x1xi32>
    %c0_i32_36 = arith.constant 0 : i32
    %72 = arith.cmpi slt, %65, %c0_i32_36 : i32
    %73 = vector.broadcast %72 : i1 to vector<224x1xi1>
    %74 = vector.broadcast %73 : vector<224x1xi1> to vector<224x1xi1>
    %75 = arith.xori %71, %74 : vector<224x1xi1>
    %76 = arith.andi %75, %69 : vector<224x1xi1>
    %77 = vector.broadcast %65 : i32 to vector<224x1xi32>
    %78 = arith.addi %67, %77 : vector<224x1xi32>
    %79 = arith.select %76, %78, %67 : vector<224x1xi1>, vector<224x1xi32>
    %c14_i32 = arith.constant 14 : i32
    %80 = vector.broadcast %c14_i32 : i32 to vector<224x1xi32>
    %81 = arith.cmpi slt, %79, %80 : vector<224x1xi32>
    %82 = arith.extui %81 : vector<224x1xi1> to vector<224x1xi32>
    %83 = arith.sitofp %82 : vector<224x1xi32> to vector<224x1xf32>
    %84 = vector.broadcast %83 : vector<224x1xf32> to vector<224x128xf32>
    %85 = arith.mulf %58, %84 : vector<224x128xf32>
    %c0_37 = arith.constant 0 : index
    %c0_38 = arith.constant 0 : index
    %86 = vector.load %arg9[%c0_37, %c0_38] : memref<1x128xf32, #tpu.memory_space<vmem>>, vector<1x128xf32>
    %cst_39 = arith.constant dense<0.000000e+00> : vector<128xf32>
    %87 = vector.multi_reduction <add>, %85, %cst_39 [0] : vector<224x128xf32> to vector<128xf32>
    %88 = vector.shape_cast %87 : vector<128xf32> to vector<1x128xf32>
    %89 = arith.addf %86, %88 : vector<1x128xf32>
    %c0_40 = arith.constant 0 : index
    %c0_41 = arith.constant 0 : index
    %90 = vector.load %arg9[%c0_40, %c0_41] : memref<1x128xf32, #tpu.memory_space<vmem>>, vector<1x128xf32>
    tpu.vector_store %arg9[%c0_40, %c0_41], %89 {strides = array<i32>} : memref<1x128xf32, #tpu.memory_space<vmem>>, vector<1x128xf32>,
    %c0_42 = arith.constant 0 : index
    %c0_43 = arith.constant 0 : index
    %91 = vector.load %arg10[%c0_42, %c0_43] : memref<1x128xf32, #tpu.memory_space<vmem>>, vector<1x128xf32>
    %92 = arith.mulf %85, %58 : vector<224x128xf32>
    %cst_44 = arith.constant dense<0.000000e+00> : vector<128xf32>
    %93 = vector.multi_reduction <add>, %92, %cst_44 [0] : vector<224x128xf32> to vector<128xf32>
    %94 = vector.shape_cast %93 : vector<128xf32> to vector<1x128xf32>
    %95 = arith.addf %91, %94 : vector<1x128xf32>
    %c0_45 = arith.constant 0 : index
    %c0_46 = arith.constant 0 : index
    %96 = vector.load %arg10[%c0_45, %c0_46] : memref<1x128xf32, #tpu.memory_space<vmem>>, vector<1x128xf32>
    tpu.vector_store %arg10[%c0_45, %c0_46], %95 {strides = array<i32>} : memref<1x128xf32, #tpu.memory_space<vmem>>, vector<1x128xf32>,
    %c1_i32_47 = arith.constant 1 : i32
    %97 = arith.cmpi eq, %arg1, %c1_i32_47 : i32
    %98 = arith.extui %97 : i1 to i32
    %c0_i32_48 = arith.constant 0 : i32
    %99 = arith.cmpi ne, %98, %c0_i32_48 : i32
    scf.if %99 {
      %c0_49 = arith.constant 0 : index
      %c0_50 = arith.constant 0 : index
      %100 = vector.load %arg9[%c0_49, %c0_50] : memref<1x128xf32, #tpu.memory_space<vmem>>, vector<1x128xf32>
      %cst_51 = arith.constant 0.00255102036 : f32
      %101 = vector.broadcast %cst_51 : f32 to vector<1x128xf32>
      %102 = arith.mulf %100, %101 : vector<1x128xf32>
      %c0_52 = arith.constant 0 : index
      %c0_53 = arith.constant 0 : index
      %103 = vector.load %arg10[%c0_52, %c0_53] : memref<1x128xf32, #tpu.memory_space<vmem>>, vector<1x128xf32>
      %cst_54 = arith.constant 0.00255102036 : f32
      %104 = vector.broadcast %cst_54 : f32 to vector<1x128xf32>
      %105 = arith.mulf %103, %104 : vector<1x128xf32>
      %106 = arith.mulf %102, %102 : vector<1x128xf32>
      %107 = arith.subf %105, %106 : vector<1x128xf32>
      %cst_55 = arith.constant 0.000000e+00 : f32
      %108 = vector.broadcast %cst_55 : f32 to vector<1x128xf32>
      %109 = arith.maximumf %107, %108 : vector<1x128xf32>
      %c0_56 = arith.constant 0 : index
      %c0_57 = arith.constant 0 : index
      %110 = vector.load %arg4[%c0_56, %c0_57] : memref<1x128xf32, #tpu.memory_space<vmem>>, vector<1x128xf32>
      %cst_58 = arith.constant 9.99999974E-6 : f32
      %111 = vector.broadcast %cst_58 : f32 to vector<1x128xf32>
      %112 = arith.addf %109, %111 : vector<1x128xf32>
      %113 = math.rsqrt %112 : vector<1x128xf32>
      %114 = arith.mulf %110, %113 : vector<1x128xf32>
      %c0_59 = arith.constant 0 : index
      %c0_60 = arith.constant 0 : index
      %115 = vector.load %arg7[%c0_59, %c0_60] : memref<1x128xf32, #tpu.memory_space<vmem>>, vector<1x128xf32>
      tpu.vector_store %arg7[%c0_59, %c0_60], %114 {strides = array<i32>} : memref<1x128xf32, #tpu.memory_space<vmem>>, vector<1x128xf32>,
      %c0_61 = arith.constant 0 : index
      %c0_62 = arith.constant 0 : index
      %116 = vector.load %arg5[%c0_61, %c0_62] : memref<1x128xf32, #tpu.memory_space<vmem>>, vector<1x128xf32>
      %117 = arith.mulf %102, %114 : vector<1x128xf32>
      %118 = arith.subf %116, %117 : vector<1x128xf32>
      %c0_63 = arith.constant 0 : index
      %c0_64 = arith.constant 0 : index
      %119 = vector.load %arg8[%c0_63, %c0_64] : memref<1x128xf32, #tpu.memory_space<vmem>>, vector<1x128xf32>
      tpu.vector_store %arg8[%c0_63, %c0_64], %118 {strides = array<i32>} : memref<1x128xf32, #tpu.memory_space<vmem>>, vector<1x128xf32>,
    } else {
    }
    return
  }
  func.func @transform_0(%arg0: i32, %arg1: i32) -> (i32, i32, i32) {
    %c0_i32 = arith.constant 0 : i32
    %c0_i32_0 = arith.constant 0 : i32
    %c0_i32_1 = arith.constant 0 : i32
    return %arg1, %c0_i32, %c0_i32_0 : i32, i32, i32
  }
  func.func @transform_1(%arg0: i32, %arg1: i32) -> (i32, i32, i32) {
    %c0_i32 = arith.constant 0 : i32
    %c0_i32_0 = arith.constant 0 : i32
    %c0_i32_1 = arith.constant 0 : i32
    return %c0_i32, %c0_i32_0, %arg0 : i32, i32, i32
  }
  func.func @transform_2(%arg0: i32, %arg1: i32) -> (i32, i32) {
    %c0_i32 = arith.constant 0 : i32
    %c0_i32_0 = arith.constant 0 : i32
    return %c0_i32, %arg0 : i32, i32
  }
  func.func @transform_3(%arg0: i32, %arg1: i32) -> (i32, i32) {
    %c0_i32 = arith.constant 0 : i32
    %c0_i32_0 = arith.constant 0 : i32
    return %c0_i32, %arg0 : i32, i32
  }
  func.func @transform_4(%arg0: i32, %arg1: i32) -> (i32, i32, i32) {
    %c0_i32 = arith.constant 0 : i32
    %c0_i32_0 = arith.constant 0 : i32
    return %arg1, %c0_i32, %arg0 : i32, i32, i32
  }
  func.func @transform_5(%arg0: i32, %arg1: i32) -> (i32, i32) {
    %c0_i32 = arith.constant 0 : i32
    %c0_i32_0 = arith.constant 0 : i32
    return %c0_i32, %arg0 : i32, i32
  }
  func.func @transform_6(%arg0: i32, %arg1: i32) -> (i32, i32) {
    %c0_i32 = arith.constant 0 : i32
    %c0_i32_0 = arith.constant 0 : i32
    return %c0_i32, %arg0 : i32, i32
  }
}

</mosaic_0001>

<llo_original>
// kernel: conv2d_bn_relu.3
$region0: #{conv2d_bn_relu.3}
  #allocation0 [shape = 'u32[]', space=smem, size = 0x4, offset = 0x4, fixed_abs, tag = 'smem constant byte address 0x4 - core index']
  #allocation1 [shape = 'u32[144,128]{1,0:T(1,128)}', space=vmem, size = 0x12000, scoped, tag = 'internal scratch']
  %s0 = inlined_call_operand.vmem [shape: bf16[2,224,128], index: 0, kind: input, shape index: {}]
  %s1 = inlined_call_operand.vmem [shape: f32[1,128], index: 1, kind: input, shape index: {}]
  %s2 = inlined_call_operand.vmem [shape: f32[1,128], index: 2, kind: input, shape index: {}]
  %s3 = inlined_call_operand.vmem [shape: f32[2,128,224], index: 3, kind: output, shape index: {}]
  %s4 = sld [smem:[#allocation0]]
  $region45: #{conv2d_bn_relu.3} parent=0
    _
  %s6 = ssub.s32 1, %s4
  %s7 = scalar_select 0, %s6, %s4
  loop: start=0, step=1, limit=4
  $region2: #{conv2d_bn_relu.3} parent=0 // loop_pre_header
    _
  $region3: #{conv2d_bn_relu.3} parent=0 // loop_header
    %s9 = sphi 0, %s13
    %p10 = scmp.ge.s32.totalorder %s9, 4
    %s16 = sphi 0, %s28
    %s17 = sphi 0, %s24
    %s18 = sphi 0, %s16
    %s19 = sphi 0, %s17
    %s20 = sphi 0, %s18
    %s21 = sphi 0, %s19
    %s33 = sphi 0, %s35
    %s36 = sphi 0, %s33
    %s37 = sphi 0, %s36
    %s53 = sphi 0, %s37
    %s59 = sphi 0, %s61
    %s62 = sphi 0, %s59
    %s63 = sphi 0, %s62
    %s79 = sphi 0, %s63
    %s85 = sphi 0, %s87
    %s88 = sphi 0, %s85
    %s89 = sphi 0, %s88
    %s105 = sphi 0, %s89
    %s113 = sphi 0, %s115
    %s116 = sphi 0, %s113
    %s117 = sphi 0, %s116
    %s133 = sphi 0, %s117
  $region4: #{conv2d_bn_relu.3} parent=0 // loop_header_branch
    %12 = sbr.rel (%p10) target = $region8
  $region5: #{conv2d_bn_relu.3} parent=0 // loop_body
    %s14 = ssub.s32 %s9, 1
    %s15 = ssub.s32 %s9, 2
    %s22 = sadd.s32 1, %s17
    %p23 = scmp.ge.s32.totalorder %s22, 1
    %s24 = scalar_select %p23, 0, %s22
    %s25 = sadd.s32 1, %s16
    %s26 = scalar_select %p23, %s25, %s16
    %p27 = scmp.ge.s32.totalorder %s26, 2
    %s28 = scalar_select %p27, 0, %s26
    %s29 = ssub.s32 %s16, %s28
    %s30 = ssub.s32 %s17, %s24
    %s31 = sor.u32 %s29, %s30
    %p32 = scmp.eq.s32.totalorder %s31, 0
    %s34 = sadd.s32 %s33, 1
    %s35 = scalar_select %p32, %s33, %s34
    %p38 = pneg %p32
    %p39 = scmp.eq.s32.totalorder %s9, 1
    %p40 = por %p38, %p39
    %p41 = scmp.ne.s32.totalorder %s33, %s36
    %p42 = scmp.eq.s32.totalorder %s9, 0
    %p43 = por %p41, %p42
    %p44 = scmp.ne.s32.totalorder %s33, %s36
    %p45 = scmp.eq.s32.totalorder %s14, 1
    %p46 = por %p44, %p45
    %p47 = scmp.ne.s32.totalorder %s36, %s37
    %p48 = scmp.eq.s32.totalorder %s14, 0
    %p49 = por %p47, %p48
    %p50 = scmp.ne.s32.totalorder %s36, %s37
    %p51 = scmp.eq.s32.totalorder %s15, 1
    %p52 = por %p50, %p51
    %p54 = scmp.ne.s32.totalorder %s37, %s53
    %p55 = scmp.eq.s32.totalorder %s15, 0
    %p56 = por %p54, %p55
    %s57 = ssub.s32 %s17, %s24
    %p58 = scmp.eq.s32.totalorder %s57, 0
    %s60 = sadd.s32 %s59, 1
    %s61 = scalar_select %p58, %s59, %s60
    %p64 = pneg %p58
    %p65 = scmp.eq.s32.totalorder %s9, 1
    %p66 = por %p64, %p65
    %p67 = scmp.ne.s32.totalorder %s59, %s62
    %p68 = scmp.eq.s32.totalorder %s9, 0
    %p69 = por %p67, %p68
    %p70 = scmp.ne.s32.totalorder %s59, %s62
    %p71 = scmp.eq.s32.totalorder %s14, 1
    %p72 = por %p70, %p71
    %p73 = scmp.ne.s32.totalorder %s62, %s63
    %p74 = scmp.eq.s32.totalorder %s14, 0
    %p75 = por %p73, %p74
    %p76 = scmp.ne.s32.totalorder %s62, %s63
    %p77 = scmp.eq.s32.totalorder %s15, 1
    %p78 = por %p76, %p77
    %p80 = scmp.ne.s32.totalorder %s63, %s79
    %p81 = scmp.eq.s32.totalorder %s15, 0
    %p82 = por %p80, %p81
    %s83 = ssub.s32 %s17, %s24
    %p84 = scmp.eq.s32.totalorder %s83, 0
    %s86 = sadd.s32 %s85, 1
    %s87 = scalar_select %p84, %s85, %s86
    %p90 = pneg %p84
    %p91 = scmp.eq.s32.totalorder %s9, 1
    %p92 = por %p90, %p91
    %p93 = scmp.ne.s32.totalorder %s85, %s88
    %p94 = scmp.eq.s32.totalorder %s9, 0
    %p95 = por %p93, %p94
    %p96 = scmp.ne.s32.totalorder %s85, %s88
    %p97 = scmp.eq.s32.totalorder %s14, 1
    %p98 = por %p96, %p97
    %p99 = scmp.ne.s32.totalorder %s88, %s89
    %p100 = scmp.eq.s32.totalorder %s14, 0
    %p101 = por %p99, %p100
    %p102 = scmp.ne.s32.totalorder %s88, %s89
    %p103 = scmp.eq.s32.totalorder %s15, 1
    %p104 = por %p102, %p103
    %p106 = scmp.ne.s32.totalorder %s89, %s105
    %p107 = scmp.eq.s32.totalorder %s15, 0
    %p108 = por %p106, %p107
    %s109 = ssub.s32 %s16, %s28
    %s110 = ssub.s32 %s17, %s24
    %s111 = sor.u32 %s109, %s110
    %p112 = scmp.eq.s32.totalorder %s111, 0
    %s114 = sadd.s32 %s113, 1
    %s115 = scalar_select %p112, %s113, %s114
    %p118 = pneg %p112
    %p119 = scmp.eq.s32.totalorder %s9, 1
    %p120 = por %p118, %p119
    %p121 = scmp.ne.s32.totalorder %s113, %s116
    %p122 = scmp.eq.s32.totalorder %s9, 0
    %p123 = por %p121, %p122
    %p124 = scmp.ne.s32.totalorder %s113, %s116
    %p125 = scmp.eq.s32.totalorder %s14, 1
    %p126 = por %p124, %p125
    %p127 = scmp.ne.s32.totalorder %s116, %s117
    %p128 = scmp.eq.s32.totalorder %s14, 0
    %p129 = por %p127, %p128
    %p130 = scmp.ne.s32.totalorder %s116, %s117
    %p131 = scmp.eq.s32.totalorder %s15, 1
    %p132 = por %p130, %p131
    %p134 = scmp.ne.s32.totalorder %s117, %s133
    %p135 = scmp.eq.s32.totalorder %s15, 0
    %p136 = por %p134, %p135
    %p137 = scmp.le.s32.totalorder 1, %s9
    %p138 = scmp.lt.s32.totalorder %s9, 3
    %p139 = pnand %p137, %p138
    %p140 = pneg %p139
    // Predicated region
    $region9: #{conv2d_bn_relu.3} parent=5 // pred_check
      _
    $region10: #{conv2d_bn_relu.3} parent=5 // pred_check_branch
      %142 = sbr.rel (%p139) target = $region12
    $region11: #{conv2d_bn_relu.3} parent=5 // pred_region
      %s143 = ssub.s32 %s9, 1
      // Predicated region
      $region13: #{conv2d_bn_relu.3} parent=11 // pred_check
        %p144 = pneg %p75
      $region14: #{conv2d_bn_relu.3} parent=11 // pred_check_branch
        %146 = sbr.rel (%p144) target = $region16
      $region15: #{conv2d_bn_relu.3} parent=11 // pred_region
        %p147 = scmp.lt.s32.totalorder %s19, 0
        %s148 = scalar_select %p147, %s19, 0
        %s149 = scalar_lea.vmem %s1, %s148
      $region16: #{conv2d_bn_relu.3} parent=11 // pred_fallthru
        _
      // Predicated region
      $region17: #{conv2d_bn_relu.3} parent=11 // pred_check
        %p150 = pneg %p101
      $region18: #{conv2d_bn_relu.3} parent=11 // pred_check_branch
        %152 = sbr.rel (%p150) target = $region20
      $region19: #{conv2d_bn_relu.3} parent=11 // pred_region
        %p153 = scmp.lt.s32.totalorder %s19, 0
        %s154 = scalar_select %p153, %s19, 0
        %s155 = scalar_lea.vmem %s2, %s154
      $region20: #{conv2d_bn_relu.3} parent=11 // pred_fallthru
        _
    $region12: #{conv2d_bn_relu.3} parent=5 // pred_fallthru
      _
    %p156 = scmp.lt.s32.totalorder %s9, 2
    // Predicated region
    $region21: #{conv2d_bn_relu.3} parent=5 // pred_check
      %p157 = pneg %p156
    $region22: #{conv2d_bn_relu.3} parent=5 // pred_check_branch
      %159 = sbr.rel (%p157) target = $region24
    $region23: #{conv2d_bn_relu.3} parent=5 // pred_region
      // Predicated region
      $region25: #{conv2d_bn_relu.3} parent=23 // pred_check
        %p160 = pneg %p43
      $region26: #{conv2d_bn_relu.3} parent=23 // pred_check_branch
        %162 = sbr.rel (%p160) target = $region28
      $region27: #{conv2d_bn_relu.3} parent=23 // pred_region
        %p163 = scmp.lt.s32.totalorder %s16, 1
        %s164 = scalar_select %p163, %s16, 1
        %p165 = scmp.lt.s32.totalorder %s17, 0
        %s166 = scalar_select %p165, %s17, 0
        %s167 = smul.addr %s164, 28
        %s168 = sadd.s32 %s166, %s167
        %s169 = smul.addr %s168, 4
        %s170 = scalar_lea.vmem %s0, %s169
      $region28: #{conv2d_bn_relu.3} parent=23 // pred_fallthru
        _
    $region24: #{conv2d_bn_relu.3} parent=5 // pred_fallthru
      _
    %p171 = scmp.le.s32.totalorder 1, %s9
    %p172 = scmp.lt.s32.totalorder %s9, 3
    %p173 = pnand %p171, %p172
    %p174 = pneg %p173
    // Predicated region
    $region29: #{conv2d_bn_relu.3} parent=5 // pred_check
      _
    $region30: #{conv2d_bn_relu.3} parent=5 // pred_check_branch
      %176 = sbr.rel (%p173) target = $region32
    $region31: #{conv2d_bn_relu.3} parent=5 // pred_region
      %s177 = ssub.s32 %s9, 1
      %p178 = scmp.lt.s32.totalorder %s18, 1
      %s179 = scalar_select %p178, %s18, 1
      %p180 = scmp.lt.s32.totalorder %s19, 0
      %s181 = scalar_select %p180, %s19, 0
      %s182 = smul.addr %s179, 28
      %s183 = sadd.s32 %s181, %s182
      %s184 = smul.addr %s183, 4
      %s185 = scalar_lea.vmem %s0, %s184
      %p186 = pneg %p49
      %p187 = pneg %p46
      %p188 = scmp.lt.s32.totalorder %s19, 0
      %s189 = scalar_select %p188, %s19, 0
      %s190 = scalar_lea.vmem %s1, %s189
      %p191 = pneg %p75
      %p192 = pneg %p72
      %p193 = scmp.lt.s32.totalorder %s19, 0
      %s194 = scalar_select %p193, %s19, 0
      %s195 = scalar_lea.vmem %s2, %s194
      %p196 = pneg %p101
      %p197 = pneg %p98
      %p198 = pneg %p129
      %p199 = pneg %p126
      %s200 = smul.u32 16, %s19
      %p201 = scmp.lt.s32.totalorder %s18, 1
      %s202 = scalar_select %p201, %s18, 1
      %p203 = scmp.lt.s32.totalorder %s200, 15
      %s204 = scalar_select %p203, %s200, 15
      %s205 = smul.addr %s204, 2
      %s206 = smul.addr %s202, 32
      %s207 = sadd.s32 %s205, %s206
      %s208 = smul.addr %s207, 8
      %s209 = scalar_lea.vmem %s3, %s208
      %p210 = scmp.lt.s32.totalorder %s18, 1
      %s211 = scalar_select %p210, %s18, 1
      %p212 = scmp.lt.s32.totalorder %s19, 0
      %s213 = scalar_select %p212, %s19, 0
      %s214 = smul.addr %s211, 28
      %s215 = sadd.s32 %s213, %s214
      %s216 = smul.addr %s215, 4
      %s217 = scalar_lea.vmem %s0, %s216
      %p218 = scmp.lt.s32.totalorder %s19, 0
      %s219 = scalar_select %p218, %s19, 0
      %s220 = scalar_lea.vmem %s1, %s219
      %p221 = scmp.lt.s32.totalorder %s19, 0
      %s222 = scalar_select %p221, %s19, 0
      %s223 = scalar_lea.vmem %s2, %s222
      %s224 = smul.u32 16, %s19
      %p225 = scmp.lt.s32.totalorder %s18, 1
      %s226 = scalar_select %p225, %s18, 1
      %p227 = scmp.lt.s32.totalorder %s224, 15
      %s228 = scalar_select %p227, %s224, 15
      %s229 = smul.addr %s228, 2
      %s230 = smul.addr %s226, 32
      %s231 = sadd.s32 %s229, %s230
      %s232 = smul.addr %s231, 8
      %s233 = scalar_lea.vmem %s3, %s232
      %s234 = smul.u32 16, %s19
      %v235 = vld [vmem:[%s217] sm:$0xf]
      %v236 = vld [vmem:[%s217 + $0x4] sm:$0xf]
      %v237 = vld [vmem:[%s217 + $0x8] sm:$0xf]
      %v238 = vld [vmem:[%s217 + $0xc] sm:$0xf]
      %v239 = vld [vmem:[%s217 + $0x10] sm:$0xf]
      %v240 = vld [vmem:[%s217 + $0x14] sm:$0xf]
      %v241 = vld [vmem:[%s217 + $0x18] sm:$0xf]
      %v242 = vld [vmem:[%s217 + $0x1c] sm:$0xf]
      %v243 = vld [vmem:[%s217 + $0x20] sm:$0xf]
      %v244 = vld [vmem:[%s217 + $0x24] sm:$0xf]
      %v245 = vld [vmem:[%s217 + $0x28] sm:$0xf]
      %v246 = vld [vmem:[%s217 + $0x2c] sm:$0xf]
      %v247 = vld [vmem:[%s217 + $0x30] sm:$0xf]
      %v248 = vld [vmem:[%s217 + $0x34] sm:$0xf]
      %v249 = vld [vmem:[%s217 + $0x38] sm:$0xf]
      %v250 = vld [vmem:[%s217 + $0x3c] sm:$0xf]
      %v251 = vld [vmem:[%s217 + $0x40] sm:$0xf]
      %v252 = vld [vmem:[%s217 + $0x44] sm:$0xf]
      %v253 = vld [vmem:[%s217 + $0x48] sm:$0xf]
      %v254 = vld [vmem:[%s217 + $0x4c] sm:$0xf]
      %v255 = vld [vmem:[%s217 + $0x50] sm:$0xf]
      %v256 = vld [vmem:[%s217 + $0x54] sm:$0xf]
      %v257 = vld [vmem:[%s217 + $0x58] sm:$0xf]
      %v258 = vld [vmem:[%s217 + $0x5c] sm:$0xf]
      %v259 = vld [vmem:[%s217 + $0x60] sm:$0xf]
      %v260 = vld [vmem:[%s217 + $0x64] sm:$0xf]
      %v261 = vld [vmem:[%s217 + $0x68] sm:$0xf]
      %v262 = vld [vmem:[%s217 + $0x6c] sm:$0xf]
      %v263 = vunpack.c.l.bf16 %v235
      %v264 = vunpack.c.l.bf16 %v236
      %v265 = vunpack.c.l.bf16 %v237
      %v266 = vunpack.c.l.bf16 %v238
      %v267 = vunpack.c.l.bf16 %v239
      %v268 = vunpack.c.l.bf16 %v240
      %v269 = vunpack.c.l.bf16 %v241
      %v270 = vunpack.c.l.bf16 %v242
      %v271 = vunpack.c.l.bf16 %v243
      %v272 = vunpack.c.l.bf16 %v244
      %v273 = vunpack.c.l.bf16 %v245
      %v274 = vunpack.c.l.bf16 %v246
      %v275 = vunpack.c.l.bf16 %v247
      %v276 = vunpack.c.l.bf16 %v248
      %v277 = vunpack.c.l.bf16 %v249
      %v278 = vunpack.c.l.bf16 %v250
      %v279 = vunpack.c.l.bf16 %v251
      %v280 = vunpack.c.l.bf16 %v252
      %v281 = vunpack.c.l.bf16 %v253
      %v282 = vunpack.c.l.bf16 %v254
      %v283 = vunpack.c.l.bf16 %v255
      %v284 = vunpack.c.l.bf16 %v256
      %v285 = vunpack.c.l.bf16 %v257
      %v286 = vunpack.c.l.bf16 %v258
      %v287 = vunpack.c.l.bf16 %v259
      %v288 = vunpack.c.l.bf16 %v260
      %v289 = vunpack.c.l.bf16 %v261
      %v290 = vunpack.c.l.bf16 %v262
      %v291 = vld [vmem:[%s220] sm:$0x1]
      %v293 = vlaneseq
      %v294 = vshrl.u32 %v293, 7
      %v295 = vsub.s32 0, %v294
      %v296 = vrot.slane %v291, %v295
      %v298 = vmul.f32 %v263, %v296
      %v299 = vmul.f32 %v264, %v296
      %v300 = vmul.f32 %v265, %v296
      %v301 = vmul.f32 %v266, %v296
      %v302 = vmul.f32 %v267, %v296
      %v303 = vmul.f32 %v268, %v296
      %v304 = vmul.f32 %v269, %v296
      %v305 = vmul.f32 %v270, %v296
      %v306 = vmul.f32 %v271, %v296
      %v307 = vmul.f32 %v272, %v296
      %v308 = vmul.f32 %v273, %v296
      %v309 = vmul.f32 %v274, %v296
      %v310 = vmul.f32 %v275, %v296
      %v311 = vmul.f32 %v276, %v296
      %v312 = vmul.f32 %v277, %v296
      %v313 = vmul.f32 %v278, %v296
      %v314 = vmul.f32 %v279, %v296
      %v315 = vmul.f32 %v280, %v296
      %v316 = vmul.f32 %v281, %v296
      %v317 = vmul.f32 %v282, %v296
      %v318 = vmul.f32 %v283, %v296
      %v319 = vmul.f32 %v284, %v296
      %v320 = vmul.f32 %v285, %v296
      %v321 = vmul.f32 %v286, %v296
      %v322 = vmul.f32 %v287, %v296
      %v323 = vmul.f32 %v288, %v296
      %v324 = vmul.f32 %v289, %v296
      %v325 = vmul.f32 %v290, %v296
      %v326 = vld [vmem:[%s223] sm:$0x1]
      %v328 = vlaneseq
      %v329 = vshrl.u32 %v328, 7
      %v330 = vsub.s32 0, %v329
      %v331 = vrot.slane %v326, %v330
      %v333 = vadd.f32 %v298, %v331
      %v334 = vadd.f32 %v299, %v331
      %v335 = vadd.f32 %v300, %v331
      %v336 = vadd.f32 %v301, %v331
      %v337 = vadd.f32 %v302, %v331
      %v338 = vadd.f32 %v303, %v331
      %v339 = vadd.f32 %v304, %v331
      %v340 = vadd.f32 %v305, %v331
      %v341 = vadd.f32 %v306, %v331
      %v342 = vadd.f32 %v307, %v331
      %v343 = vadd.f32 %v308, %v331
      %v344 = vadd.f32 %v309, %v331
      %v345 = vadd.f32 %v310, %v331
      %v346 = vadd.f32 %v311, %v331
      %v347 = vadd.f32 %v312, %v331
      %v348 = vadd.f32 %v313, %v331
      %v349 = vadd.f32 %v314, %v331
      %v350 = vadd.f32 %v315, %v331
      %v351 = vadd.f32 %v316, %v331
      %v352 = vadd.f32 %v317, %v331
      %v353 = vadd.f32 %v318, %v331
      %v354 = vadd.f32 %v319, %v331
      %v355 = vadd.f32 %v320, %v331
      %v356 = vadd.f32 %v321, %v331
      %v357 = vadd.f32 %v322, %v331
      %v358 = vadd.f32 %v323, %v331
      %v359 = vadd.f32 %v324, %v331
      %v360 = vadd.f32 %v325, %v331
      %v361 = vmax.f32 %v333, 0.0
      %v362 = vmax.f32 %v334, 0.0
      %v363 = vmax.f32 %v335, 0.0
      %v364 = vmax.f32 %v336, 0.0
      %v365 = vmax.f32 %v337, 0.0
      %v366 = vmax.f32 %v338, 0.0
      %v367 = vmax.f32 %v339, 0.0
      %v368 = vmax.f32 %v340, 0.0
      %v369 = vmax.f32 %v341, 0.0
      %v370 = vmax.f32 %v342, 0.0
      %v371 = vmax.f32 %v343, 0.0
      %v372 = vmax.f32 %v344, 0.0
      %v373 = vmax.f32 %v345, 0.0
      %v374 = vmax.f32 %v346, 0.0
      %v375 = vmax.f32 %v347, 0.0
      %v376 = vmax.f32 %v348, 0.0
      %v377 = vmax.f32 %v349, 0.0
      %v378 = vmax.f32 %v350, 0.0
      %v379 = vmax.f32 %v351, 0.0
      %v380 = vmax.f32 %v352, 0.0
      %v381 = vmax.f32 %v353, 0.0
      %v382 = vmax.f32 %v354, 0.0
      %v383 = vmax.f32 %v355, 0.0
      %v384 = vmax.f32 %v356, 0.0
      %v385 = vmax.f32 %v357, 0.0
      %v386 = vmax.f32 %v358, 0.0
      %v387 = vmax.f32 %v359, 0.0
      %v388 = vmax.f32 %v360, 0.0
      %389 = vxpose.xlu0.b32.start [1/16] %v361, 128
      %390 = vxpose.xlu0.b32.cont [2/16] %v362, 128
      %391 = vxpose.xlu0.b32.cont [3/16] %v363, 128
      %392 = vxpose.xlu0.b32.cont [4/16] %v364, 128
      %393 = vxpose.xlu0.b32.cont [5/16] %v365, 128
      %394 = vxpose.xlu0.b32.cont [6/16] %v366, 128
      %395 = vxpose.xlu0.b32.cont [7/16] %v367, 128
      %396 = vxpose.xlu0.b32.cont [8/16] %v368, 128
      %397 = vxpose.xlu0.b32.cont [9/16] %v369, 128
      %398 = vxpose.xlu0.b32.cont [10/16] %v370, 128
      %399 = vxpose.xlu0.b32.cont [11/16] %v371, 128
      %400 = vxpose.xlu0.b32.cont [12/16] %v372, 128
      %401 = vxpose.xlu0.b32.cont [13/16] %v373, 128
      %402 = vxpose.xlu0.b32.cont [14/16] %v374, 128
      %403 = vxpose.xlu0.b32.cont [15/16] %v375, 128
      %404 = vxpose.xlu0.b32.end [16/16] %v376, 128
      %v405 = vpop.trf.xlu0
      %v406 = vpop.trf.xlu0
      %v407 = vpop.trf.xlu0
      %v408 = vpop.trf.xlu0
      %v409 = vpop.trf.xlu0
      %v410 = vpop.trf.xlu0
      %v411 = vpop.trf.xlu0
      %v412 = vpop.trf.xlu0
      %v413 = vpop.trf.xlu0
      %v414 = vpop.trf.xlu0
      %v415 = vpop.trf.xlu0
      %v416 = vpop.trf.xlu0
      %v417 = vpop.trf.xlu0
      %v418 = vpop.trf.xlu0
      %v419 = vpop.trf.xlu0
      %v420 = vpop.trf.xlu0
      %421 = vxpose.xlu0.b32.start [1/16] %v377, 128
      %422 = vxpose.xlu0.b32.cont [2/16] %v378, 128
      %423 = vxpose.xlu0.b32.cont [3/16] %v379, 128
      %424 = vxpose.xlu0.b32.cont [4/16] %v380, 128
      %425 = vxpose.xlu0.b32.cont [5/16] %v381, 128
      %426 = vxpose.xlu0.b32.cont [6/16] %v382, 128
      %427 = vxpose.xlu0.b32.cont [7/16] %v383, 128
      %428 = vxpose.xlu0.b32.cont [8/16] %v384, 128
      %429 = vxpose.xlu0.b32.cont [9/16] %v385, 128
      %430 = vxpose.xlu0.b32.cont [10/16] %v386, 128
      %431 = vxpose.xlu0.b32.cont [11/16] %v387, 128
      %432 = vxpose.xlu0.b32.cont [12/16] %v388, 128
      %433 = vxpose.xlu0.b32.cont [13/16] 0.0, 128
      %434 = vxpose.xlu0.b32.cont [14/16] 0.0, 128
      %435 = vxpose.xlu0.b32.cont [15/16] 0.0, 128
      %436 = vxpose.xlu0.b32.end [16/16] 0.0, 128
      %v437 = vpop.trf.xlu0
      %v438 = vpop.trf.xlu0
      %v439 = vpop.trf.xlu0
      %v440 = vpop.trf.xlu0
      %v441 = vpop.trf.xlu0
      %v442 = vpop.trf.xlu0
      %v443 = vpop.trf.xlu0
      %v444 = vpop.trf.xlu0
      %v445 = vpop.trf.xlu0
      %v446 = vpop.trf.xlu0
      %v447 = vpop.trf.xlu0
      %v448 = vpop.trf.xlu0
      %v449 = vpop.trf.xlu0
      %v450 = vpop.trf.xlu0
      %v451 = vpop.trf.xlu0
      %v452 = vpop.trf.xlu0
      %453 = vst [vmem:[%s233] sm:$0xff] %v405
      %vm454 = vcmask 785408
      %455 = vst.msk [vmem:[%s233 + $0x8] sm:$0xff] %vm454, %v437
      %456 = vst [vmem:[%s233 + $0x10] sm:$0xff] %v406
      %457 = vst.msk [vmem:[%s233 + $0x18] sm:$0xff] %vm454, %v438
      %458 = vst [vmem:[%s233 + $0x20] sm:$0xff] %v407
      %459 = vst.msk [vmem:[%s233 + $0x28] sm:$0xff] %vm454, %v439
      %460 = vst [vmem:[%s233 + $0x30] sm:$0xff] %v408
      %461 = vst.msk [vmem:[%s233 + $0x38] sm:$0xff] %vm454, %v440
      %462 = vst [vmem:[%s233 + $0x40] sm:$0xff] %v409
      %463 = vst.msk [vmem:[%s233 + $0x48] sm:$0xff] %vm454, %v441
      %464 = vst [vmem:[%s233 + $0x50] sm:$0xff] %v410
      %465 = vst.msk [vmem:[%s233 + $0x58] sm:$0xff] %vm454, %v442
      %466 = vst [vmem:[%s233 + $0x60] sm:$0xff] %v411
      %467 = vst.msk [vmem:[%s233 + $0x68] sm:$0xff] %vm454, %v443
      %468 = vst [vmem:[%s233 + $0x70] sm:$0xff] %v412
      %469 = vst.msk [vmem:[%s233 + $0x78] sm:$0xff] %vm454, %v444
      %470 = vst [vmem:[%s233 + $0x80] sm:$0xff] %v413
      %471 = vst.msk [vmem:[%s233 + $0x88] sm:$0xff] %vm454, %v445
      %472 = vst [vmem:[%s233 + $0x90] sm:$0xff] %v414
      %473 = vst.msk [vmem:[%s233 + $0x98] sm:$0xff] %vm454, %v446
      %474 = vst [vmem:[%s233 + $0xa0] sm:$0xff] %v415
      %475 = vst.msk [vmem:[%s233 + $0xa8] sm:$0xff] %vm454, %v447
      %476 = vst [vmem:[%s233 + $0xb0] sm:$0xff] %v416
      %477 = vst.msk [vmem:[%s233 + $0xb8] sm:$0xff] %vm454, %v448
      %478 = vst [vmem:[%s233 + $0xc0] sm:$0xff] %v417
      %479 = vst.msk [vmem:[%s233 + $0xc8] sm:$0xff] %vm454, %v449
      %480 = vst [vmem:[%s233 + $0xd0] sm:$0xff] %v418
      %481 = vst.msk [vmem:[%s233 + $0xd8] sm:$0xff] %vm454, %v450
      %482 = vst [vmem:[%s233 + $0xe0] sm:$0xff] %v419
      %483 = vst.msk [vmem:[%s233 + $0xe8] sm:$0xff] %vm454, %v451
      %484 = vst [vmem:[%s233 + $0xf0] sm:$0xff] %v420
      %485 = vst.msk [vmem:[%s233 + $0xf8] sm:$0xff] %vm454, %v452
      %s486 = smul.u32 16, %s19
      %p487 = scmp.lt.s32.totalorder %s18, 1
      %s488 = scalar_select %p487, %s18, 1
      %p489 = scmp.lt.s32.totalorder %s486, 15
      %s490 = scalar_select %p489, %s486, 15
      %s491 = smul.addr %s490, 2
      %s492 = smul.addr %s488, 32
      %s493 = sadd.s32 %s491, %s492
      %s494 = smul.addr %s493, 8
      %s495 = scalar_lea.vmem %s3, %s494
      // Predicated region
      $region33: #{conv2d_bn_relu.3} parent=31 // pred_check
        %p496 = pneg %p126
      $region34: #{conv2d_bn_relu.3} parent=31 // pred_check_branch
        %498 = sbr.rel (%p496) target = $region36
      $region35: #{conv2d_bn_relu.3} parent=31 // pred_region
        %s499 = smul.u32 16, %s19
      $region36: #{conv2d_bn_relu.3} parent=31 // pred_fallthru
        _
    $region32: #{conv2d_bn_relu.3} parent=5 // pred_fallthru
      _
    %p500 = scmp.le.s32.totalorder 2, %s9
    // Predicated region
    $region37: #{conv2d_bn_relu.3} parent=5 // pred_check
      %p501 = pneg %p500
    $region38: #{conv2d_bn_relu.3} parent=5 // pred_check_branch
      %503 = sbr.rel (%p501) target = $region40
    $region39: #{conv2d_bn_relu.3} parent=5 // pred_region
      %s504 = ssub.s32 %s9, 2
      // Predicated region
      $region41: #{conv2d_bn_relu.3} parent=39 // pred_check
        %p505 = pneg %p132
      $region42: #{conv2d_bn_relu.3} parent=39 // pred_check_branch
        %507 = sbr.rel (%p505) target = $region44
      $region43: #{conv2d_bn_relu.3} parent=39 // pred_region
        %s508 = smul.u32 16, %s21
        %p509 = scmp.lt.s32.totalorder %s20, 1
        %s510 = scalar_select %p509, %s20, 1
        %p511 = scmp.lt.s32.totalorder %s508, 15
        %s512 = scalar_select %p511, %s508, 15
        %s513 = smul.addr %s512, 2
        %s514 = smul.addr %s510, 32
        %s515 = sadd.s32 %s513, %s514
        %s516 = smul.addr %s515, 8
        %s517 = scalar_lea.vmem %s3, %s516
      $region44: #{conv2d_bn_relu.3} parent=39 // pred_fallthru
        _
    $region40: #{conv2d_bn_relu.3} parent=5 // pred_fallthru
      _
  $region6: #{conv2d_bn_relu.3} parent=0 // loop_footer
    %s13 = sadd.s32 1, %s9
  $region7: #{conv2d_bn_relu.3} parent=0 // loop_footer_branch
    %8 = sbr.rel target = $region3
  $region8: #{conv2d_bn_relu.3} parent=0 // loop_exit
    _

// kernel: conv2d_bn_relu.2
$region0: #{conv2d_bn_relu.2}
  #allocation0 [shape = 'u32[]', space=smem, size = 0x4, offset = 0x4, fixed_abs, tag = 'smem constant byte address 0x4 - core index']
  #allocation1 [shape = 'u32[144,128]{1,0:T(1,128)}', space=vmem, size = 0x12000, scoped, tag = 'internal scratch']
  #allocation2 [shape = 'f32[1,128]{1,0:T(1,128)}', space=vmem, size = 0x200, scoped, tag = 'scratch operand']
  #allocation3 [shape = 'f32[1,128]{1,0:T(1,128)}', space=vmem, size = 0x200, scoped, tag = 'scratch operand']
  %s0 = inlined_call_operand.vmem [shape: bf16[2,264,16], index: 0, kind: input, shape index: {}]
  %s1 = inlined_call_operand.vmem [shape: bf16[9,16,128], index: 1, kind: input, shape index: {}]
  %s2 = inlined_call_operand.vmem [shape: f32[1,128], index: 2, kind: input, shape index: {}]
  %s3 = inlined_call_operand.vmem [shape: f32[1,128], index: 3, kind: input, shape index: {}]
  %s4 = inlined_call_operand.vmem [shape: bf16[2,224,128], index: 4, kind: output, shape index: {0}]
  %s5 = inlined_call_operand.vmem [shape: f32[1,128], index: 5, kind: output, shape index: {1}]
  %s6 = inlined_call_operand.vmem [shape: f32[1,128], index: 6, kind: output, shape index: {2}]
  %7 = xla_tuple %s4, %s5, %s6
  %s8 = sld [smem:[#allocation0]]
  $region73: #{conv2d_bn_relu.2} parent=0
    _
  %s10 = ssub.s32 1, %s8
  %s11 = scalar_select 0, %s10, %s8
  loop: start=0, step=1, limit=4
  $region2: #{conv2d_bn_relu.2} parent=0 // loop_pre_header
    _
  $region3: #{conv2d_bn_relu.2} parent=0 // loop_header
    %s13 = sphi 0, %s17
    %p14 = scmp.ge.s32.totalorder %s13, 4
    %s20 = sphi 0, %s32
    %s21 = sphi 0, %s28
    %s22 = sphi 0, %s20
    %s23 = sphi 0, %s21
    %s24 = sphi 0, %s22
    %s25 = sphi 0, %s23
    %s35 = sphi 0, %s37
    %s38 = sphi 0, %s35
    %s39 = sphi 0, %s38
    %s55 = sphi 0, %s39
    %s61 = sphi 0, %s63
    %s64 = sphi 0, %s61
    %s65 = sphi 0, %s64
    %s81 = sphi 0, %s65
    %s87 = sphi 0, %s89
    %s90 = sphi 0, %s87
    %s91 = sphi 0, %s90
    %s107 = sphi 0, %s91
    %s113 = sphi 0, %s115
    %s116 = sphi 0, %s113
    %s117 = sphi 0, %s116
    %s133 = sphi 0, %s117
    %s141 = sphi 0, %s143
    %s144 = sphi 0, %s141
    %s145 = sphi 0, %s144
    %s161 = sphi 0, %s145
    %s167 = sphi 0, %s169
    %s170 = sphi 0, %s167
    %s171 = sphi 0, %s170
    %s187 = sphi 0, %s171
    %s193 = sphi 0, %s195
    %s196 = sphi 0, %s193
    %s197 = sphi 0, %s196
    %s213 = sphi 0, %s197
  $region4: #{conv2d_bn_relu.2} parent=0 // loop_header_branch
    %16 = sbr.rel (%p14) target = $region8
  $region5: #{conv2d_bn_relu.2} parent=0 // loop_body
    %s18 = ssub.s32 %s13, 1
    %s19 = ssub.s32 %s13, 2
    %s26 = sadd.s32 1, %s21
    %p27 = scmp.ge.s32.totalorder %s26, 2
    %s28 = scalar_select %p27, 0, %s26
    %s29 = sadd.s32 1, %s20
    %s30 = scalar_select %p27, %s29, %s20
    %p31 = scmp.ge.s32.totalorder %s30, 1
    %s32 = scalar_select %p31, 0, %s30
    %s33 = ssub.s32 %s21, %s28
    %p34 = scmp.eq.s32.totalorder %s33, 0
    %s36 = sadd.s32 %s35, 1
    %s37 = scalar_select %p34, %s35, %s36
    %p40 = pneg %p34
    %p41 = scmp.eq.s32.totalorder %s13, 1
    %p42 = por %p40, %p41
    %p43 = scmp.ne.s32.totalorder %s35, %s38
    %p44 = scmp.eq.s32.totalorder %s13, 0
    %p45 = por %p43, %p44
    %p46 = scmp.ne.s32.totalorder %s35, %s38
    %p47 = scmp.eq.s32.totalorder %s18, 1
    %p48 = por %p46, %p47
    %p49 = scmp.ne.s32.totalorder %s38, %s39
    %p50 = scmp.eq.s32.totalorder %s18, 0
    %p51 = por %p49, %p50
    %p52 = scmp.ne.s32.totalorder %s38, %s39
    %p53 = scmp.eq.s32.totalorder %s19, 1
    %p54 = por %p52, %p53
    %p56 = scmp.ne.s32.totalorder %s39, %s55
    %p57 = scmp.eq.s32.totalorder %s19, 0
    %p58 = por %p56, %p57
    %s59 = ssub.s32 %s20, %s32
    %p60 = scmp.eq.s32.totalorder %s59, 0
    %s62 = sadd.s32 %s61, 1
    %s63 = scalar_select %p60, %s61, %s62
    %p66 = pneg %p60
    %p67 = scmp.eq.s32.totalorder %s13, 1
    %p68 = por %p66, %p67
    %p69 = scmp.ne.s32.totalorder %s61, %s64
    %p70 = scmp.eq.s32.totalorder %s13, 0
    %p71 = por %p69, %p70
    %p72 = scmp.ne.s32.totalorder %s61, %s64
    %p73 = scmp.eq.s32.totalorder %s18, 1
    %p74 = por %p72, %p73
    %p75 = scmp.ne.s32.totalorder %s64, %s65
    %p76 = scmp.eq.s32.totalorder %s18, 0
    %p77 = por %p75, %p76
    %p78 = scmp.ne.s32.totalorder %s64, %s65
    %p79 = scmp.eq.s32.totalorder %s19, 1
    %p80 = por %p78, %p79
    %p82 = scmp.ne.s32.totalorder %s65, %s81
    %p83 = scmp.eq.s32.totalorder %s19, 0
    %p84 = por %p82, %p83
    %s85 = ssub.s32 %s20, %s32
    %p86 = scmp.eq.s32.totalorder %s85, 0
    %s88 = sadd.s32 %s87, 1
    %s89 = scalar_select %p86, %s87, %s88
    %p92 = pneg %p86
    %p93 = scmp.eq.s32.totalorder %s13, 1
    %p94 = por %p92, %p93
    %p95 = scmp.ne.s32.totalorder %s87, %s90
    %p96 = scmp.eq.s32.totalorder %s13, 0
    %p97 = por %p95, %p96
    %p98 = scmp.ne.s32.totalorder %s87, %s90
    %p99 = scmp.eq.s32.totalorder %s18, 1
    %p100 = por %p98, %p99
    %p101 = scmp.ne.s32.totalorder %s90, %s91
    %p102 = scmp.eq.s32.totalorder %s18, 0
    %p103 = por %p101, %p102
    %p104 = scmp.ne.s32.totalorder %s90, %s91
    %p105 = scmp.eq.s32.totalorder %s19, 1
    %p106 = por %p104, %p105
    %p108 = scmp.ne.s32.totalorder %s91, %s107
    %p109 = scmp.eq.s32.totalorder %s19, 0
    %p110 = por %p108, %p109
    %s111 = ssub.s32 %s20, %s32
    %p112 = scmp.eq.s32.totalorder %s111, 0
    %s114 = sadd.s32 %s113, 1
    %s115 = scalar_select %p112, %s113, %s114
    %p118 = pneg %p112
    %p119 = scmp.eq.s32.totalorder %s13, 1
    %p120 = por %p118, %p119
    %p121 = scmp.ne.s32.totalorder %s113, %s116
    %p122 = scmp.eq.s32.totalorder %s13, 0
    %p123 = por %p121, %p122
    %p124 = scmp.ne.s32.totalorder %s113, %s116
    %p125 = scmp.eq.s32.totalorder %s18, 1
    %p126 = por %p124, %p125
    %p127 = scmp.ne.s32.totalorder %s116, %s117
    %p128 = scmp.eq.s32.totalorder %s18, 0
    %p129 = por %p127, %p128
    %p130 = scmp.ne.s32.totalorder %s116, %s117
    %p131 = scmp.eq.s32.totalorder %s19, 1
    %p132 = por %p130, %p131
    %p134 = scmp.ne.s32.totalorder %s117, %s133
    %p135 = scmp.eq.s32.totalorder %s19, 0
    %p136 = por %p134, %p135
    %s137 = ssub.s32 %s21, %s28
    %s138 = ssub.s32 %s20, %s32
    %s139 = sor.u32 %s137, %s138
    %p140 = scmp.eq.s32.totalorder %s139, 0
    %s142 = sadd.s32 %s141, 1
    %s143 = scalar_select %p140, %s141, %s142
    %p146 = pneg %p140
    %p147 = scmp.eq.s32.totalorder %s13, 1
    %p148 = por %p146, %p147
    %p149 = scmp.ne.s32.totalorder %s141, %s144
    %p150 = scmp.eq.s32.totalorder %s13, 0
    %p151 = por %p149, %p150
    %p152 = scmp.ne.s32.totalorder %s141, %s144
    %p153 = scmp.eq.s32.totalorder %s18, 1
    %p154 = por %p152, %p153
    %p155 = scmp.ne.s32.totalorder %s144, %s145
    %p156 = scmp.eq.s32.totalorder %s18, 0
    %p157 = por %p155, %p156
    %p158 = scmp.ne.s32.totalorder %s144, %s145
    %p159 = scmp.eq.s32.totalorder %s19, 1
    %p160 = por %p158, %p159
    %p162 = scmp.ne.s32.totalorder %s145, %s161
    %p163 = scmp.eq.s32.totalorder %s19, 0
    %p164 = por %p162, %p163
    %s165 = ssub.s32 %s20, %s32
    %p166 = scmp.eq.s32.totalorder %s165, 0
    %s168 = sadd.s32 %s167, 1
    %s169 = scalar_select %p166, %s167, %s168
    %p172 = pneg %p166
    %p173 = scmp.eq.s32.totalorder %s13, 1
    %p174 = por %p172, %p173
    %p175 = scmp.ne.s32.totalorder %s167, %s170
    %p176 = scmp.eq.s32.totalorder %s13, 0
    %p177 = por %p175, %p176
    %p178 = scmp.ne.s32.totalorder %s167, %s170
    %p179 = scmp.eq.s32.totalorder %s18, 1
    %p180 = por %p178, %p179
    %p181 = scmp.ne.s32.totalorder %s170, %s171
    %p182 = scmp.eq.s32.totalorder %s18, 0
    %p183 = por %p181, %p182
    %p184 = scmp.ne.s32.totalorder %s170, %s171
    %p185 = scmp.eq.s32.totalorder %s19, 1
    %p186 = por %p184, %p185
    %p188 = scmp.ne.s32.totalorder %s171, %s187
    %p189 = scmp.eq.s32.totalorder %s19, 0
    %p190 = por %p188, %p189
    %s191 = ssub.s32 %s20, %s32
    %p192 = scmp.eq.s32.totalorder %s191, 0
    %s194 = sadd.s32 %s193, 1
    %s195 = scalar_select %p192, %s193, %s194
    %p198 = pneg %p192
    %p199 = scmp.eq.s32.totalorder %s13, 1
    %p200 = por %p198, %p199
    %p201 = scmp.ne.s32.totalorder %s193, %s196
    %p202 = scmp.eq.s32.totalorder %s13, 0
    %p203 = por %p201, %p202
    %p204 = scmp.ne.s32.totalorder %s193, %s196
    %p205 = scmp.eq.s32.totalorder %s18, 1
    %p206 = por %p204, %p205
    %p207 = scmp.ne.s32.totalorder %s196, %s197
    %p208 = scmp.eq.s32.totalorder %s18, 0
    %p209 = por %p207, %p208
    %p210 = scmp.ne.s32.totalorder %s196, %s197
    %p211 = scmp.eq.s32.totalorder %s19, 1
    %p212 = por %p210, %p211
    %p214 = scmp.ne.s32.totalorder %s197, %s213
    %p215 = scmp.eq.s32.totalorder %s19, 0
    %p216 = por %p214, %p215
    %p217 = scmp.le.s32.totalorder 1, %s13
    %p218 = scmp.lt.s32.totalorder %s13, 3
    %p219 = pnand %p217, %p218
    %p220 = pneg %p219
    // Predicated region
    $region9: #{conv2d_bn_relu.2} parent=5 // pred_check
      _
    $region10: #{conv2d_bn_relu.2} parent=5 // pred_check_branch
      %222 = sbr.rel (%p219) target = $region12
    $region11: #{conv2d_bn_relu.2} parent=5 // pred_region
      %s223 = ssub.s32 %s13, 1
      // Predicated region
      $region13: #{conv2d_bn_relu.2} parent=11 // pred_check
        %p224 = pneg %p77
      $region14: #{conv2d_bn_relu.2} parent=11 // pred_check_branch
        %226 = sbr.rel (%p224) target = $region16
      $region15: #{conv2d_bn_relu.2} parent=11 // pred_region
        %p227 = scmp.lt.s32.totalorder %s22, 0
        %s228 = scalar_select %p227, %s22, 0
        %s229 = smul.addr %s228, 4
        %s230 = scalar_lea.vmem %s1, %s229
      $region16: #{conv2d_bn_relu.2} parent=11 // pred_fallthru
        _
      // Predicated region
      $region17: #{conv2d_bn_relu.2} parent=11 // pred_check
        %p231 = pneg %p103
      $region18: #{conv2d_bn_relu.2} parent=11 // pred_check_branch
        %233 = sbr.rel (%p231) target = $region20
      $region19: #{conv2d_bn_relu.2} parent=11 // pred_region
        %p234 = scmp.lt.s32.totalorder %s22, 0
        %s235 = scalar_select %p234, %s22, 0
        %s236 = scalar_lea.vmem %s2, %s235
      $region20: #{conv2d_bn_relu.2} parent=11 // pred_fallthru
        _
      // Predicated region
      $region21: #{conv2d_bn_relu.2} parent=11 // pred_check
        %p237 = pneg %p129
      $region22: #{conv2d_bn_relu.2} parent=11 // pred_check_branch
        %239 = sbr.rel (%p237) target = $region24
      $region23: #{conv2d_bn_relu.2} parent=11 // pred_region
        %p240 = scmp.lt.s32.totalorder %s22, 0
        %s241 = scalar_select %p240, %s22, 0
        %s242 = scalar_lea.vmem %s3, %s241
      $region24: #{conv2d_bn_relu.2} parent=11 // pred_fallthru
        _
    $region12: #{conv2d_bn_relu.2} parent=5 // pred_fallthru
      _
    %p243 = scmp.lt.s32.totalorder %s13, 2
    // Predicated region
    $region25: #{conv2d_bn_relu.2} parent=5 // pred_check
      %p244 = pneg %p243
    $region26: #{conv2d_bn_relu.2} parent=5 // pred_check_branch
      %246 = sbr.rel (%p244) target = $region28
    $region27: #{conv2d_bn_relu.2} parent=5 // pred_region
      // Predicated region
      $region29: #{conv2d_bn_relu.2} parent=27 // pred_check
        %p247 = pneg %p45
      $region30: #{conv2d_bn_relu.2} parent=27 // pred_check_branch
        %249 = sbr.rel (%p247) target = $region32
      $region31: #{conv2d_bn_relu.2} parent=27 // pred_region
        %p250 = scmp.lt.s32.totalorder %s21, 1
        %s251 = scalar_select %p250, %s21, 1
        %s252 = smul.addr %s251, 33
        %s253 = smul.addr %s252, 4
        %s254 = scalar_lea.vmem %s0, %s253
      $region32: #{conv2d_bn_relu.2} parent=27 // pred_fallthru
        _
    $region28: #{conv2d_bn_relu.2} parent=5 // pred_fallthru
      _
    %p255 = scmp.le.s32.totalorder 1, %s13
    %p256 = scmp.lt.s32.totalorder %s13, 3
    %p257 = pnand %p255, %p256
    %p258 = pneg %p257
    // Predicated region
    $region33: #{conv2d_bn_relu.2} parent=5 // pred_check
      _
    $region34: #{conv2d_bn_relu.2} parent=5 // pred_check_branch
      %260 = sbr.rel (%p257) target = $region36
    $region35: #{conv2d_bn_relu.2} parent=5 // pred_region
      %s261 = ssub.s32 %s13, 1
      %p262 = scmp.lt.s32.totalorder %s23, 1
      %s263 = scalar_select %p262, %s23, 1
      %s264 = smul.addr %s263, 33
      %s265 = smul.addr %s264, 4
      %s266 = scalar_lea.vmem %s0, %s265
      %p267 = pneg %p51
      %p268 = pneg %p48
      %p269 = scmp.lt.s32.totalorder %s22, 0
      %s270 = scalar_select %p269, %s22, 0
      %s271 = smul.addr %s270, 4
      %s272 = scalar_lea.vmem %s1, %s271
      %p273 = pneg %p77
      %p274 = pneg %p74
      %p275 = scmp.lt.s32.totalorder %s22, 0
      %s276 = scalar_select %p275, %s22, 0
      %s277 = scalar_lea.vmem %s2, %s276
      %p278 = pneg %p103
      %p279 = pneg %p100
      %p280 = scmp.lt.s32.totalorder %s22, 0
      %s281 = scalar_select %p280, %s22, 0
      %s282 = scalar_lea.vmem %s3, %s281
      %p283 = pneg %p129
      %p284 = pneg %p126
      %p285 = pneg %p157
      %p286 = pneg %p154
      %p287 = scmp.lt.s32.totalorder %s23, 1
      %s288 = scalar_select %p287, %s23, 1
      %p289 = scmp.lt.s32.totalorder %s22, 0
      %s290 = scalar_select %p289, %s22, 0
      %s291 = smul.addr %s288, 28
      %s292 = sadd.s32 %s290, %s291
      %s293 = smul.addr %s292, 4
      %s294 = scalar_lea.vmem %s4, %s293
      %p295 = pneg %p183
      %p296 = pneg %p180
      %p297 = scmp.lt.s32.totalorder %s22, 0
      %s298 = scalar_select %p297, %s22, 0
      %s299 = scalar_lea.vmem %s5, %s298
      %p300 = pneg %p209
      %p301 = pneg %p206
      %p302 = scmp.lt.s32.totalorder %s22, 0
      %s303 = scalar_select %p302, %s22, 0
      %s304 = scalar_lea.vmem %s6, %s303
      %p305 = scmp.lt.s32.totalorder %s23, 1
      %s306 = scalar_select %p305, %s23, 1
      %s307 = smul.addr %s306, 33
      %s308 = smul.addr %s307, 4
      %s309 = scalar_lea.vmem %s0, %s308
      %p310 = scmp.lt.s32.totalorder %s22, 0
      %s311 = scalar_select %p310, %s22, 0
      %s312 = smul.addr %s311, 4
      %s313 = scalar_lea.vmem %s1, %s312
      %p314 = scmp.lt.s32.totalorder %s22, 0
      %s315 = scalar_select %p314, %s22, 0
      %s316 = scalar_lea.vmem %s2, %s315
      %p317 = scmp.lt.s32.totalorder %s22, 0
      %s318 = scalar_select %p317, %s22, 0
      %s319 = scalar_lea.vmem %s3, %s318
      %p320 = scmp.lt.s32.totalorder %s23, 1
      %s321 = scalar_select %p320, %s23, 1
      %p322 = scmp.lt.s32.totalorder %s22, 0
      %s323 = scalar_select %p322, %s22, 0
      %s324 = smul.addr %s321, 28
      %s325 = sadd.s32 %s323, %s324
      %s326 = smul.addr %s325, 4
      %s327 = scalar_lea.vmem %s4, %s326
      %p328 = scmp.lt.s32.totalorder %s22, 0
      %s329 = scalar_select %p328, %s22, 0
      %s330 = scalar_lea.vmem %s5, %s329
      %p331 = scmp.lt.s32.totalorder %s22, 0
      %s332 = scalar_select %p331, %s22, 0
      %s333 = scalar_lea.vmem %s6, %s332
      %p335 = scmp.eq.s32.totalorder %s23, 0
      // Predicated region
      $region37: #{conv2d_bn_relu.2} parent=35 // pred_check
        %p336 = pneg %p335
      $region38: #{conv2d_bn_relu.2} parent=35 // pred_check_branch
        %338 = sbr.rel (%p336) target = $region40
      $region39: #{conv2d_bn_relu.2} parent=35 // pred_region
        %339 = vst [vmem:[#allocation2] sm:$0x1] 0.0
        %340 = vst [vmem:[#allocation3] sm:$0x1] 0.0
      $region40: #{conv2d_bn_relu.2} parent=35 // pred_fallthru
        _
      %v341 = vld [vmem:[%s309] sm:$0xf]
      %v342 = vld [vmem:[%s309 + $0x4] sm:$0xf]
      %v343 = vld [vmem:[%s309 + $0x8] sm:$0xf]
      %v344 = vld [vmem:[%s309 + $0xc] sm:$0xf]
      %v345 = vld [vmem:[%s309 + $0x10] sm:$0xf]
      %v346 = vld [vmem:[%s309 + $0x14] sm:$0xf]
      %v347 = vld [vmem:[%s309 + $0x18] sm:$0xf]
      %v348 = vld [vmem:[%s309 + $0x1c] sm:$0xf]
      %v349 = vld [vmem:[%s309 + $0x20] sm:$0xf]
      %v350 = vld [vmem:[%s309 + $0x24] sm:$0xf]
      %v351 = vld [vmem:[%s309 + $0x28] sm:$0xf]
      %v352 = vld [vmem:[%s309 + $0x2c] sm:$0xf]
      %v353 = vld [vmem:[%s309 + $0x30] sm:$0xf]
      %v354 = vld [vmem:[%s309 + $0x34] sm:$0xf]
      %v355 = vld [vmem:[%s309 + $0x38] sm:$0xf]
      %v356 = vld [vmem:[%s309 + $0x3c] sm:$0xf]
      %v357 = vld [vmem:[%s309 + $0x40] sm:$0xf]
      %v358 = vld [vmem:[%s309 + $0x44] sm:$0xf]
      %v359 = vld [vmem:[%s309 + $0x48] sm:$0xf]
      %v360 = vld [vmem:[%s309 + $0x4c] sm:$0xf]
      %v361 = vld [vmem:[%s309 + $0x50] sm:$0xf]
      %v362 = vld [vmem:[%s309 + $0x54] sm:$0xf]
      %v363 = vld [vmem:[%s309 + $0x58] sm:$0xf]
      %v364 = vld [vmem:[%s309 + $0x5c] sm:$0xf]
      %v365 = vld [vmem:[%s309 + $0x60] sm:$0xf]
      %v366 = vld [vmem:[%s309 + $0x64] sm:$0xf]
      %v367 = vld [vmem:[%s309 + $0x68] sm:$0xf]
      %v368 = vld [vmem:[%s309 + $0x6c] sm:$0xf]
      %v369 = vld [vmem:[%s309 + $0x70] sm:$0xf]
      %v370 = vld [vmem:[%s309 + $0x74] sm:$0xf]
      %v371 = vld [vmem:[%s309 + $0x78] sm:$0xf]
      %v372 = vld [vmem:[%s309 + $0x7c] sm:$0xf]
      %v373 = vld [vmem:[%s309 + $0x80] sm:$0xf]
      %v374 = vunpack.c.l.bf16 %v341
      %v375 = vunpack.c.l.bf16 %v342
      %v376 = vunpack.c.l.bf16 %v343
      %v377 = vunpack.c.l.bf16 %v344
      %v378 = vunpack.c.l.bf16 %v345
      %v379 = vunpack.c.l.bf16 %v346
      %v380 = vunpack.c.l.bf16 %v347
      %v381 = vunpack.c.l.bf16 %v348
      %v382 = vunpack.c.l.bf16 %v349
      %v383 = vunpack.c.l.bf16 %v350
      %v384 = vunpack.c.l.bf16 %v351
      %v385 = vunpack.c.l.bf16 %v352
      %v386 = vunpack.c.l.bf16 %v353
      %v387 = vunpack.c.l.bf16 %v354
      %v388 = vunpack.c.l.bf16 %v355
      %v389 = vunpack.c.l.bf16 %v356
      %v390 = vunpack.c.l.bf16 %v357
      %v391 = vunpack.c.l.bf16 %v358
      %v392 = vunpack.c.l.bf16 %v359
      %v393 = vunpack.c.l.bf16 %v360
      %v394 = vunpack.c.l.bf16 %v361
      %v395 = vunpack.c.l.bf16 %v362
      %v396 = vunpack.c.l.bf16 %v363
      %v397 = vunpack.c.l.bf16 %v364
      %v398 = vunpack.c.l.bf16 %v365
      %v399 = vunpack.c.l.bf16 %v366
      %v400 = vunpack.c.l.bf16 %v367
      %v401 = vunpack.c.l.bf16 %v368
      %v402 = vunpack.c.l.bf16 %v369
      %v403 = vunpack.c.l.bf16 %v370
      %v404 = vunpack.c.l.bf16 %v371
      %v405 = vunpack.c.l.bf16 %v372
      %v406 = vunpack.c.l.bf16 %v373
      %v407 = vpack.c.bf16 %v375, %v374
      %v408 = vpack.c.bf16 %v377, %v376
      %v409 = vpack.c.bf16 %v379, %v378
      %v410 = vpack.c.bf16 %v381, %v380
      %v411 = vpack.c.bf16 %v383, %v382
      %v412 = vpack.c.bf16 %v385, %v384
      %v413 = vpack.c.bf16 %v387, %v386
      %v414 = vpack.c.bf16 %v389, %v388
      %v415 = vpack.c.bf16 %v391, %v390
      %v416 = vpack.c.bf16 %v393, %v392
      %v417 = vpack.c.bf16 %v395, %v394
      %v418 = vpack.c.bf16 %v397, %v396
      %v419 = vpack.c.bf16 %v399, %v398
      %v420 = vpack.c.bf16 %v401, %v400
      %v421 = vld [vmem:[%s313] sm:$0xf]
      %v422 = vld [vmem:[%s313 + $0x4] sm:$0xf]
      %v423 = vpack.c.bf16 %v402, %v402
      %s424 = scalar_lea.vmem %s313, 8
      %v425 = vld [vmem:[%s424] sm:$0xf]
      %v426 = vld [vmem:[%s424 + $0x4] sm:$0xf]
      %vm427 = vsmask.f32 7424
      %v429 = vshrl.u32 %v407, 16
      %v431 = vshll.u32 %v407, 16
      %v433 = vrot.slane %v431, 1
      %v434 = vor.u32 %v429, %v433
      %v436 = vshll.u32 %v408, 16
      %v438 = vrot.slane %v436, 1
      %v439 = vsel %vm427, %v434, %v438
      %v440 = vshrl.u32 %v408, 16
      %v442 = vor.u32 %v440, %v438
      %v444 = vshll.u32 %v409, 16
      %v446 = vrot.slane %v444, 1
      %v447 = vsel %vm427, %v442, %v446
      %v448 = vshrl.u32 %v409, 16
      %v450 = vor.u32 %v448, %v446
      %v452 = vshll.u32 %v410, 16
      %v454 = vrot.slane %v452, 1
      %v455 = vsel %vm427, %v450, %v454
      %v456 = vshrl.u32 %v410, 16
      %v458 = vor.u32 %v456, %v454
      %v460 = vshll.u32 %v411, 16
      %v462 = vrot.slane %v460, 1
      %v463 = vsel %vm427, %v458, %v462
      %v464 = vshrl.u32 %v411, 16
      %v466 = vor.u32 %v464, %v462
      %v468 = vshll.u32 %v412, 16
      %v470 = vrot.slane %v468, 1
      %v471 = vsel %vm427, %v466, %v470
      %v472 = vshrl.u32 %v412, 16
      %v474 = vor.u32 %v472, %v470
      %v476 = vshll.u32 %v413, 16
      %v478 = vrot.slane %v476, 1
      %v479 = vsel %vm427, %v474, %v478
      %v480 = vshrl.u32 %v413, 16
      %v482 = vor.u32 %v480, %v478
      %v484 = vshll.u32 %v414, 16
      %v486 = vrot.slane %v484, 1
      %v487 = vsel %vm427, %v482, %v486
      %v488 = vshrl.u32 %v414, 16
      %v490 = vor.u32 %v488, %v486
      %v492 = vshll.u32 %v415, 16
      %v494 = vrot.slane %v492, 1
      %v495 = vsel %vm427, %v490, %v494
      %v496 = vshrl.u32 %v415, 16
      %v498 = vor.u32 %v496, %v494
      %v500 = vshll.u32 %v416, 16
      %v502 = vrot.slane %v500, 1
      %v503 = vsel %vm427, %v498, %v502
      %v504 = vshrl.u32 %v416, 16
      %v506 = vor.u32 %v504, %v502
      %v508 = vshll.u32 %v417, 16
      %v510 = vrot.slane %v508, 1
      %v511 = vsel %vm427, %v506, %v510
      %v512 = vshrl.u32 %v417, 16
      %v514 = vor.u32 %v512, %v510
      %v516 = vshll.u32 %v418, 16
      %v518 = vrot.slane %v516, 1
      %v519 = vsel %vm427, %v514, %v518
      %v520 = vshrl.u32 %v418, 16
      %v522 = vor.u32 %v520, %v518
      %v524 = vshll.u32 %v419, 16
      %v526 = vrot.slane %v524, 1
      %v527 = vsel %vm427, %v522, %v526
      %v528 = vshrl.u32 %v419, 16
      %v530 = vor.u32 %v528, %v526
      %v532 = vshll.u32 %v420, 16
      %v534 = vrot.slane %v532, 1
      %v535 = vsel %vm427, %v530, %v534
      %v536 = vshrl.u32 %v420, 16
      %v538 = vor.u32 %v536, %v534
      %v540 = vshll.u32 %v423, 16
      %v542 = vrot.slane %v540, 1
      %v543 = vsel %vm427, %v538, %v542
      %v546 = vunpack.c.l.b16 %v425
      %v547 = vunpack.c.l.b16 %v426
      %v548 = vpack.c.b16 %v547, %v546
      %vm550 = vcmask 130048
      %v552 = vsel %vm550, %v439, 0
      %v555 = vsel %vm550, %v447, 0
      %v558 = vsel %vm550, %v455, 0
      %v561 = vsel %vm550, %v463, 0
      %v564 = vsel %vm550, %v471, 0
      %v567 = vsel %vm550, %v479, 0
      %v570 = vsel %vm550, %v487, 0
      %v573 = vsel %vm550, %v495, 0
      %v576 = vsel %vm550, %v503, 0
      %v579 = vsel %vm550, %v511, 0
      %v582 = vsel %vm550, %v519, 0
      %v585 = vsel %vm550, %v527, 0
      %v588 = vsel %vm550, %v535, 0
      %v591 = vsel %vm550, %v543, 0
      %593 = vmatprep.subr.bf16.mxu0 0
      %594 = vmatpush1.bf16.msra.mxu0 %v548
      %595 = vmatprep.subr.bf16.mxu0 0
      %596 = vmatpush1.bf16.msra.mxu0 0
      %597 = vmatprep.subr.bf16.mxu0 0
      %598 = vmatpush1.bf16.msra.mxu0 0
      %599 = vmatprep.subr.bf16.mxu0 0
      %600 = vmatpush1.bf16.msra.mxu0 0
      %601 = vmatprep.subr.bf16.mxu0 0
      %602 = vmatpush1.bf16.msra.mxu0 0
      %603 = vmatprep.subr.bf16.mxu0 0
      %604 = vmatpush1.bf16.msra.mxu0 0
      %605 = vmatprep.subr.bf16.mxu0 0
      %606 = vmatpush1.bf16.msra.mxu0 0
      %607 = vmatprep.subr.bf16.mxu0 0
      %608 = vmatpush1.bf16.msra.mxu0 0
      %609 = vmatprep.subr.bf16.mxu0 0
      %610 = vmatpush1.bf16.msra.mxu0 0
      %611 = vmatprep.subr.bf16.mxu0 0
      %612 = vmatpush1.bf16.msra.mxu0 0
      %613 = vmatprep.subr.bf16.mxu0 0
      %614 = vmatpush1.bf16.msra.mxu0 0
      %615 = vmatprep.subr.bf16.mxu0 0
      %616 = vmatpush1.bf16.msra.mxu0 0
      %617 = vmatprep.subr.bf16.mxu0 0
      %618 = vmatpush1.bf16.msra.mxu0 0
      %619 = vmatprep.subr.bf16.mxu0 0
      %620 = vmatpush1.bf16.msra.mxu0 0
      %621 = vmatprep.subr.bf16.mxu0 0
      %622 = vmatpush1.bf16.msra.mxu0 0
      %623 = vmatprep.subr.bf16.mxu0 0
      %624 = vmatpush1.bf16.msra.mxu0 0
      %625 = vmatprep.mubr.bf16.mxu0 0
      %626 = vmatmul.mubr.bf16.gmra.mrb[0].mxu0 %v552
      %v627 = vpop.f32.mrb[0].mxu0
      %v628 = vadd.f32 0.0, %v627
      %v629 = vpop.f32.mrb[0].mxu0
      %v630 = vpop.f32.mrb[0].mxu0
      %v631 = vadd.f32 0.0, %v630
      %v632 = vpop.f32.mrb[0].mxu0
      %633 = vmatprep.mubr.bf16.mxu0 0
      %634 = vmatmul.mubr.bf16.gmra.mrb[0].mxu0 %v555
      %v635 = vpop.f32.mrb[0].mxu0
      %v636 = vadd.f32 0.0, %v635
      %v637 = vpop.f32.mrb[0].mxu0
      %v638 = vpop.f32.mrb[0].mxu0
      %v639 = vadd.f32 0.0, %v638
      %v640 = vpop.f32.mrb[0].mxu0
      %641 = vmatprep.mubr.bf16.mxu0 0
      %642 = vmatmul.mubr.bf16.gmra.mrb[0].mxu0 %v558
      %v643 = vpop.f32.mrb[0].mxu0
      %v644 = vadd.f32 0.0, %v643
      %v645 = vpop.f32.mrb[0].mxu0
      %v646 = vpop.f32.mrb[0].mxu0
      %v647 = vadd.f32 0.0, %v646
      %v648 = vpop.f32.mrb[0].mxu0
      %649 = vmatprep.mubr.bf16.mxu0 0
      %650 = vmatmul.mubr.bf16.gmra.mrb[0].mxu0 %v561
      %v651 = vpop.f32.mrb[0].mxu0
      %v652 = vadd.f32 0.0, %v651
      %v653 = vpop.f32.mrb[0].mxu0
      %v654 = vpop.f32.mrb[0].mxu0
      %v655 = vadd.f32 0.0, %v654
      %v656 = vpop.f32.mrb[0].mxu0
      %657 = vmatprep.mubr.bf16.mxu0 0
      %658 = vmatmul.mubr.bf16.gmra.mrb[0].mxu0 %v564
      %v659 = vpop.f32.mrb[0].mxu0
      %v660 = vadd.f32 0.0, %v659
      %v661 = vpop.f32.mrb[0].mxu0
      %v662 = vpop.f32.mrb[0].mxu0
      %v663 = vadd.f32 0.0, %v662
      %v664 = vpop.f32.mrb[0].mxu0
      %665 = vmatprep.mubr.bf16.mxu0 0
      %666 = vmatmul.mubr.bf16.gmra.mrb[0].mxu0 %v567
      %v667 = vpop.f32.mrb[0].mxu0
      %v668 = vadd.f32 0.0, %v667
      %v669 = vpop.f32.mrb[0].mxu0
      %v670 = vpop.f32.mrb[0].mxu0
      %v671 = vadd.f32 0.0, %v670
      %v672 = vpop.f32.mrb[0].mxu0
      %673 = vmatprep.mubr.bf16.mxu0 0
      %674 = vmatmul.mubr.bf16.gmra.mrb[0].mxu0 %v570
      %v675 = vpop.f32.mrb[0].mxu0
      %v676 = vadd.f32 0.0, %v675
      %v677 = vpop.f32.mrb[0].mxu0
      %v678 = vpop.f32.mrb[0].mxu0
      %v679 = vadd.f32 0.0, %v678
      %v680 = vpop.f32.mrb[0].mxu0
      %681 = vmatprep.mubr.bf16.mxu0 0
      %682 = vmatmul.mubr.bf16.gmra.mrb[0].mxu0 %v573
      %v683 = vpop.f32.mrb[0].mxu0
      %v684 = vadd.f32 0.0, %v683
      %v685 = vpop.f32.mrb[0].mxu0
      %v686 = vpop.f32.mrb[0].mxu0
      %v687 = vadd.f32 0.0, %v686
      %v688 = vpop.f32.mrb[0].mxu0
      %689 = vmatprep.mubr.bf16.mxu0 0
      %690 = vmatmul.mubr.bf16.gmra.mrb[0].mxu0 %v576
      %v691 = vpop.f32.mrb[0].mxu0
      %v692 = vadd.f32 0.0, %v691
      %v693 = vpop.f32.mrb[0].mxu0
      %v694 = vpop.f32.mrb[0].mxu0
      %v695 = vadd.f32 0.0, %v694
      %v696 = vpop.f32.mrb[0].mxu0
      %697 = vmatprep.mubr.bf16.mxu0 0
      %698 = vmatmul.mubr.bf16.gmra.mrb[0].mxu0 %v579
      %v699 = vpop.f32.mrb[0].mxu0
      %v700 = vadd.f32 0.0, %v699
      %v701 = vpop.f32.mrb[0].mxu0
      %v702 = vpop.f32.mrb[0].mxu0
      %v703 = vadd.f32 0.0, %v702
      %v704 = vpop.f32.mrb[0].mxu0
      %705 = vmatprep.mubr.bf16.mxu0 0
      %706 = vmatmul.mubr.bf16.gmra.mrb[0].mxu0 %v582
      %v707 = vpop.f32.mrb[0].mxu0
      %v708 = vadd.f32 0.0, %v707
      %v709 = vpop.f32.mrb[0].mxu0
      %v710 = vpop.f32.mrb[0].mxu0
      %v711 = vadd.f32 0.0, %v710
      %v712 = vpop.f32.mrb[0].mxu0
      %713 = vmatprep.mubr.bf16.mxu0 0
      %714 = vmatmul.mubr.bf16.gmra.mrb[0].mxu0 %v585
      %v715 = vpop.f32.mrb[0].mxu0
      %v716 = vadd.f32 0.0, %v715
      %v717 = vpop.f32.mrb[0].mxu0
      %v718 = vpop.f32.mrb[0].mxu0
      %v719 = vadd.f32 0.0, %v718
      %v720 = vpop.f32.mrb[0].mxu0
      %721 = vmatprep.mubr.bf16.mxu0 0
      %722 = vmatmul.mubr.bf16.gmra.mrb[0].mxu0 %v588
      %v723 = vpop.f32.mrb[0].mxu0
      %v724 = vadd.f32 0.0, %v723
      %v725 = vpop.f32.mrb[0].mxu0
      %v726 = vpop.f32.mrb[0].mxu0
      %v727 = vadd.f32 0.0, %v726
      %v728 = vpop.f32.mrb[0].mxu0
      %729 = vmatprep.mubr.bf16.mxu0 0
      %730 = vmatmul.mubr.bf16.gmra.mrb[0].mxu0 %v591
      %v731 = vpop.f32.mrb[0].mxu0
      %v732 = vadd.f32 0.0, %v731
      %v733 = vpop.f32.mrb[0].mxu0
      %v734 = vpop.f32.mrb[0].mxu0
      %v735 = vadd.f32 0.0, %v734
      %v736 = vpop.f32.mrb[0].mxu0
      %737 = vdwg.mxu0
      %v740 = vunpack.c.l.b16 %v421
      %v741 = vunpack.c.l.b16 %v422
      %v742 = vpack.c.b16 %v741, %v740
      %v744 = vsel %vm550, %v407, 0
      %v746 = vsel %vm550, %v408, 0
      %v748 = vsel %vm550, %v409, 0
      %v750 = vsel %vm550, %v410, 0
      %v752 = vsel %vm550, %v411, 0
      %v754 = vsel %vm550, %v412, 0
      %v756 = vsel %vm550, %v413, 0
      %v758 = vsel %vm550, %v414, 0
      %v760 = vsel %vm550, %v415, 0
      %v762 = vsel %vm550, %v416, 0
      %v764 = vsel %vm550, %v417, 0
      %v766 = vsel %vm550, %v418, 0
      %v768 = vsel %vm550, %v419, 0
      %v770 = vsel %vm550, %v420, 0
      %772 = vmatprep.subr.bf16.mxu0 0
      %773 = vmatpush1.bf16.msra.mxu0 %v742
      %774 = vmatprep.subr.bf16.mxu0 0
      %775 = vmatpush1.bf16.msra.mxu0 0
      %776 = vmatprep.subr.bf16.mxu0 0
      %777 = vmatpush1.bf16.msra.mxu0 0
      %778 = vmatprep.subr.bf16.mxu0 0
      %779 = vmatpush1.bf16.msra.mxu0 0
      %780 = vmatprep.subr.bf16.mxu0 0
      %781 = vmatpush1.bf16.msra.mxu0 0
      %782 = vmatprep.subr.bf16.mxu0 0
      %783 = vmatpush1.bf16.msra.mxu0 0
      %784 = vmatprep.subr.bf16.mxu0 0
      %785 = vmatpush1.bf16.msra.mxu0 0
      %786 = vmatprep.subr.bf16.mxu0 0
      %787 = vmatpush1.bf16.msra.mxu0 0
      %788 = vmatprep.subr.bf16.mxu0 0
      %789 = vmatpush1.bf16.msra.mxu0 0
      %790 = vmatprep.subr.bf16.mxu0 0
      %791 = vmatpush1.bf16.msra.mxu0 0
      %792 = vmatprep.subr.bf16.mxu0 0
      %793 = vmatpush1.bf16.msra.mxu0 0
      %794 = vmatprep.subr.bf16.mxu0 0
      %795 = vmatpush1.bf16.msra.mxu0 0
      %796 = vmatprep.subr.bf16.mxu0 0
      %797 = vmatpush1.bf16.msra.mxu0 0
      %798 = vmatprep.subr.bf16.mxu0 0
      %799 = vmatpush1.bf16.msra.mxu0 0
      %800 = vmatprep.subr.bf16.mxu0 0
      %801 = vmatpush1.bf16.msra.mxu0 0
      %802 = vmatprep.subr.bf16.mxu0 0
      %803 = vmatpush1.bf16.msra.mxu0 0
      %804 = vmatprep.mubr.bf16.mxu0 0
      %805 = vmatmul.mubr.bf16.gmra.mrb[0].mxu0 %v744
      %v806 = vpop.f32.mrb[0].mxu0
      %v807 = vadd.f32 %v628, %v806
      %v808 = vpop.f32.mrb[0].mxu0
      %v809 = vpop.f32.mrb[0].mxu0
      %v810 = vadd.f32 %v631, %v809
      %v811 = vpop.f32.mrb[0].mxu0
      %812 = vmatprep.mubr.bf16.mxu0 0
      %813 = vmatmul.mubr.bf16.gmra.mrb[0].mxu0 %v746
      %v814 = vpop.f32.mrb[0].mxu0
      %v815 = vadd.f32 %v636, %v814
      %v816 = vpop.f32.mrb[0].mxu0
      %v817 = vpop.f32.mrb[0].mxu0
      %v818 = vadd.f32 %v639, %v817
      %v819 = vpop.f32.mrb[0].mxu0
      %820 = vmatprep.mubr.bf16.mxu0 0
      %821 = vmatmul.mubr.bf16.gmra.mrb[0].mxu0 %v748
      %v822 = vpop.f32.mrb[0].mxu0
      %v823 = vadd.f32 %v644, %v822
      %v824 = vpop.f32.mrb[0].mxu0
      %v825 = vpop.f32.mrb[0].mxu0
      %v826 = vadd.f32 %v647, %v825
      %v827 = vpop.f32.mrb[0].mxu0
      %828 = vmatprep.mubr.bf16.mxu0 0
      %829 = vmatmul.mubr.bf16.gmra.mrb[0].mxu0 %v750
      %v830 = vpop.f32.mrb[0].mxu0
      %v831 = vadd.f32 %v652, %v830
      %v832 = vpop.f32.mrb[0].mxu0
      %v833 = vpop.f32.mrb[0].mxu0
      %v834 = vadd.f32 %v655, %v833
      %v835 = vpop.f32.mrb[0].mxu0
      %836 = vmatprep.mubr.bf16.mxu0 0
      %837 = vmatmul.mubr.bf16.gmra.mrb[0].mxu0 %v752
      %v838 = vpop.f32.mrb[0].mxu0
      %v839 = vadd.f32 %v660, %v838
      %v840 = vpop.f32.mrb[0].mxu0
      %v841 = vpop.f32.mrb[0].mxu0
      %v842 = vadd.f32 %v663, %v841
      %v843 = vpop.f32.mrb[0].mxu0
      %844 = vmatprep.mubr.bf16.mxu0 0
      %845 = vmatmul.mubr.bf16.gmra.mrb[0].mxu0 %v754
      %v846 = vpop.f32.mrb[0].mxu0
      %v847 = vadd.f32 %v668, %v846
      %v848 = vpop.f32.mrb[0].mxu0
      %v849 = vpop.f32.mrb[0].mxu0
      %v850 = vadd.f32 %v671, %v849
      %v851 = vpop.f32.mrb[0].mxu0
      %852 = vmatprep.mubr.bf16.mxu0 0
      %853 = vmatmul.mubr.bf16.gmra.mrb[0].mxu0 %v756
      %v854 = vpop.f32.mrb[0].mxu0
      %v855 = vadd.f32 %v676, %v854
      %v856 = vpop.f32.mrb[0].mxu0
      %v857 = vpop.f32.mrb[0].mxu0
      %v858 = vadd.f32 %v679, %v857
      %v859 = vpop.f32.mrb[0].mxu0
      %860 = vmatprep.mubr.bf16.mxu0 0
      %861 = vmatmul.mubr.bf16.gmra.mrb[0].mxu0 %v758
      %v862 = vpop.f32.mrb[0].mxu0
      %v863 = vadd.f32 %v684, %v862
      %v864 = vpop.f32.mrb[0].mxu0
      %v865 = vpop.f32.mrb[0].mxu0
      %v866 = vadd.f32 %v687, %v865
      %v867 = vpop.f32.mrb[0].mxu0
      %868 = vmatprep.mubr.bf16.mxu0 0
      %869 = vmatmul.mubr.bf16.gmra.mrb[0].mxu0 %v760
      %v870 = vpop.f32.mrb[0].mxu0
      %v871 = vadd.f32 %v692, %v870
      %v872 = vpop.f32.mrb[0].mxu0
      %v873 = vpop.f32.mrb[0].mxu0
      %v874 = vadd.f32 %v695, %v873
      %v875 = vpop.f32.mrb[0].mxu0
      %876 = vmatprep.mubr.bf16.mxu0 0
      %877 = vmatmul.mubr.bf16.gmra.mrb[0].mxu0 %v762
      %v878 = vpop.f32.mrb[0].mxu0
      %v879 = vadd.f32 %v700, %v878
      %v880 = vpop.f32.mrb[0].mxu0
      %v881 = vpop.f32.mrb[0].mxu0
      %v882 = vadd.f32 %v703, %v881
      %v883 = vpop.f32.mrb[0].mxu0
      %884 = vmatprep.mubr.bf16.mxu0 0
      %885 = vmatmul.mubr.bf16.gmra.mrb[0].mxu0 %v764
      %v886 = vpop.f32.mrb[0].mxu0
      %v887 = vadd.f32 %v708, %v886
      %v888 = vpop.f32.mrb[0].mxu0
      %v889 = vpop.f32.mrb[0].mxu0
      %v890 = vadd.f32 %v711, %v889
      %v891 = vpop.f32.mrb[0].mxu0
      %892 = vmatprep.mubr.bf16.mxu0 0
      %893 = vmatmul.mubr.bf16.gmra.mrb[0].mxu0 %v766
      %v894 = vpop.f32.mrb[0].mxu0
      %v895 = vadd.f32 %v716, %v894
      %v896 = vpop.f32.mrb[0].mxu0
      %v897 = vpop.f32.mrb[0].mxu0
      %v898 = vadd.f32 %v719, %v897
      %v899 = vpop.f32.mrb[0].mxu0
      %900 = vmatprep.mubr.bf16.mxu0 0
      %901 = vmatmul.mubr.bf16.gmra.mrb[0].mxu0 %v768
      %v902 = vpop.f32.mrb[0].mxu0
      %v903 = vadd.f32 %v724, %v902
      %v904 = vpop.f32.mrb[0].mxu0
      %v905 = vpop.f32.mrb[0].mxu0
      %v906 = vadd.f32 %v727, %v905
      %v907 = vpop.f32.mrb[0].mxu0
      %908 = vmatprep.mubr.bf16.mxu0 0
      %909 = vmatmul.mubr.bf16.gmra.mrb[0].mxu0 %v770
      %v910 = vpop.f32.mrb[0].mxu0
      %v911 = vadd.f32 %v732, %v910
      %v912 = vpop.f32.mrb[0].mxu0
      %v913 = vpop.f32.mrb[0].mxu0
      %v914 = vadd.f32 %v735, %v913
      %v915 = vpop.f32.mrb[0].mxu0
      %916 = vdwg.mxu0
      %s917 = scalar_lea.vmem %s313, 16
      %v918 = vld [vmem:[%s917] sm:$0xf]
      %v919 = vld [vmem:[%s917 + $0x4] sm:$0xf]
      %vm935 = vcmask 1046528
      %v936 = vrot.slane %v407, 1
      %v937 = vrot.slane %v408, 1
      %v938 = vsel %vm935, %v936, %v937
      %v939 = vrot.slane %v409, 1
      %v940 = vsel %vm935, %v937, %v939
      %v941 = vrot.slane %v410, 1
      %v942 = vsel %vm935, %v939, %v941
      %v943 = vrot.slane %v411, 1
      %v944 = vsel %vm935, %v941, %v943
      %v945 = vrot.slane %v412, 1
      %v946 = vsel %vm935, %v943, %v945
      %v947 = vrot.slane %v413, 1
      %v948 = vsel %vm935, %v945, %v947
      %v949 = vrot.slane %v414, 1
      %v950 = vsel %vm935, %v947, %v949
      %v951 = vrot.slane %v415, 1
      %v952 = vsel %vm935, %v949, %v951
      %v953 = vrot.slane %v416, 1
      %v954 = vsel %vm935, %v951, %v953
      %v955 = vrot.slane %v417, 1
      %v956 = vsel %vm935, %v953, %v955
      %v957 = vrot.slane %v418, 1
      %v958 = vsel %vm935, %v955, %v957
      %v959 = vrot.slane %v419, 1
      %v960 = vsel %vm935, %v957, %v959
      %v961 = vrot.slane %v420, 1
      %v962 = vsel %vm935, %v959, %v961
      %v963 = vrot.slane %v423, 1
      %v964 = vsel %vm935, %v961, %v963
      %v967 = vunpack.c.l.b16 %v918
      %v968 = vunpack.c.l.b16 %v919
      %v969 = vpack.c.b16 %v968, %v967
      %v972 = vsel %vm550, %v938, 0
      %v975 = vsel %vm550, %v940, 0
      %v978 = vsel %vm550, %v942, 0
      %v981 = vsel %vm550, %v944, 0
      %v984 = vsel %vm550, %v946, 0
      %v987 = vsel %vm550, %v948, 0
      %v990 = vsel %vm550, %v950, 0
      %v993 = vsel %vm550, %v952, 0
      %v996 = vsel %vm550, %v954, 0
      %v999 = vsel %vm550, %v956, 0
      %v1002 = vsel %vm550, %v958, 0
      %v1005 = vsel %vm550, %v960, 0
      %v1008 = vsel %vm550, %v962, 0
      %v1011 = vsel %vm550, %v964, 0
      %1013 = vmatprep.subr.bf16.mxu0 0
      %1014 = vmatpush1.bf16.msra.mxu0 %v969
      %1015 = vmatprep.subr.bf16.mxu0 0
      %1016 = vmatpush1.bf16.msra.mxu0 0
      %1017 = vmatprep.subr.bf16.mxu0 0
      %1018 = vmatpush1.bf16.msra.mxu0 0
      %1019 = vmatprep.subr.bf16.mxu0 0
      %1020 = vmatpush1.bf16.msra.mxu0 0
      %1021 = vmatprep.subr.bf16.mxu0 0
      %1022 = vmatpush1.bf16.msra.mxu0 0
      %1023 = vmatprep.subr.bf16.mxu0 0
      %1024 = vmatpush1.bf16.msra.mxu0 0
      %1025 = vmatprep.subr.bf16.mxu0 0
      %1026 = vmatpush1.bf16.msra.mxu0 0
      %1027 = vmatprep.subr.bf16.mxu0 0
      %1028 = vmatpush1.bf16.msra.mxu0 0
      %1029 = vmatprep.subr.bf16.mxu0 0
      %1030 = vmatpush1.bf16.msra.mxu0 0
      %1031 = vmatprep.subr.bf16.mxu0 0
      %1032 = vmatpush1.bf16.msra.mxu0 0
      %1033 = vmatprep.subr.bf16.mxu0 0
      %1034 = vmatpush1.bf16.msra.mxu0 0
      %1035 = vmatprep.subr.bf16.mxu0 0
      %1036 = vmatpush1.bf16.msra.mxu0 0
      %1037 = vmatprep.subr.bf16.mxu0 0
      %1038 = vmatpush1.bf16.msra.mxu0 0
      %1039 = vmatprep.subr.bf16.mxu0 0
      %1040 = vmatpush1.bf16.msra.mxu0 0
      %1041 = vmatprep.subr.bf16.mxu0 0
      %1042 = vmatpush1.bf16.msra.mxu0 0
      %1043 = vmatprep.subr.bf16.mxu0 0
      %1044 = vmatpush1.bf16.msra.mxu0 0
      %1045 = vmatprep.mubr.bf16.mxu0 0
      %1046 = vmatmul.mubr.bf16.gmra.mrb[0].mxu0 %v972
      %v1047 = vpop.f32.mrb[0].mxu0
      %v1048 = vadd.f32 0.0, %v1047
      %v1049 = vpop.f32.mrb[0].mxu0
      %v1050 = vpop.f32.mrb[0].mxu0
      %v1051 = vadd.f32 0.0, %v1050
      %v1052 = vpop.f32.mrb[0].mxu0
      %1053 = vmatprep.mubr.bf16.mxu0 0
      %1054 = vmatmul.mubr.bf16.gmra.mrb[0].mxu0 %v975
      %v1055 = vpop.f32.mrb[0].mxu0
      %v1056 = vadd.f32 0.0, %v1055
      %v1057 = vpop.f32.mrb[0].mxu0
      %v1058 = vpop.f32.mrb[0].mxu0
      %v1059 = vadd.f32 0.0, %v1058
      %v1060 = vpop.f32.mrb[0].mxu0
      %1061 = vmatprep.mubr.bf16.mxu0 0
      %1062 = vmatmul.mubr.bf16.gmra.mrb[0].mxu0 %v978
      %v1063 = vpop.f32.mrb[0].mxu0
      %v1064 = vadd.f32 0.0, %v1063
      %v1065 = vpop.f32.mrb[0].mxu0
      %v1066 = vpop.f32.mrb[0].mxu0
      %v1067 = vadd.f32 0.0, %v1066
      %v1068 = vpop.f32.mrb[0].mxu0
      %1069 = vmatprep.mubr.bf16.mxu0 0
      %1070 = vmatmul.mubr.bf16.gmra.mrb[0].mxu0 %v981
      %v1071 = vpop.f32.mrb[0].mxu0
      %v1072 = vadd.f32 0.0, %v1071
      %v1073 = vpop.f32.mrb[0].mxu0
      %v1074 = vpop.f32.mrb[0].mxu0
      %v1075 = vadd.f32 0.0, %v1074
      %v1076 = vpop.f32.mrb[0].mxu0
      %1077 = vmatprep.mubr.bf16.mxu0 0
      %1078 = vmatmul.mubr.bf16.gmra.mrb[0].mxu0 %v984
      %v1079 = vpop.f32.mrb[0].mxu0
      %v1080 = vadd.f32 0.0, %v1079
      %v1081 = vpop.f32.mrb[0].mxu0
      %v1082 = vpop.f32.mrb[0].mxu0
      %v1083 = vadd.f32 0.0, %v1082
      %v1084 = vpop.f32.mrb[0].mxu0
      %1085 = vmatprep.mubr.bf16.mxu0 0
      %1086 = vmatmul.mubr.bf16.gmra.mrb[0].mxu0 %v987
      %v1087 = vpop.f32.mrb[0].mxu0
      %v1088 = vadd.f32 0.0, %v1087
      %v1089 = vpop.f32.mrb[0].mxu0
      %v1090 = vpop.f32.mrb[0].mxu0
      %v1091 = vadd.f32 0.0, %v1090
      %v1092 = vpop.f32.mrb[0].mxu0
      %1093 = vmatprep.mubr.bf16.mxu0 0
      %1094 = vmatmul.mubr.bf16.gmra.mrb[0].mxu0 %v990
      %v1095 = vpop.f32.mrb[0].mxu0
      %v1096 = vadd.f32 0.0, %v1095
      %v1097 = vpop.f32.mrb[0].mxu0
      %v1098 = vpop.f32.mrb[0].mxu0
      %v1099 = vadd.f32 0.0, %v1098
      %v1100 = vpop.f32.mrb[0].mxu0
      %1101 = vmatprep.mubr.bf16.mxu0 0
      %1102 = vmatmul.mubr.bf16.gmra.mrb[0].mxu0 %v993
      %v1103 = vpop.f32.mrb[0].mxu0
      %v1104 = vadd.f32 0.0, %v1103
      %v1105 = vpop.f32.mrb[0].mxu0
      %v1106 = vpop.f32.mrb[0].mxu0
      %v1107 = vadd.f32 0.0, %v1106
      %v1108 = vpop.f32.mrb[0].mxu0
      %1109 = vmatprep.mubr.bf16.mxu0 0
      %1110 = vmatmul.mubr.bf16.gmra.mrb[0].mxu0 %v996
      %v1111 = vpop.f32.mrb[0].mxu0
      %v1112 = vadd.f32 0.0, %v1111
      %v1113 = vpop.f32.mrb[0].mxu0
      %v1114 = vpop.f32.mrb[0].mxu0
      %v1115 = vadd.f32 0.0, %v1114
      %v1116 = vpop.f32.mrb[0].mxu0
      %1117 = vmatprep.mubr.bf16.mxu0 0
      %1118 = vmatmul.mubr.bf16.gmra.mrb[0].mxu0 %v999
      %v1119 = vpop.f32.mrb[0].mxu0
      %v1120 = vadd.f32 0.0, %v1119
      %v1121 = vpop.f32.mrb[0].mxu0
      %v1122 = vpop.f32.mrb[0].mxu0
      %v1123 = vadd.f32 0.0, %v1122
      %v1124 = vpop.f32.mrb[0].mxu0
      %1125 = vmatprep.mubr.bf16.mxu0 0
      %1126 = vmatmul.mubr.bf16.gmra.mrb[0].mxu0 %v1002
      %v1127 = vpop.f32.mrb[0].mxu0
      %v1128 = vadd.f32 0.0, %v1127
      %v1129 = vpop.f32.mrb[0].mxu0
      %v1130 = vpop.f32.mrb[0].mxu0
      %v1131 = vadd.f32 0.0, %v1130
      %v1132 = vpop.f32.mrb[0].mxu0
      %1133 = vmatprep.mubr.bf16.mxu0 0
      %1134 = vmatmul.mubr.bf16.gmra.mrb[0].mxu0 %v1005
      %v1135 = vpop.f32.mrb[0].mxu0
      %v1136 = vadd.f32 0.0, %v1135
      %v1137 = vpop.f32.mrb[0].mxu0
      %v1138 = vpop.f32.mrb[0].mxu0
      %v1139 = vadd.f32 0.0, %v1138
      %v1140 = vpop.f32.mrb[0].mxu0
      %1141 = vmatprep.mubr.bf16.mxu0 0
      %1142 = vmatmul.mubr.bf16.gmra.mrb[0].mxu0 %v1008
      %v1143 = vpop.f32.mrb[0].mxu0
      %v1144 = vadd.f32 0.0, %v1143
      %v1145 = vpop.f32.mrb[0].mxu0
      %v1146 = vpop.f32.mrb[0].mxu0
      %v1147 = vadd.f32 0.0, %v1146
      %v1148 = vpop.f32.mrb[0].mxu0
      %1149 = vmatprep.mubr.bf16.mxu0 0
      %1150 = vmatmul.mubr.bf16.gmra.mrb[0].mxu0 %v1011
      %v1151 = vpop.f32.mrb[0].mxu0
      %v1152 = vadd.f32 0.0, %v1151
      %v1153 = vpop.f32.mrb[0].mxu0
      %v1154 = vpop.f32.mrb[0].mxu0
      %v1155 = vadd.f32 0.0, %v1154
      %v1156 = vpop.f32.mrb[0].mxu0
      %1157 = vdwg.mxu0
      %v1158 = vadd.f32 %v807, %v1048
      %v1159 = vadd.f32 %v810, %v1051
      %v1160 = vadd.f32 %v815, %v1056
      %v1161 = vadd.f32 %v818, %v1059
      %v1162 = vadd.f32 %v823, %v1064
      %v1163 = vadd.f32 %v826, %v1067
      %v1164 = vadd.f32 %v831, %v1072
      %v1165 = vadd.f32 %v834, %v1075
      %v1166 = vadd.f32 %v839, %v1080
      %v1167 = vadd.f32 %v842, %v1083
      %v1168 = vadd.f32 %v847, %v1088
      %v1169 = vadd.f32 %v850, %v1091
      %v1170 = vadd.f32 %v855, %v1096
      %v1171 = vadd.f32 %v858, %v1099
      %v1172 = vadd.f32 %v863, %v1104
      %v1173 = vadd.f32 %v866, %v1107
      %v1174 = vadd.f32 %v871, %v1112
      %v1175 = vadd.f32 %v874, %v1115
      %v1176 = vadd.f32 %v879, %v1120
      %v1177 = vadd.f32 %v882, %v1123
      %v1178 = vadd.f32 %v887, %v1128
      %v1179 = vadd.f32 %v890, %v1131
      %v1180 = vadd.f32 %v895, %v1136
      %v1181 = vadd.f32 %v898, %v1139
      %v1182 = vadd.f32 %v903, %v1144
      %v1183 = vadd.f32 %v906, %v1147
      %v1184 = vadd.f32 %v911, %v1152
      %v1185 = vadd.f32 %v914, %v1155
      %v1186 = vpack.c.bf16 %v403, %v402
      %s1187 = scalar_lea.vmem %s313, 24
      %v1188 = vld [vmem:[%s1187] sm:$0xf]
      %v1189 = vld [vmem:[%s1187 + $0x4] sm:$0xf]
      %v1192 = vunpack.c.l.b16 %v1188
      %v1193 = vunpack.c.l.b16 %v1189
      %v1194 = vpack.c.b16 %v1193, %v1192
      %v1197 = vsel %vm550, %v1186, 0
      %1199 = vmatprep.subr.bf16.mxu0 0
      %1200 = vmatpush1.bf16.msra.mxu0 %v1194
      %1201 = vmatprep.subr.bf16.mxu0 0
      %1202 = vmatpush1.bf16.msra.mxu0 0
      %1203 = vmatprep.subr.bf16.mxu0 0
      %1204 = vmatpush1.bf16.msra.mxu0 0
      %1205 = vmatprep.subr.bf16.mxu0 0
      %1206 = vmatpush1.bf16.msra.mxu0 0
      %1207 = vmatprep.subr.bf16.mxu0 0
      %1208 = vmatpush1.bf16.msra.mxu0 0
      %1209 = vmatprep.subr.bf16.mxu0 0
      %1210 = vmatpush1.bf16.msra.mxu0 0
      %1211 = vmatprep.subr.bf16.mxu0 0
      %1212 = vmatpush1.bf16.msra.mxu0 0
      %1213 = vmatprep.subr.bf16.mxu0 0
      %1214 = vmatpush1.bf16.msra.mxu0 0
      %1215 = vmatprep.subr.bf16.mxu0 0
      %1216 = vmatpush1.bf16.msra.mxu0 0
      %1217 = vmatprep.subr.bf16.mxu0 0
      %1218 = vmatpush1.bf16.msra.mxu0 0
      %1219 = vmatprep.subr.bf16.mxu0 0
      %1220 = vmatpush1.bf16.msra.mxu0 0
      %1221 = vmatprep.subr.bf16.mxu0 0
      %1222 = vmatpush1.bf16.msra.mxu0 0
      %1223 = vmatprep.subr.bf16.mxu0 0
      %1224 = vmatpush1.bf16.msra.mxu0 0
      %1225 = vmatprep.subr.bf16.mxu0 0
      %1226 = vmatpush1.bf16.msra.mxu0 0
      %1227 = vmatprep.subr.bf16.mxu0 0
      %1228 = vmatpush1.bf16.msra.mxu0 0
      %1229 = vmatprep.subr.bf16.mxu0 0
      %1230 = vmatpush1.bf16.msra.mxu0 0
      %1231 = vmatprep.mubr.bf16.mxu0 0
      %1232 = vmatmul.mubr.bf16.gmra.mrb[0].mxu0 %v746
      %v1233 = vpop.f32.mrb[0].mxu0
      %v1234 = vadd.f32 0.0, %v1233
      %v1235 = vpop.f32.mrb[0].mxu0
      %v1236 = vpop.f32.mrb[0].mxu0
      %v1237 = vadd.f32 0.0, %v1236
      %v1238 = vpop.f32.mrb[0].mxu0
      %1239 = vmatprep.mubr.bf16.mxu0 0
      %1240 = vmatmul.mubr.bf16.gmra.mrb[0].mxu0 %v748
      %v1241 = vpop.f32.mrb[0].mxu0
      %v1242 = vadd.f32 0.0, %v1241
      %v1243 = vpop.f32.mrb[0].mxu0
      %v1244 = vpop.f32.mrb[0].mxu0
      %v1245 = vadd.f32 0.0, %v1244
      %v1246 = vpop.f32.mrb[0].mxu0
      %1247 = vmatprep.mubr.bf16.mxu0 0
      %1248 = vmatmul.mubr.bf16.gmra.mrb[0].mxu0 %v750
      %v1249 = vpop.f32.mrb[0].mxu0
      %v1250 = vadd.f32 0.0, %v1249
      %v1251 = vpop.f32.mrb[0].mxu0
      %v1252 = vpop.f32.mrb[0].mxu0
      %v1253 = vadd.f32 0.0, %v1252
      %v1254 = vpop.f32.mrb[0].mxu0
      %1255 = vmatprep.mubr.bf16.mxu0 0
      %1256 = vmatmul.mubr.bf16.gmra.mrb[0].mxu0 %v752
      %v1257 = vpop.f32.mrb[0].mxu0
      %v1258 = vadd.f32 0.0, %v1257
      %v1259 = vpop.f32.mrb[0].mxu0
      %v1260 = vpop.f32.mrb[0].mxu0
      %v1261 = vadd.f32 0.0, %v1260
      %v1262 = vpop.f32.mrb[0].mxu0
      %1263 = vmatprep.mubr.bf16.mxu0 0
      %1264 = vmatmul.mubr.bf16.gmra.mrb[0].mxu0 %v754
      %v1265 = vpop.f32.mrb[0].mxu0
      %v1266 = vadd.f32 0.0, %v1265
      %v1267 = vpop.f32.mrb[0].mxu0
      %v1268 = vpop.f32.mrb[0].mxu0
      %v1269 = vadd.f32 0.0, %v1268
      %v1270 = vpop.f32.mrb[0].mxu0
      %1271 = vmatprep.mubr.bf16.mxu0 0
      %1272 = vmatmul.mubr.bf16.gmra.mrb[0].mxu0 %v756
      %v1273 = vpop.f32.mrb[0].mxu0
      %v1274 = vadd.f32 0.0, %v1273
      %v1275 = vpop.f32.mrb[0].mxu0
      %v1276 = vpop.f32.mrb[0].mxu0
      %v1277 = vadd.f32 0.0, %v1276
      %v1278 = vpop.f32.mrb[0].mxu0
      %1279 = vmatprep.mubr.bf16.mxu0 0
      %1280 = vmatmul.mubr.bf16.gmra.mrb[0].mxu0 %v758
      %v1281 = vpop.f32.mrb[0].mxu0
      %v1282 = vadd.f32 0.0, %v1281
      %v1283 = vpop.f32.mrb[0].mxu0
      %v1284 = vpop.f32.mrb[0].mxu0
      %v1285 = vadd.f32 0.0, %v1284
      %v1286 = vpop.f32.mrb[0].mxu0
      %1287 = vmatprep.mubr.bf16.mxu0 0
      %1288 = vmatmul.mubr.bf16.gmra.mrb[0].mxu0 %v760
      %v1289 = vpop.f32.mrb[0].mxu0
      %v1290 = vadd.f32 0.0, %v1289
      %v1291 = vpop.f32.mrb[0].mxu0
      %v1292 = vpop.f32.mrb[0].mxu0
      %v1293 = vadd.f32 0.0, %v1292
      %v1294 = vpop.f32.mrb[0].mxu0
      %1295 = vmatprep.mubr.bf16.mxu0 0
      %1296 = vmatmul.mubr.bf16.gmra.mrb[0].mxu0 %v762
      %v1297 = vpop.f32.mrb[0].mxu0
      %v1298 = vadd.f32 0.0, %v1297
      %v1299 = vpop.f32.mrb[0].mxu0
      %v1300 = vpop.f32.mrb[0].mxu0
      %v1301 = vadd.f32 0.0, %v1300
      %v1302 = vpop.f32.mrb[0].mxu0
      %1303 = vmatprep.mubr.bf16.mxu0 0
      %1304 = vmatmul.mubr.bf16.gmra.mrb[0].mxu0 %v764
      %v1305 = vpop.f32.mrb[0].mxu0
      %v1306 = vadd.f32 0.0, %v1305
      %v1307 = vpop.f32.mrb[0].mxu0
      %v1308 = vpop.f32.mrb[0].mxu0
      %v1309 = vadd.f32 0.0, %v1308
      %v1310 = vpop.f32.mrb[0].mxu0
      %1311 = vmatprep.mubr.bf16.mxu0 0
      %1312 = vmatmul.mubr.bf16.gmra.mrb[0].mxu0 %v766
      %v1313 = vpop.f32.mrb[0].mxu0
      %v1314 = vadd.f32 0.0, %v1313
      %v1315 = vpop.f32.mrb[0].mxu0
      %v1316 = vpop.f32.mrb[0].mxu0
      %v1317 = vadd.f32 0.0, %v1316
      %v1318 = vpop.f32.mrb[0].mxu0
      %1319 = vmatprep.mubr.bf16.mxu0 0
      %1320 = vmatmul.mubr.bf16.gmra.mrb[0].mxu0 %v768
      %v1321 = vpop.f32.mrb[0].mxu0
      %v1322 = vadd.f32 0.0, %v1321
      %v1323 = vpop.f32.mrb[0].mxu0
      %v1324 = vpop.f32.mrb[0].mxu0
      %v1325 = vadd.f32 0.0, %v1324
      %v1326 = vpop.f32.mrb[0].mxu0
      %1327 = vmatprep.mubr.bf16.mxu0 0
      %1328 = vmatmul.mubr.bf16.gmra.mrb[0].mxu0 %v770
      %v1329 = vpop.f32.mrb[0].mxu0
      %v1330 = vadd.f32 0.0, %v1329
      %v1331 = vpop.f32.mrb[0].mxu0
      %v1332 = vpop.f32.mrb[0].mxu0
      %v1333 = vadd.f32 0.0, %v1332
      %v1334 = vpop.f32.mrb[0].mxu0
      %1335 = vmatprep.mubr.bf16.mxu0 0
      %1336 = vmatmul.mubr.bf16.gmra.mrb[0].mxu0 %v1197
      %v1337 = vpop.f32.mrb[0].mxu0
      %v1338 = vadd.f32 0.0, %v1337
      %v1339 = vpop.f32.mrb[0].mxu0
      %v1340 = vpop.f32.mrb[0].mxu0
      %v1341 = vadd.f32 0.0, %v1340
      %v1342 = vpop.f32.mrb[0].mxu0
      %1343 = vdwg.mxu0
      %v1344 = vadd.f32 %v1158, %v1234
      %v1345 = vadd.f32 %v1159, %v1237
      %v1346 = vadd.f32 %v1160, %v1242
      %v1347 = vadd.f32 %v1161, %v1245
      %v1348 = vadd.f32 %v1162, %v1250
      %v1349 = vadd.f32 %v1163, %v1253
      %v1350 = vadd.f32 %v1164, %v1258
      %v1351 = vadd.f32 %v1165, %v1261
      %v1352 = vadd.f32 %v1166, %v1266
      %v1353 = vadd.f32 %v1167, %v1269
      %v1354 = vadd.f32 %v1168, %v1274
      %v1355 = vadd.f32 %v1169, %v1277
      %v1356 = vadd.f32 %v1170, %v1282
      %v1357 = vadd.f32 %v1171, %v1285
      %v1358 = vadd.f32 %v1172, %v1290
      %v1359 = vadd.f32 %v1173, %v1293
      %v1360 = vadd.f32 %v1174, %v1298
      %v1361 = vadd.f32 %v1175, %v1301
      %v1362 = vadd.f32 %v1176, %v1306
      %v1363 = vadd.f32 %v1177, %v1309
      %v1364 = vadd.f32 %v1178, %v1314
      %v1365 = vadd.f32 %v1179, %v1317
      %v1366 = vadd.f32 %v1180, %v1322
      %v1367 = vadd.f32 %v1181, %v1325
      %v1368 = vadd.f32 %v1182, %v1330
      %v1369 = vadd.f32 %v1183, %v1333
      %v1370 = vadd.f32 %v1184, %v1338
      %v1371 = vadd.f32 %v1185, %v1341
      %v1372 = vpack.c.bf16 %v404, %v404
      %s1373 = scalar_lea.vmem %s313, 32
      %v1374 = vld [vmem:[%s1373] sm:$0xf]
      %v1375 = vld [vmem:[%s1373 + $0x4] sm:$0xf]
      %v1376 = vshll.u32 %v1186, 16
      %v1378 = vrot.slane %v1376, 1
      %v1379 = vsel %vm427, %v538, %v1378
      %v1380 = vshrl.u32 %v1186, 16
      %v1382 = vor.u32 %v1380, %v1378
      %v1384 = vshll.u32 %v1372, 16
      %v1386 = vrot.slane %v1384, 1
      %v1387 = vsel %vm427, %v1382, %v1386
      %v1390 = vunpack.c.l.b16 %v1374
      %v1391 = vunpack.c.l.b16 %v1375
      %v1392 = vpack.c.b16 %v1391, %v1390
      %v1395 = vsel %vm550, %v1379, 0
      %v1398 = vsel %vm550, %v1387, 0
      %1400 = vmatprep.subr.bf16.mxu0 0
      %1401 = vmatpush1.bf16.msra.mxu0 %v1392
      %1402 = vmatprep.subr.bf16.mxu0 0
      %1403 = vmatpush1.bf16.msra.mxu0 0
      %1404 = vmatprep.subr.bf16.mxu0 0
      %1405 = vmatpush1.bf16.msra.mxu0 0
      %1406 = vmatprep.subr.bf16.mxu0 0
      %1407 = vmatpush1.bf16.msra.mxu0 0
      %1408 = vmatprep.subr.bf16.mxu0 0
      %1409 = vmatpush1.bf16.msra.mxu0 0
      %1410 = vmatprep.subr.bf16.mxu0 0
      %1411 = vmatpush1.bf16.msra.mxu0 0
      %1412 = vmatprep.subr.bf16.mxu0 0
      %1413 = vmatpush1.bf16.msra.mxu0 0
      %1414 = vmatprep.subr.bf16.mxu0 0
      %1415 = vmatpush1.bf16.msra.mxu0 0
      %1416 = vmatprep.subr.bf16.mxu0 0
      %1417 = vmatpush1.bf16.msra.mxu0 0
      %1418 = vmatprep.subr.bf16.mxu0 0
      %1419 = vmatpush1.bf16.msra.mxu0 0
      %1420 = vmatprep.subr.bf16.mxu0 0
      %1421 = vmatpush1.bf16.msra.mxu0 0
      %1422 = vmatprep.subr.bf16.mxu0 0
      %1423 = vmatpush1.bf16.msra.mxu0 0
      %1424 = vmatprep.subr.bf16.mxu0 0
      %1425 = vmatpush1.bf16.msra.mxu0 0
      %1426 = vmatprep.subr.bf16.mxu0 0
      %1427 = vmatpush1.bf16.msra.mxu0 0
      %1428 = vmatprep.subr.bf16.mxu0 0
      %1429 = vmatpush1.bf16.msra.mxu0 0
      %1430 = vmatprep.subr.bf16.mxu0 0
      %1431 = vmatpush1.bf16.msra.mxu0 0
      %1432 = vmatprep.mubr.bf16.mxu0 0
      %1433 = vmatmul.mubr.bf16.gmra.mrb[0].mxu0 %v555
      %v1434 = vpop.f32.mrb[0].mxu0
      %v1435 = vadd.f32 0.0, %v1434
      %v1436 = vpop.f32.mrb[0].mxu0
      %v1437 = vpop.f32.mrb[0].mxu0
      %v1438 = vadd.f32 0.0, %v1437
      %v1439 = vpop.f32.mrb[0].mxu0
      %1440 = vmatprep.mubr.bf16.mxu0 0
      %1441 = vmatmul.mubr.bf16.gmra.mrb[0].mxu0 %v558
      %v1442 = vpop.f32.mrb[0].mxu0
      %v1443 = vadd.f32 0.0, %v1442
      %v1444 = vpop.f32.mrb[0].mxu0
      %v1445 = vpop.f32.mrb[0].mxu0
      %v1446 = vadd.f32 0.0, %v1445
      %v1447 = vpop.f32.mrb[0].mxu0
      %1448 = vmatprep.mubr.bf16.mxu0 0
      %1449 = vmatmul.mubr.bf16.gmra.mrb[0].mxu0 %v561
      %v1450 = vpop.f32.mrb[0].mxu0
      %v1451 = vadd.f32 0.0, %v1450
      %v1452 = vpop.f32.mrb[0].mxu0
      %v1453 = vpop.f32.mrb[0].mxu0
      %v1454 = vadd.f32 0.0, %v1453
      %v1455 = vpop.f32.mrb[0].mxu0
      %1456 = vmatprep.mubr.bf16.mxu0 0
      %1457 = vmatmul.mubr.bf16.gmra.mrb[0].mxu0 %v564
      %v1458 = vpop.f32.mrb[0].mxu0
      %v1459 = vadd.f32 0.0, %v1458
      %v1460 = vpop.f32.mrb[0].mxu0
      %v1461 = vpop.f32.mrb[0].mxu0
      %v1462 = vadd.f32 0.0, %v1461
      %v1463 = vpop.f32.mrb[0].mxu0
      %1464 = vmatprep.mubr.bf16.mxu0 0
      %1465 = vmatmul.mubr.bf16.gmra.mrb[0].mxu0 %v567
      %v1466 = vpop.f32.mrb[0].mxu0
      %v1467 = vadd.f32 0.0, %v1466
      %v1468 = vpop.f32.mrb[0].mxu0
      %v1469 = vpop.f32.mrb[0].mxu0
      %v1470 = vadd.f32 0.0, %v1469
      %v1471 = vpop.f32.mrb[0].mxu0
      %1472 = vmatprep.mubr.bf16.mxu0 0
      %1473 = vmatmul.mubr.bf16.gmra.mrb[0].mxu0 %v570
      %v1474 = vpop.f32.mrb[0].mxu0
      %v1475 = vadd.f32 0.0, %v1474
      %v1476 = vpop.f32.mrb[0].mxu0
      %v1477 = vpop.f32.mrb[0].mxu0
      %v1478 = vadd.f32 0.0, %v1477
      %v1479 = vpop.f32.mrb[0].mxu0
      %1480 = vmatprep.mubr.bf16.mxu0 0
      %1481 = vmatmul.mubr.bf16.gmra.mrb[0].mxu0 %v573
      %v1482 = vpop.f32.mrb[0].mxu0
      %v1483 = vadd.f32 0.0, %v1482
      %v1484 = vpop.f32.mrb[0].mxu0
      %v1485 = vpop.f32.mrb[0].mxu0
      %v1486 = vadd.f32 0.0, %v1485
      %v1487 = vpop.f32.mrb[0].mxu0
      %1488 = vmatprep.mubr.bf16.mxu0 0
      %1489 = vmatmul.mubr.bf16.gmra.mrb[0].mxu0 %v576
      %v1490 = vpop.f32.mrb[0].mxu0
      %v1491 = vadd.f32 0.0, %v1490
      %v1492 = vpop.f32.mrb[0].mxu0
      %v1493 = vpop.f32.mrb[0].mxu0
      %v1494 = vadd.f32 0.0, %v1493
      %v1495 = vpop.f32.mrb[0].mxu0
      %1496 = vmatprep.mubr.bf16.mxu0 0
      %1497 = vmatmul.mubr.bf16.gmra.mrb[0].mxu0 %v579
      %v1498 = vpop.f32.mrb[0].mxu0
      %v1499 = vadd.f32 0.0, %v1498
      %v1500 = vpop.f32.mrb[0].mxu0
      %v1501 = vpop.f32.mrb[0].mxu0
      %v1502 = vadd.f32 0.0, %v1501
      %v1503 = vpop.f32.mrb[0].mxu0
      %1504 = vmatprep.mubr.bf16.mxu0 0
      %1505 = vmatmul.mubr.bf16.gmra.mrb[0].mxu0 %v582
      %v1506 = vpop.f32.mrb[0].mxu0
      %v1507 = vadd.f32 0.0, %v1506
      %v1508 = vpop.f32.mrb[0].mxu0
      %v1509 = vpop.f32.mrb[0].mxu0
      %v1510 = vadd.f32 0.0, %v1509
      %v1511 = vpop.f32.mrb[0].mxu0
      %1512 = vmatprep.mubr.bf16.mxu0 0
      %1513 = vmatmul.mubr.bf16.gmra.mrb[0].mxu0 %v585
      %v1514 = vpop.f32.mrb[0].mxu0
      %v1515 = vadd.f32 0.0, %v1514
      %v1516 = vpop.f32.mrb[0].mxu0
      %v1517 = vpop.f32.mrb[0].mxu0
      %v1518 = vadd.f32 0.0, %v1517
      %v1519 = vpop.f32.mrb[0].mxu0
      %1520 = vmatprep.mubr.bf16.mxu0 0
      %1521 = vmatmul.mubr.bf16.gmra.mrb[0].mxu0 %v588
      %v1522 = vpop.f32.mrb[0].mxu0
      %v1523 = vadd.f32 0.0, %v1522
      %v1524 = vpop.f32.mrb[0].mxu0
      %v1525 = vpop.f32.mrb[0].mxu0
      %v1526 = vadd.f32 0.0, %v1525
      %v1527 = vpop.f32.mrb[0].mxu0
      %1528 = vmatprep.mubr.bf16.mxu0 0
      %1529 = vmatmul.mubr.bf16.gmra.mrb[0].mxu0 %v1395
      %v1530 = vpop.f32.mrb[0].mxu0
      %v1531 = vadd.f32 0.0, %v1530
      %v1532 = vpop.f32.mrb[0].mxu0
      %v1533 = vpop.f32.mrb[0].mxu0
      %v1534 = vadd.f32 0.0, %v1533
      %v1535 = vpop.f32.mrb[0].mxu0
      %1536 = vmatprep.mubr.bf16.mxu0 0
      %1537 = vmatmul.mubr.bf16.gmra.mrb[0].mxu0 %v1398
      %v1538 = vpop.f32.mrb[0].mxu0
      %v1539 = vadd.f32 0.0, %v1538
      %v1540 = vpop.f32.mrb[0].mxu0
      %v1541 = vpop.f32.mrb[0].mxu0
      %v1542 = vadd.f32 0.0, %v1541
      %v1543 = vpop.f32.mrb[0].mxu0
      %1544 = vdwg.mxu0
      %v1545 = vadd.f32 %v1344, %v1435
      %v1546 = vadd.f32 %v1345, %v1438
      %v1547 = vadd.f32 %v1346, %v1443
      %v1548 = vadd.f32 %v1347, %v1446
      %v1549 = vadd.f32 %v1348, %v1451
      %v1550 = vadd.f32 %v1349, %v1454
      %v1551 = vadd.f32 %v1350, %v1459
      %v1552 = vadd.f32 %v1351, %v1462
      %v1553 = vadd.f32 %v1352, %v1467
      %v1554 = vadd.f32 %v1353, %v1470
      %v1555 = vadd.f32 %v1354, %v1475
      %v1556 = vadd.f32 %v1355, %v1478
      %v1557 = vadd.f32 %v1356, %v1483
      %v1558 = vadd.f32 %v1357, %v1486
      %v1559 = vadd.f32 %v1358, %v1491
      %v1560 = vadd.f32 %v1359, %v1494
      %v1561 = vadd.f32 %v1360, %v1499
      %v1562 = vadd.f32 %v1361, %v1502
      %v1563 = vadd.f32 %v1362, %v1507
      %v1564 = vadd.f32 %v1363, %v1510
      %v1565 = vadd.f32 %v1364, %v1515
      %v1566 = vadd.f32 %v1365, %v1518
      %v1567 = vadd.f32 %v1366, %v1523
      %v1568 = vadd.f32 %v1367, %v1526
      %v1569 = vadd.f32 %v1368, %v1531
      %v1570 = vadd.f32 %v1369, %v1534
      %v1571 = vadd.f32 %v1370, %v1539
      %v1572 = vadd.f32 %v1371, %v1542
      %s1573 = scalar_lea.vmem %s313, 40
      %v1574 = vld [vmem:[%s1573] sm:$0xf]
      %v1575 = vld [vmem:[%s1573 + $0x4] sm:$0xf]
      %v1578 = vrot.slane %v1186, 1
      %v1579 = vsel %vm935, %v961, %v1578
      %v1580 = vrot.slane %v1372, 1
      %v1581 = vsel %vm935, %v1578, %v1580
      %v1584 = vunpack.c.l.b16 %v1574
      %v1585 = vunpack.c.l.b16 %v1575
      %v1586 = vpack.c.b16 %v1585, %v1584
      %v1589 = vsel %vm550, %v1579, 0
      %v1592 = vsel %vm550, %v1581, 0
      %1594 = vmatprep.subr.bf16.mxu0 0
      %1595 = vmatpush1.bf16.msra.mxu0 %v1586
      %1596 = vmatprep.subr.bf16.mxu0 0
      %1597 = vmatpush1.bf16.msra.mxu0 0
      %1598 = vmatprep.subr.bf16.mxu0 0
      %1599 = vmatpush1.bf16.msra.mxu0 0
      %1600 = vmatprep.subr.bf16.mxu0 0
      %1601 = vmatpush1.bf16.msra.mxu0 0
      %1602 = vmatprep.subr.bf16.mxu0 0
      %1603 = vmatpush1.bf16.msra.mxu0 0
      %1604 = vmatprep.subr.bf16.mxu0 0
      %1605 = vmatpush1.bf16.msra.mxu0 0
      %1606 = vmatprep.subr.bf16.mxu0 0
      %1607 = vmatpush1.bf16.msra.mxu0 0
      %1608 = vmatprep.subr.bf16.mxu0 0
      %1609 = vmatpush1.bf16.msra.mxu0 0
      %1610 = vmatprep.subr.bf16.mxu0 0
      %1611 = vmatpush1.bf16.msra.mxu0 0
      %1612 = vmatprep.subr.bf16.mxu0 0
      %1613 = vmatpush1.bf16.msra.mxu0 0
      %1614 = vmatprep.subr.bf16.mxu0 0
      %1615 = vmatpush1.bf16.msra.mxu0 0
      %1616 = vmatprep.subr.bf16.mxu0 0
      %1617 = vmatpush1.bf16.msra.mxu0 0
      %1618 = vmatprep.subr.bf16.mxu0 0
      %1619 = vmatpush1.bf16.msra.mxu0 0
      %1620 = vmatprep.subr.bf16.mxu0 0
      %1621 = vmatpush1.bf16.msra.mxu0 0
      %1622 = vmatprep.subr.bf16.mxu0 0
      %1623 = vmatpush1.bf16.msra.mxu0 0
      %1624 = vmatprep.subr.bf16.mxu0 0
      %1625 = vmatpush1.bf16.msra.mxu0 0
      %1626 = vmatprep.mubr.bf16.mxu0 0
      %1627 = vmatmul.mubr.bf16.gmra.mrb[0].mxu0 %v975
      %v1628 = vpop.f32.mrb[0].mxu0
      %v1629 = vadd.f32 0.0, %v1628
      %v1630 = vpop.f32.mrb[0].mxu0
      %v1631 = vpop.f32.mrb[0].mxu0
      %v1632 = vadd.f32 0.0, %v1631
      %v1633 = vpop.f32.mrb[0].mxu0
      %1634 = vmatprep.mubr.bf16.mxu0 0
      %1635 = vmatmul.mubr.bf16.gmra.mrb[0].mxu0 %v978
      %v1636 = vpop.f32.mrb[0].mxu0
      %v1637 = vadd.f32 0.0, %v1636
      %v1638 = vpop.f32.mrb[0].mxu0
      %v1639 = vpop.f32.mrb[0].mxu0
      %v1640 = vadd.f32 0.0, %v1639
      %v1641 = vpop.f32.mrb[0].mxu0
      %1642 = vmatprep.mubr.bf16.mxu0 0
      %1643 = vmatmul.mubr.bf16.gmra.mrb[0].mxu0 %v981
      %v1644 = vpop.f32.mrb[0].mxu0
      %v1645 = vadd.f32 0.0, %v1644
      %v1646 = vpop.f32.mrb[0].mxu0
      %v1647 = vpop.f32.mrb[0].mxu0
      %v1648 = vadd.f32 0.0, %v1647
      %v1649 = vpop.f32.mrb[0].mxu0
      %1650 = vmatprep.mubr.bf16.mxu0 0
      %1651 = vmatmul.mubr.bf16.gmra.mrb[0].mxu0 %v984
      %v1652 = vpop.f32.mrb[0].mxu0
      %v1653 = vadd.f32 0.0, %v1652
      %v1654 = vpop.f32.mrb[0].mxu0
      %v1655 = vpop.f32.mrb[0].mxu0
      %v1656 = vadd.f32 0.0, %v1655
      %v1657 = vpop.f32.mrb[0].mxu0
      %1658 = vmatprep.mubr.bf16.mxu0 0
      %1659 = vmatmul.mubr.bf16.gmra.mrb[0].mxu0 %v987
      %v1660 = vpop.f32.mrb[0].mxu0
      %v1661 = vadd.f32 0.0, %v1660
      %v1662 = vpop.f32.mrb[0].mxu0
      %v1663 = vpop.f32.mrb[0].mxu0
      %v1664 = vadd.f32 0.0, %v1663
      %v1665 = vpop.f32.mrb[0].mxu0
      %1666 = vmatprep.mubr.bf16.mxu0 0
      %1667 = vmatmul.mubr.bf16.gmra.mrb[0].mxu0 %v990
      %v1668 = vpop.f32.mrb[0].mxu0
      %v1669 = vadd.f32 0.0, %v1668
      %v1670 = vpop.f32.mrb[0].mxu0
      %v1671 = vpop.f32.mrb[0].mxu0
      %v1672 = vadd.f32 0.0, %v1671
      %v1673 = vpop.f32.mrb[0].mxu0
      %1674 = vmatprep.mubr.bf16.mxu0 0
      %1675 = vmatmul.mubr.bf16.gmra.mrb[0].mxu0 %v993
      %v1676 = vpop.f32.mrb[0].mxu0
      %v1677 = vadd.f32 0.0, %v1676
      %v1678 = vpop.f32.mrb[0].mxu0
      %v1679 = vpop.f32.mrb[0].mxu0
      %v1680 = vadd.f32 0.0, %v1679
      %v1681 = vpop.f32.mrb[0].mxu0
      %1682 = vmatprep.mubr.bf16.mxu0 0
      %1683 = vmatmul.mubr.bf16.gmra.mrb[0].mxu0 %v996
      %v1684 = vpop.f32.mrb[0].mxu0
      %v1685 = vadd.f32 0.0, %v1684
      %v1686 = vpop.f32.mrb[0].mxu0
      %v1687 = vpop.f32.mrb[0].mxu0
      %v1688 = vadd.f32 0.0, %v1687
      %v1689 = vpop.f32.mrb[0].mxu0
      %1690 = vmatprep.mubr.bf16.mxu0 0
      %1691 = vmatmul.mubr.bf16.gmra.mrb[0].mxu0 %v999
      %v1692 = vpop.f32.mrb[0].mxu0
      %v1693 = vadd.f32 0.0, %v1692
      %v1694 = vpop.f32.mrb[0].mxu0
      %v1695 = vpop.f32.mrb[0].mxu0
      %v1696 = vadd.f32 0.0, %v1695
      %v1697 = vpop.f32.mrb[0].mxu0
      %1698 = vmatprep.mubr.bf16.mxu0 0
      %1699 = vmatmul.mubr.bf16.gmra.mrb[0].mxu0 %v1002
      %v1700 = vpop.f32.mrb[0].mxu0
      %v1701 = vadd.f32 0.0, %v1700
      %v1702 = vpop.f32.mrb[0].mxu0
      %v1703 = vpop.f32.mrb[0].mxu0
      %v1704 = vadd.f32 0.0, %v1703
      %v1705 = vpop.f32.mrb[0].mxu0
      %1706 = vmatprep.mubr.bf16.mxu0 0
      %1707 = vmatmul.mubr.bf16.gmra.mrb[0].mxu0 %v1005
      %v1708 = vpop.f32.mrb[0].mxu0
      %v1709 = vadd.f32 0.0, %v1708
      %v1710 = vpop.f32.mrb[0].mxu0
      %v1711 = vpop.f32.mrb[0].mxu0
      %v1712 = vadd.f32 0.0, %v1711
      %v1713 = vpop.f32.mrb[0].mxu0
      %1714 = vmatprep.mubr.bf16.mxu0 0
      %1715 = vmatmul.mubr.bf16.gmra.mrb[0].mxu0 %v1008
      %v1716 = vpop.f32.mrb[0].mxu0
      %v1717 = vadd.f32 0.0, %v1716
      %v1718 = vpop.f32.mrb[0].mxu0
      %v1719 = vpop.f32.mrb[0].mxu0
      %v1720 = vadd.f32 0.0, %v1719
      %v1721 = vpop.f32.mrb[0].mxu0
      %1722 = vmatprep.mubr.bf16.mxu0 0
      %1723 = vmatmul.mubr.bf16.gmra.mrb[0].mxu0 %v1589
      %v1724 = vpop.f32.mrb[0].mxu0
      %v1725 = vadd.f32 0.0, %v1724
      %v1726 = vpop.f32.mrb[0].mxu0
      %v1727 = vpop.f32.mrb[0].mxu0
      %v1728 = vadd.f32 0.0, %v1727
      %v1729 = vpop.f32.mrb[0].mxu0
      %1730 = vmatprep.mubr.bf16.mxu0 0
      %1731 = vmatmul.mubr.bf16.gmra.mrb[0].mxu0 %v1592
      %v1732 = vpop.f32.mrb[0].mxu0
      %v1733 = vadd.f32 0.0, %v1732
      %v1734 = vpop.f32.mrb[0].mxu0
      %v1735 = vpop.f32.mrb[0].mxu0
      %v1736 = vadd.f32 0.0, %v1735
      %v1737 = vpop.f32.mrb[0].mxu0
      %1738 = vdwg.mxu0
      %v1739 = vadd.f32 %v1545, %v1629
      %v1740 = vadd.f32 %v1546, %v1632
      %v1741 = vadd.f32 %v1547, %v1637
      %v1742 = vadd.f32 %v1548, %v1640
      %v1743 = vadd.f32 %v1549, %v1645
      %v1744 = vadd.f32 %v1550, %v1648
      %v1745 = vadd.f32 %v1551, %v1653
      %v1746 = vadd.f32 %v1552, %v1656
      %v1747 = vadd.f32 %v1553, %v1661
      %v1748 = vadd.f32 %v1554, %v1664
      %v1749 = vadd.f32 %v1555, %v1669
      %v1750 = vadd.f32 %v1556, %v1672
      %v1751 = vadd.f32 %v1557, %v1677
      %v1752 = vadd.f32 %v1558, %v1680
      %v1753 = vadd.f32 %v1559, %v1685
      %v1754 = vadd.f32 %v1560, %v1688
      %v1755 = vadd.f32 %v1561, %v1693
      %v1756 = vadd.f32 %v1562, %v1696
      %v1757 = vadd.f32 %v1563, %v1701
      %v1758 = vadd.f32 %v1564, %v1704
      %v1759 = vadd.f32 %v1565, %v1709
      %v1760 = vadd.f32 %v1566, %v1712
      %v1761 = vadd.f32 %v1567, %v1717
      %v1762 = vadd.f32 %v1568, %v1720
      %v1763 = vadd.f32 %v1569, %v1725
      %v1764 = vadd.f32 %v1570, %v1728
      %v1765 = vadd.f32 %v1571, %v1733
      %v1766 = vadd.f32 %v1572, %v1736
      %v1767 = vpack.c.bf16 %v405, %v404
      %s1768 = scalar_lea.vmem %s313, 48
      %v1769 = vld [vmem:[%s1768] sm:$0xf]
      %v1770 = vld [vmem:[%s1768 + $0x4] sm:$0xf]
      %v1773 = vunpack.c.l.b16 %v1769
      %v1774 = vunpack.c.l.b16 %v1770
      %v1775 = vpack.c.b16 %v1774, %v1773
      %v1778 = vsel %vm550, %v1767, 0
      %1780 = vmatprep.subr.bf16.mxu0 0
      %1781 = vmatpush1.bf16.msra.mxu0 %v1775
      %1782 = vmatprep.subr.bf16.mxu0 0
      %1783 = vmatpush1.bf16.msra.mxu0 0
      %1784 = vmatprep.subr.bf16.mxu0 0
      %1785 = vmatpush1.bf16.msra.mxu0 0
      %1786 = vmatprep.subr.bf16.mxu0 0
      %1787 = vmatpush1.bf16.msra.mxu0 0
      %1788 = vmatprep.subr.bf16.mxu0 0
      %1789 = vmatpush1.bf16.msra.mxu0 0
      %1790 = vmatprep.subr.bf16.mxu0 0
      %1791 = vmatpush1.bf16.msra.mxu0 0
      %1792 = vmatprep.subr.bf16.mxu0 0
      %1793 = vmatpush1.bf16.msra.mxu0 0
      %1794 = vmatprep.subr.bf16.mxu0 0
      %1795 = vmatpush1.bf16.msra.mxu0 0
      %1796 = vmatprep.subr.bf16.mxu0 0
      %1797 = vmatpush1.bf16.msra.mxu0 0
      %1798 = vmatprep.subr.bf16.mxu0 0
      %1799 = vmatpush1.bf16.msra.mxu0 0
      %1800 = vmatprep.subr.bf16.mxu0 0
      %1801 = vmatpush1.bf16.msra.mxu0 0
      %1802 = vmatprep.subr.bf16.mxu0 0
      %1803 = vmatpush1.bf16.msra.mxu0 0
      %1804 = vmatprep.subr.bf16.mxu0 0
      %1805 = vmatpush1.bf16.msra.mxu0 0
      %1806 = vmatprep.subr.bf16.mxu0 0
      %1807 = vmatpush1.bf16.msra.mxu0 0
      %1808 = vmatprep.subr.bf16.mxu0 0
      %1809 = vmatpush1.bf16.msra.mxu0 0
      %1810 = vmatprep.subr.bf16.mxu0 0
      %1811 = vmatpush1.bf16.msra.mxu0 0
      %1812 = vmatprep.mubr.bf16.mxu0 0
      %1813 = vmatmul.mubr.bf16.gmra.mrb[0].mxu0 %v748
      %v1814 = vpop.f32.mrb[0].mxu0
      %v1815 = vadd.f32 0.0, %v1814
      %v1816 = vpop.f32.mrb[0].mxu0
      %v1817 = vpop.f32.mrb[0].mxu0
      %v1818 = vadd.f32 0.0, %v1817
      %v1819 = vpop.f32.mrb[0].mxu0
      %1820 = vmatprep.mubr.bf16.mxu0 0
      %1821 = vmatmul.mubr.bf16.gmra.mrb[0].mxu0 %v750
      %v1822 = vpop.f32.mrb[0].mxu0
      %v1823 = vadd.f32 0.0, %v1822
      %v1824 = vpop.f32.mrb[0].mxu0
      %v1825 = vpop.f32.mrb[0].mxu0
      %v1826 = vadd.f32 0.0, %v1825
      %v1827 = vpop.f32.mrb[0].mxu0
      %1828 = vmatprep.mubr.bf16.mxu0 0
      %1829 = vmatmul.mubr.bf16.gmra.mrb[0].mxu0 %v752
      %v1830 = vpop.f32.mrb[0].mxu0
      %v1831 = vadd.f32 0.0, %v1830
      %v1832 = vpop.f32.mrb[0].mxu0
      %v1833 = vpop.f32.mrb[0].mxu0
      %v1834 = vadd.f32 0.0, %v1833
      %v1835 = vpop.f32.mrb[0].mxu0
      %1836 = vmatprep.mubr.bf16.mxu0 0
      %1837 = vmatmul.mubr.bf16.gmra.mrb[0].mxu0 %v754
      %v1838 = vpop.f32.mrb[0].mxu0
      %v1839 = vadd.f32 0.0, %v1838
      %v1840 = vpop.f32.mrb[0].mxu0
      %v1841 = vpop.f32.mrb[0].mxu0
      %v1842 = vadd.f32 0.0, %v1841
      %v1843 = vpop.f32.mrb[0].mxu0
      %1844 = vmatprep.mubr.bf16.mxu0 0
      %1845 = vmatmul.mubr.bf16.gmra.mrb[0].mxu0 %v756
      %v1846 = vpop.f32.mrb[0].mxu0
      %v1847 = vadd.f32 0.0, %v1846
      %v1848 = vpop.f32.mrb[0].mxu0
      %v1849 = vpop.f32.mrb[0].mxu0
      %v1850 = vadd.f32 0.0, %v1849
      %v1851 = vpop.f32.mrb[0].mxu0
      %1852 = vmatprep.mubr.bf16.mxu0 0
      %1853 = vmatmul.mubr.bf16.gmra.mrb[0].mxu0 %v758
      %v1854 = vpop.f32.mrb[0].mxu0
      %v1855 = vadd.f32 0.0, %v1854
      %v1856 = vpop.f32.mrb[0].mxu0
      %v1857 = vpop.f32.mrb[0].mxu0
      %v1858 = vadd.f32 0.0, %v1857
      %v1859 = vpop.f32.mrb[0].mxu0
      %1860 = vmatprep.mubr.bf16.mxu0 0
      %1861 = vmatmul.mubr.bf16.gmra.mrb[0].mxu0 %v760
      %v1862 = vpop.f32.mrb[0].mxu0
      %v1863 = vadd.f32 0.0, %v1862
      %v1864 = vpop.f32.mrb[0].mxu0
      %v1865 = vpop.f32.mrb[0].mxu0
      %v1866 = vadd.f32 0.0, %v1865
      %v1867 = vpop.f32.mrb[0].mxu0
      %1868 = vmatprep.mubr.bf16.mxu0 0
      %1869 = vmatmul.mubr.bf16.gmra.mrb[0].mxu0 %v762
      %v1870 = vpop.f32.mrb[0].mxu0
      %v1871 = vadd.f32 0.0, %v1870
      %v1872 = vpop.f32.mrb[0].mxu0
      %v1873 = vpop.f32.mrb[0].mxu0
      %v1874 = vadd.f32 0.0, %v1873
      %v1875 = vpop.f32.mrb[0].mxu0
      %1876 = vmatprep.mubr.bf16.mxu0 0
      %1877 = vmatmul.mubr.bf16.gmra.mrb[0].mxu0 %v764
      %v1878 = vpop.f32.mrb[0].mxu0
      %v1879 = vadd.f32 0.0, %v1878
      %v1880 = vpop.f32.mrb[0].mxu0
      %v1881 = vpop.f32.mrb[0].mxu0
      %v1882 = vadd.f32 0.0, %v1881
      %v1883 = vpop.f32.mrb[0].mxu0
      %1884 = vmatprep.mubr.bf16.mxu0 0
      %1885 = vmatmul.mubr.bf16.gmra.mrb[0].mxu0 %v766
      %v1886 = vpop.f32.mrb[0].mxu0
      %v1887 = vadd.f32 0.0, %v1886
      %v1888 = vpop.f32.mrb[0].mxu0
      %v1889 = vpop.f32.mrb[0].mxu0
      %v1890 = vadd.f32 0.0, %v1889
      %v1891 = vpop.f32.mrb[0].mxu0
      %1892 = vmatprep.mubr.bf16.mxu0 0
      %1893 = vmatmul.mubr.bf16.gmra.mrb[0].mxu0 %v768
      %v1894 = vpop.f32.mrb[0].mxu0
      %v1895 = vadd.f32 0.0, %v1894
      %v1896 = vpop.f32.mrb[0].mxu0
      %v1897 = vpop.f32.mrb[0].mxu0
      %v1898 = vadd.f32 0.0, %v1897
      %v1899 = vpop.f32.mrb[0].mxu0
      %1900 = vmatprep.mubr.bf16.mxu0 0
      %1901 = vmatmul.mubr.bf16.gmra.mrb[0].mxu0 %v770
      %v1902 = vpop.f32.mrb[0].mxu0
      %v1903 = vadd.f32 0.0, %v1902
      %v1904 = vpop.f32.mrb[0].mxu0
      %v1905 = vpop.f32.mrb[0].mxu0
      %v1906 = vadd.f32 0.0, %v1905
      %v1907 = vpop.f32.mrb[0].mxu0
      %1908 = vmatprep.mubr.bf16.mxu0 0
      %1909 = vmatmul.mubr.bf16.gmra.mrb[0].mxu0 %v1197
      %v1910 = vpop.f32.mrb[0].mxu0
      %v1911 = vadd.f32 0.0, %v1910
      %v1912 = vpop.f32.mrb[0].mxu0
      %v1913 = vpop.f32.mrb[0].mxu0
      %v1914 = vadd.f32 0.0, %v1913
      %v1915 = vpop.f32.mrb[0].mxu0
      %1916 = vmatprep.mubr.bf16.mxu0 0
      %1917 = vmatmul.mubr.bf16.gmra.mrb[0].mxu0 %v1778
      %v1918 = vpop.f32.mrb[0].mxu0
      %v1919 = vadd.f32 0.0, %v1918
      %v1920 = vpop.f32.mrb[0].mxu0
      %v1921 = vpop.f32.mrb[0].mxu0
      %v1922 = vadd.f32 0.0, %v1921
      %v1923 = vpop.f32.mrb[0].mxu0
      %1924 = vdwg.mxu0
      %v1925 = vadd.f32 %v1739, %v1815
      %v1926 = vadd.f32 %v1740, %v1818
      %v1927 = vadd.f32 %v1741, %v1823
      %v1928 = vadd.f32 %v1742, %v1826
      %v1929 = vadd.f32 %v1743, %v1831
      %v1930 = vadd.f32 %v1744, %v1834
      %v1931 = vadd.f32 %v1745, %v1839
      %v1932 = vadd.f32 %v1746, %v1842
      %v1933 = vadd.f32 %v1747, %v1847
      %v1934 = vadd.f32 %v1748, %v1850
      %v1935 = vadd.f32 %v1749, %v1855
      %v1936 = vadd.f32 %v1750, %v1858
      %v1937 = vadd.f32 %v1751, %v1863
      %v1938 = vadd.f32 %v1752, %v1866
      %v1939 = vadd.f32 %v1753, %v1871
      %v1940 = vadd.f32 %v1754, %v1874
      %v1941 = vadd.f32 %v1755, %v1879
      %v1942 = vadd.f32 %v1756, %v1882
      %v1943 = vadd.f32 %v1757, %v1887
      %v1944 = vadd.f32 %v1758, %v1890
      %v1945 = vadd.f32 %v1759, %v1895
      %v1946 = vadd.f32 %v1760, %v1898
      %v1947 = vadd.f32 %v1761, %v1903
      %v1948 = vadd.f32 %v1762, %v1906
      %v1949 = vadd.f32 %v1763, %v1911
      %v1950 = vadd.f32 %v1764, %v1914
      %v1951 = vadd.f32 %v1765, %v1919
      %v1952 = vadd.f32 %v1766, %v1922
      %v1953 = vpack.c.bf16 %v406, %v406
      %s1954 = scalar_lea.vmem %s313, 56
      %v1955 = vld [vmem:[%s1954] sm:$0xf]
      %v1956 = vld [vmem:[%s1954 + $0x4] sm:$0xf]
      %v1957 = vshll.u32 %v1767, 16
      %v1959 = vrot.slane %v1957, 1
      %v1960 = vsel %vm427, %v1382, %v1959
      %v1961 = vshrl.u32 %v1767, 16
      %v1963 = vor.u32 %v1961, %v1959
      %v1965 = vshll.u32 %v1953, 16
      %v1967 = vrot.slane %v1965, 1
      %v1968 = vsel %vm427, %v1963, %v1967
      %v1971 = vunpack.c.l.b16 %v1955
      %v1972 = vunpack.c.l.b16 %v1956
      %v1973 = vpack.c.b16 %v1972, %v1971
      %v1976 = vsel %vm550, %v1960, 0
      %v1979 = vsel %vm550, %v1968, 0
      %1981 = vmatprep.subr.bf16.mxu0 0
      %1982 = vmatpush1.bf16.msra.mxu0 %v1973
      %1983 = vmatprep.subr.bf16.mxu0 0
      %1984 = vmatpush1.bf16.msra.mxu0 0
      %1985 = vmatprep.subr.bf16.mxu0 0
      %1986 = vmatpush1.bf16.msra.mxu0 0
      %1987 = vmatprep.subr.bf16.mxu0 0
      %1988 = vmatpush1.bf16.msra.mxu0 0
      %1989 = vmatprep.subr.bf16.mxu0 0
      %1990 = vmatpush1.bf16.msra.mxu0 0
      %1991 = vmatprep.subr.bf16.mxu0 0
      %1992 = vmatpush1.bf16.msra.mxu0 0
      %1993 = vmatprep.subr.bf16.mxu0 0
      %1994 = vmatpush1.bf16.msra.mxu0 0
      %1995 = vmatprep.subr.bf16.mxu0 0
      %1996 = vmatpush1.bf16.msra.mxu0 0
      %1997 = vmatprep.subr.bf16.mxu0 0
      %1998 = vmatpush1.bf16.msra.mxu0 0
      %1999 = vmatprep.subr.bf16.mxu0 0
      %2000 = vmatpush1.bf16.msra.mxu0 0
      %2001 = vmatprep.subr.bf16.mxu0 0
      %2002 = vmatpush1.bf16.msra.mxu0 0
      %2003 = vmatprep.subr.bf16.mxu0 0
      %2004 = vmatpush1.bf16.msra.mxu0 0
      %2005 = vmatprep.subr.bf16.mxu0 0
      %2006 = vmatpush1.bf16.msra.mxu0 0
      %2007 = vmatprep.subr.bf16.mxu0 0
      %2008 = vmatpush1.bf16.msra.mxu0 0
      %2009 = vmatprep.subr.bf16.mxu0 0
      %2010 = vmatpush1.bf16.msra.mxu0 0
      %2011 = vmatprep.subr.bf16.mxu0 0
      %2012 = vmatpush1.bf16.msra.mxu0 0
      %2013 = vmatprep.mubr.bf16.mxu0 0
      %2014 = vmatmul.mubr.bf16.gmra.mrb[0].mxu0 %v558
      %v2015 = vpop.f32.mrb[0].mxu0
      %v2016 = vadd.f32 0.0, %v2015
      %v2017 = vpop.f32.mrb[0].mxu0
      %v2018 = vpop.f32.mrb[0].mxu0
      %v2019 = vadd.f32 0.0, %v2018
      %v2020 = vpop.f32.mrb[0].mxu0
      %2021 = vmatprep.mubr.bf16.mxu0 0
      %2022 = vmatmul.mubr.bf16.gmra.mrb[0].mxu0 %v561
      %v2023 = vpop.f32.mrb[0].mxu0
      %v2024 = vadd.f32 0.0, %v2023
      %v2025 = vpop.f32.mrb[0].mxu0
      %v2026 = vpop.f32.mrb[0].mxu0
      %v2027 = vadd.f32 0.0, %v2026
      %v2028 = vpop.f32.mrb[0].mxu0
      %2029 = vmatprep.mubr.bf16.mxu0 0
      %2030 = vmatmul.mubr.bf16.gmra.mrb[0].mxu0 %v564
      %v2031 = vpop.f32.mrb[0].mxu0
      %v2032 = vadd.f32 0.0, %v2031
      %v2033 = vpop.f32.mrb[0].mxu0
      %v2034 = vpop.f32.mrb[0].mxu0
      %v2035 = vadd.f32 0.0, %v2034
      %v2036 = vpop.f32.mrb[0].mxu0
      %2037 = vmatprep.mubr.bf16.mxu0 0
      %2038 = vmatmul.mubr.bf16.gmra.mrb[0].mxu0 %v567
      %v2039 = vpop.f32.mrb[0].mxu0
      %v2040 = vadd.f32 0.0, %v2039
      %v2041 = vpop.f32.mrb[0].mxu0
      %v2042 = vpop.f32.mrb[0].mxu0
      %v2043 = vadd.f32 0.0, %v2042
      %v2044 = vpop.f32.mrb[0].mxu0
      %2045 = vmatprep.mubr.bf16.mxu0 0
      %2046 = vmatmul.mubr.bf16.gmra.mrb[0].mxu0 %v570
      %v2047 = vpop.f32.mrb[0].mxu0
      %v2048 = vadd.f32 0.0, %v2047
      %v2049 = vpop.f32.mrb[0].mxu0
      %v2050 = vpop.f32.mrb[0].mxu0
      %v2051 = vadd.f32 0.0, %v2050
      %v2052 = vpop.f32.mrb[0].mxu0
      %2053 = vmatprep.mubr.bf16.mxu0 0
      %2054 = vmatmul.mubr.bf16.gmra.mrb[0].mxu0 %v573
      %v2055 = vpop.f32.mrb[0].mxu0
      %v2056 = vadd.f32 0.0, %v2055
      %v2057 = vpop.f32.mrb[0].mxu0
      %v2058 = vpop.f32.mrb[0].mxu0
      %v2059 = vadd.f32 0.0, %v2058
      %v2060 = vpop.f32.mrb[0].mxu0
      %2061 = vmatprep.mubr.bf16.mxu0 0
      %2062 = vmatmul.mubr.bf16.gmra.mrb[0].mxu0 %v576
      %v2063 = vpop.f32.mrb[0].mxu0
      %v2064 = vadd.f32 0.0, %v2063
      %v2065 = vpop.f32.mrb[0].mxu0
      %v2066 = vpop.f32.mrb[0].mxu0
      %v2067 = vadd.f32 0.0, %v2066
      %v2068 = vpop.f32.mrb[0].mxu0
      %2069 = vmatprep.mubr.bf16.mxu0 0
      %2070 = vmatmul.mubr.bf16.gmra.mrb[0].mxu0 %v579
      %v2071 = vpop.f32.mrb[0].mxu0
      %v2072 = vadd.f32 0.0, %v2071
      %v2073 = vpop.f32.mrb[0].mxu0
      %v2074 = vpop.f32.mrb[0].mxu0
      %v2075 = vadd.f32 0.0, %v2074
      %v2076 = vpop.f32.mrb[0].mxu0
      %2077 = vmatprep.mubr.bf16.mxu0 0
      %2078 = vmatmul.mubr.bf16.gmra.mrb[0].mxu0 %v582
      %v2079 = vpop.f32.mrb[0].mxu0
      %v2080 = vadd.f32 0.0, %v2079
      %v2081 = vpop.f32.mrb[0].mxu0
      %v2082 = vpop.f32.mrb[0].mxu0
      %v2083 = vadd.f32 0.0, %v2082
      %v2084 = vpop.f32.mrb[0].mxu0
      %2085 = vmatprep.mubr.bf16.mxu0 0
      %2086 = vmatmul.mubr.bf16.gmra.mrb[0].mxu0 %v585
      %v2087 = vpop.f32.mrb[0].mxu0
      %v2088 = vadd.f32 0.0, %v2087
      %v2089 = vpop.f32.mrb[0].mxu0
      %v2090 = vpop.f32.mrb[0].mxu0
      %v2091 = vadd.f32 0.0, %v2090
      %v2092 = vpop.f32.mrb[0].mxu0
      %2093 = vmatprep.mubr.bf16.mxu0 0
      %2094 = vmatmul.mubr.bf16.gmra.mrb[0].mxu0 %v588
      %v2095 = vpop.f32.mrb[0].mxu0
      %v2096 = vadd.f32 0.0, %v2095
      %v2097 = vpop.f32.mrb[0].mxu0
      %v2098 = vpop.f32.mrb[0].mxu0
      %v2099 = vadd.f32 0.0, %v2098
      %v2100 = vpop.f32.mrb[0].mxu0
      %2101 = vmatprep.mubr.bf16.mxu0 0
      %2102 = vmatmul.mubr.bf16.gmra.mrb[0].mxu0 %v1395
      %v2103 = vpop.f32.mrb[0].mxu0
      %v2104 = vadd.f32 0.0, %v2103
      %v2105 = vpop.f32.mrb[0].mxu0
      %v2106 = vpop.f32.mrb[0].mxu0
      %v2107 = vadd.f32 0.0, %v2106
      %v2108 = vpop.f32.mrb[0].mxu0
      %2109 = vmatprep.mubr.bf16.mxu0 0
      %2110 = vmatmul.mubr.bf16.gmra.mrb[0].mxu0 %v1976
      %v2111 = vpop.f32.mrb[0].mxu0
      %v2112 = vadd.f32 0.0, %v2111
      %v2113 = vpop.f32.mrb[0].mxu0
      %v2114 = vpop.f32.mrb[0].mxu0
      %v2115 = vadd.f32 0.0, %v2114
      %v2116 = vpop.f32.mrb[0].mxu0
      %2117 = vmatprep.mubr.bf16.mxu0 0
      %2118 = vmatmul.mubr.bf16.gmra.mrb[0].mxu0 %v1979
      %v2119 = vpop.f32.mrb[0].mxu0
      %v2120 = vadd.f32 0.0, %v2119
      %v2121 = vpop.f32.mrb[0].mxu0
      %v2122 = vpop.f32.mrb[0].mxu0
      %v2123 = vadd.f32 0.0, %v2122
      %v2124 = vpop.f32.mrb[0].mxu0
      %2125 = vdwg.mxu0
      %v2126 = vadd.f32 %v1925, %v2016
      %v2127 = vadd.f32 %v1926, %v2019
      %v2128 = vadd.f32 %v1927, %v2024
      %v2129 = vadd.f32 %v1928, %v2027
      %v2130 = vadd.f32 %v1929, %v2032
      %v2131 = vadd.f32 %v1930, %v2035
      %v2132 = vadd.f32 %v1931, %v2040
      %v2133 = vadd.f32 %v1932, %v2043
      %v2134 = vadd.f32 %v1933, %v2048
      %v2135 = vadd.f32 %v1934, %v2051
      %v2136 = vadd.f32 %v1935, %v2056
      %v2137 = vadd.f32 %v1936, %v2059
      %v2138 = vadd.f32 %v1937, %v2064
      %v2139 = vadd.f32 %v1938, %v2067
      %v2140 = vadd.f32 %v1939, %v2072
      %v2141 = vadd.f32 %v1940, %v2075
      %v2142 = vadd.f32 %v1941, %v2080
      %v2143 = vadd.f32 %v1942, %v2083
      %v2144 = vadd.f32 %v1943, %v2088
      %v2145 = vadd.f32 %v1944, %v2091
      %v2146 = vadd.f32 %v1945, %v2096
      %v2147 = vadd.f32 %v1946, %v2099
      %v2148 = vadd.f32 %v1947, %v2104
      %v2149 = vadd.f32 %v1948, %v2107
      %v2150 = vadd.f32 %v1949, %v2112
      %v2151 = vadd.f32 %v1950, %v2115
      %v2152 = vadd.f32 %v1951, %v2120
      %v2153 = vadd.f32 %v1952, %v2123
      %s2154 = scalar_lea.vmem %s313, 64
      %v2155 = vld [vmem:[%s2154] sm:$0xf]
      %v2156 = vld [vmem:[%s2154 + $0x4] sm:$0xf]
      %v2159 = vrot.slane %v1767, 1
      %v2160 = vsel %vm935, %v1578, %v2159
      %v2161 = vrot.slane %v1953, 1
      %v2162 = vsel %vm935, %v2159, %v2161
      %v2165 = vunpack.c.l.b16 %v2155
      %v2166 = vunpack.c.l.b16 %v2156
      %v2167 = vpack.c.b16 %v2166, %v2165
      %v2170 = vsel %vm550, %v2160, 0
      %v2173 = vsel %vm550, %v2162, 0
      %2175 = vmatprep.subr.bf16.mxu0 0
      %2176 = vmatpush1.bf16.msra.mxu0 %v2167
      %2177 = vmatprep.subr.bf16.mxu0 0
      %2178 = vmatpush1.bf16.msra.mxu0 0
      %2179 = vmatprep.subr.bf16.mxu0 0
      %2180 = vmatpush1.bf16.msra.mxu0 0
      %2181 = vmatprep.subr.bf16.mxu0 0
      %2182 = vmatpush1.bf16.msra.mxu0 0
      %2183 = vmatprep.subr.bf16.mxu0 0
      %2184 = vmatpush1.bf16.msra.mxu0 0
      %2185 = vmatprep.subr.bf16.mxu0 0
      %2186 = vmatpush1.bf16.msra.mxu0 0
      %2187 = vmatprep.subr.bf16.mxu0 0
      %2188 = vmatpush1.bf16.msra.mxu0 0
      %2189 = vmatprep.subr.bf16.mxu0 0
      %2190 = vmatpush1.bf16.msra.mxu0 0
      %2191 = vmatprep.subr.bf16.mxu0 0
      %2192 = vmatpush1.bf16.msra.mxu0 0
      %2193 = vmatprep.subr.bf16.mxu0 0
      %2194 = vmatpush1.bf16.msra.mxu0 0
      %2195 = vmatprep.subr.bf16.mxu0 0
      %2196 = vmatpush1.bf16.msra.mxu0 0
      %2197 = vmatprep.subr.bf16.mxu0 0
      %2198 = vmatpush1.bf16.msra.mxu0 0
      %2199 = vmatprep.subr.bf16.mxu0 0
      %2200 = vmatpush1.bf16.msra.mxu0 0
      %2201 = vmatprep.subr.bf16.mxu0 0
      %2202 = vmatpush1.bf16.msra.mxu0 0
      %2203 = vmatprep.subr.bf16.mxu0 0
      %2204 = vmatpush1.bf16.msra.mxu0 0
      %2205 = vmatprep.subr.bf16.mxu0 0
      %2206 = vmatpush1.bf16.msra.mxu0 0
      %2207 = vmatprep.mubr.bf16.mxu0 0
      %2208 = vmatmul.mubr.bf16.gmra.mrb[0].mxu0 %v978
      %v2209 = vpop.f32.mrb[0].mxu0
      %v2210 = vadd.f32 0.0, %v2209
      %v2211 = vpop.f32.mrb[0].mxu0
      %v2212 = vpop.f32.mrb[0].mxu0
      %v2213 = vadd.f32 0.0, %v2212
      %v2214 = vpop.f32.mrb[0].mxu0
      %2215 = vmatprep.mubr.bf16.mxu0 0
      %2216 = vmatmul.mubr.bf16.gmra.mrb[0].mxu0 %v981
      %v2217 = vpop.f32.mrb[0].mxu0
      %v2218 = vadd.f32 0.0, %v2217
      %v2219 = vpop.f32.mrb[0].mxu0
      %v2220 = vpop.f32.mrb[0].mxu0
      %v2221 = vadd.f32 0.0, %v2220
      %v2222 = vpop.f32.mrb[0].mxu0
      %2223 = vmatprep.mubr.bf16.mxu0 0
      %2224 = vmatmul.mubr.bf16.gmra.mrb[0].mxu0 %v984
      %v2225 = vpop.f32.mrb[0].mxu0
      %v2226 = vadd.f32 0.0, %v2225
      %v2227 = vpop.f32.mrb[0].mxu0
      %v2228 = vpop.f32.mrb[0].mxu0
      %v2229 = vadd.f32 0.0, %v2228
      %v2230 = vpop.f32.mrb[0].mxu0
      %2231 = vmatprep.mubr.bf16.mxu0 0
      %2232 = vmatmul.mubr.bf16.gmra.mrb[0].mxu0 %v987
      %v2233 = vpop.f32.mrb[0].mxu0
      %v2234 = vadd.f32 0.0, %v2233
      %v2235 = vpop.f32.mrb[0].mxu0
      %v2236 = vpop.f32.mrb[0].mxu0
      %v2237 = vadd.f32 0.0, %v2236
      %v2238 = vpop.f32.mrb[0].mxu0
      %2239 = vmatprep.mubr.bf16.mxu0 0
      %2240 = vmatmul.mubr.bf16.gmra.mrb[0].mxu0 %v990
      %v2241 = vpop.f32.mrb[0].mxu0
      %v2242 = vadd.f32 0.0, %v2241
      %v2243 = vpop.f32.mrb[0].mxu0
      %v2244 = vpop.f32.mrb[0].mxu0
      %v2245 = vadd.f32 0.0, %v2244
      %v2246 = vpop.f32.mrb[0].mxu0
      %2247 = vmatprep.mubr.bf16.mxu0 0
      %2248 = vmatmul.mubr.bf16.gmra.mrb[0].mxu0 %v993
      %v2249 = vpop.f32.mrb[0].mxu0
      %v2250 = vadd.f32 0.0, %v2249
      %v2251 = vpop.f32.mrb[0].mxu0
      %v2252 = vpop.f32.mrb[0].mxu0
      %v2253 = vadd.f32 0.0, %v2252
      %v2254 = vpop.f32.mrb[0].mxu0
      %2255 = vmatprep.mubr.bf16.mxu0 0
      %2256 = vmatmul.mubr.bf16.gmra.mrb[0].mxu0 %v996
      %v2257 = vpop.f32.mrb[0].mxu0
      %v2258 = vadd.f32 0.0, %v2257
      %v2259 = vpop.f32.mrb[0].mxu0
      %v2260 = vpop.f32.mrb[0].mxu0
      %v2261 = vadd.f32 0.0, %v2260
      %v2262 = vpop.f32.mrb[0].mxu0
      %2263 = vmatprep.mubr.bf16.mxu0 0
      %2264 = vmatmul.mubr.bf16.gmra.mrb[0].mxu0 %v999
      %v2265 = vpop.f32.mrb[0].mxu0
      %v2266 = vadd.f32 0.0, %v2265
      %v2267 = vpop.f32.mrb[0].mxu0
      %v2268 = vpop.f32.mrb[0].mxu0
      %v2269 = vadd.f32 0.0, %v2268
      %v2270 = vpop.f32.mrb[0].mxu0
      %2271 = vmatprep.mubr.bf16.mxu0 0
      %2272 = vmatmul.mubr.bf16.gmra.mrb[0].mxu0 %v1002
      %v2273 = vpop.f32.mrb[0].mxu0
      %v2274 = vadd.f32 0.0, %v2273
      %v2275 = vpop.f32.mrb[0].mxu0
      %v2276 = vpop.f32.mrb[0].mxu0
      %v2277 = vadd.f32 0.0, %v2276
      %v2278 = vpop.f32.mrb[0].mxu0
      %2279 = vmatprep.mubr.bf16.mxu0 0
      %2280 = vmatmul.mubr.bf16.gmra.mrb[0].mxu0 %v1005
      %v2281 = vpop.f32.mrb[0].mxu0
      %v2282 = vadd.f32 0.0, %v2281
      %v2283 = vpop.f32.mrb[0].mxu0
      %v2284 = vpop.f32.mrb[0].mxu0
      %v2285 = vadd.f32 0.0, %v2284
      %v2286 = vpop.f32.mrb[0].mxu0
      %2287 = vmatprep.mubr.bf16.mxu0 0
      %2288 = vmatmul.mubr.bf16.gmra.mrb[0].mxu0 %v1008
      %v2289 = vpop.f32.mrb[0].mxu0
      %v2290 = vadd.f32 0.0, %v2289
      %v2291 = vpop.f32.mrb[0].mxu0
      %v2292 = vpop.f32.mrb[0].mxu0
      %v2293 = vadd.f32 0.0, %v2292
      %v2294 = vpop.f32.mrb[0].mxu0
      %2295 = vmatprep.mubr.bf16.mxu0 0
      %2296 = vmatmul.mubr.bf16.gmra.mrb[0].mxu0 %v1589
      %v2297 = vpop.f32.mrb[0].mxu0
      %v2298 = vadd.f32 0.0, %v2297
      %v2299 = vpop.f32.mrb[0].mxu0
      %v2300 = vpop.f32.mrb[0].mxu0
      %v2301 = vadd.f32 0.0, %v2300
      %v2302 = vpop.f32.mrb[0].mxu0
      %2303 = vmatprep.mubr.bf16.mxu0 0
      %2304 = vmatmul.mubr.bf16.gmra.mrb[0].mxu0 %v2170
      %v2305 = vpop.f32.mrb[0].mxu0
      %v2306 = vadd.f32 0.0, %v2305
      %v2307 = vpop.f32.mrb[0].mxu0
      %v2308 = vpop.f32.mrb[0].mxu0
      %v2309 = vadd.f32 0.0, %v2308
      %v2310 = vpop.f32.mrb[0].mxu0
      %2311 = vmatprep.mubr.bf16.mxu0 0
      %2312 = vmatmul.mubr.bf16.gmra.mrb[0].mxu0 %v2173
      %v2313 = vpop.f32.mrb[0].mxu0
      %v2314 = vadd.f32 0.0, %v2313
      %v2315 = vpop.f32.mrb[0].mxu0
      %v2316 = vpop.f32.mrb[0].mxu0
      %v2317 = vadd.f32 0.0, %v2316
      %v2318 = vpop.f32.mrb[0].mxu0
      %2319 = vdwg.mxu0
      %v2320 = vadd.f32 %v2126, %v2210
      %v2321 = vadd.f32 %v2127, %v2213
      %v2322 = vadd.f32 %v2128, %v2218
      %v2323 = vadd.f32 %v2129, %v2221
      %v2324 = vadd.f32 %v2130, %v2226
      %v2325 = vadd.f32 %v2131, %v2229
      %v2326 = vadd.f32 %v2132, %v2234
      %v2327 = vadd.f32 %v2133, %v2237
      %v2328 = vadd.f32 %v2134, %v2242
      %v2329 = vadd.f32 %v2135, %v2245
      %v2330 = vadd.f32 %v2136, %v2250
      %v2331 = vadd.f32 %v2137, %v2253
      %v2332 = vadd.f32 %v2138, %v2258
      %v2333 = vadd.f32 %v2139, %v2261
      %v2334 = vadd.f32 %v2140, %v2266
      %v2335 = vadd.f32 %v2141, %v2269
      %v2336 = vadd.f32 %v2142, %v2274
      %v2337 = vadd.f32 %v2143, %v2277
      %v2338 = vadd.f32 %v2144, %v2282
      %v2339 = vadd.f32 %v2145, %v2285
      %v2340 = vadd.f32 %v2146, %v2290
      %v2341 = vadd.f32 %v2147, %v2293
      %v2342 = vadd.f32 %v2148, %v2298
      %v2343 = vadd.f32 %v2149, %v2301
      %v2344 = vadd.f32 %v2150, %v2306
      %v2345 = vadd.f32 %v2151, %v2309
      %v2346 = vadd.f32 %v2152, %v2314
      %v2347 = vadd.f32 %v2153, %v2317
      %v2348 = vpack.c.bf16 %v2321, %v2320
      %v2349 = vpack.c.bf16 %v2323, %v2322
      %v2350 = vpack.c.bf16 %v2325, %v2324
      %v2351 = vpack.c.bf16 %v2327, %v2326
      %v2352 = vpack.c.bf16 %v2329, %v2328
      %v2353 = vpack.c.bf16 %v2331, %v2330
      %v2354 = vpack.c.bf16 %v2333, %v2332
      %v2355 = vpack.c.bf16 %v2335, %v2334
      %v2356 = vpack.c.bf16 %v2337, %v2336
      %v2357 = vpack.c.bf16 %v2339, %v2338
      %v2358 = vpack.c.bf16 %v2341, %v2340
      %v2359 = vpack.c.bf16 %v2343, %v2342
      %v2360 = vpack.c.bf16 %v2345, %v2344
      %v2361 = vpack.c.bf16 %v2347, %v2346
      %v2376 = vunpack.c.l.b16 %v2348
      %v2377 = vunpack.c.h.b16 %v2348
      %v2378 = vunpack.c.l.b16 %v2349
      %v2379 = vunpack.c.h.b16 %v2349
      %v2380 = vunpack.c.l.b16 %v2350
      %v2381 = vunpack.c.h.b16 %v2350
      %v2382 = vunpack.c.l.b16 %v2351
      %v2383 = vunpack.c.h.b16 %v2351
      %v2384 = vunpack.c.l.b16 %v2352
      %v2385 = vunpack.c.h.b16 %v2352
      %v2386 = vunpack.c.l.b16 %v2353
      %v2387 = vunpack.c.h.b16 %v2353
      %v2388 = vunpack.c.l.b16 %v2354
      %v2389 = vunpack.c.h.b16 %v2354
      %v2390 = vunpack.c.l.b16 %v2355
      %v2391 = vunpack.c.h.b16 %v2355
      %v2392 = vunpack.c.l.b16 %v2356
      %v2393 = vunpack.c.h.b16 %v2356
      %v2394 = vunpack.c.l.b16 %v2357
      %v2395 = vunpack.c.h.b16 %v2357
      %v2396 = vunpack.c.l.b16 %v2358
      %v2397 = vunpack.c.h.b16 %v2358
      %v2398 = vunpack.c.l.b16 %v2359
      %v2399 = vunpack.c.h.b16 %v2359
      %v2400 = vunpack.c.l.b16 %v2360
      %v2401 = vunpack.c.h.b16 %v2360
      %v2402 = vunpack.c.l.b16 %v2361
      %v2403 = vunpack.c.h.b16 %v2361
      %v2404 = vpack.c.b16 %v2376, %v2376
      %v2405 = vpack.c.b16 %v2377, %v2377
      %v2406 = vpack.c.b16 %v2378, %v2378
      %v2407 = vpack.c.b16 %v2379, %v2379
      %v2408 = vpack.c.b16 %v2380, %v2380
      %v2409 = vpack.c.b16 %v2381, %v2381
      %v2410 = vpack.c.b16 %v2382, %v2382
      %v2411 = vpack.c.b16 %v2383, %v2383
      %v2412 = vpack.c.b16 %v2384, %v2384
      %v2413 = vpack.c.b16 %v2385, %v2385
      %v2414 = vpack.c.b16 %v2386, %v2386
      %v2415 = vpack.c.b16 %v2387, %v2387
      %v2416 = vpack.c.b16 %v2388, %v2388
      %v2417 = vpack.c.b16 %v2389, %v2389
      %v2418 = vpack.c.b16 %v2390, %v2390
      %v2419 = vpack.c.b16 %v2391, %v2391
      %v2420 = vpack.c.b16 %v2392, %v2392
      %v2421 = vpack.c.b16 %v2393, %v2393
      %v2422 = vpack.c.b16 %v2394, %v2394
      %v2423 = vpack.c.b16 %v2395, %v2395
      %v2424 = vpack.c.b16 %v2396, %v2396
      %v2425 = vpack.c.b16 %v2397, %v2397
      %v2426 = vpack.c.b16 %v2398, %v2398
      %v2427 = vpack.c.b16 %v2399, %v2399
      %v2428 = vpack.c.b16 %v2400, %v2400
      %v2429 = vpack.c.b16 %v2401, %v2401
      %v2430 = vpack.c.b16 %v2402, %v2402
      %v2431 = vpack.c.b16 %v2403, %v2403
      %2460 = vst [vmem:[%s327] sm:$0xf] %v2404
      %2461 = vst [vmem:[%s327 + $0x4] sm:$0xf] %v2405
      %2462 = vst [vmem:[%s327 + $0x8] sm:$0xf] %v2406
      %2463 = vst [vmem:[%s327 + $0xc] sm:$0xf] %v2407
      %2464 = vst [vmem:[%s327 + $0x10] sm:$0xf] %v2408
      %2465 = vst [vmem:[%s327 + $0x14] sm:$0xf] %v2409
      %2466 = vst [vmem:[%s327 + $0x18] sm:$0xf] %v2410
      %2467 = vst [vmem:[%s327 + $0x1c] sm:$0xf] %v2411
      %2468 = vst [vmem:[%s327 + $0x20] sm:$0xf] %v2412
      %2469 = vst [vmem:[%s327 + $0x24] sm:$0xf] %v2413
      %2470 = vst [vmem:[%s327 + $0x28] sm:$0xf] %v2414
      %2471 = vst [vmem:[%s327 + $0x2c] sm:$0xf] %v2415
      %2472 = vst [vmem:[%s327 + $0x30] sm:$0xf] %v2416
      %2473 = vst [vmem:[%s327 + $0x34] sm:$0xf] %v2417
      %2474 = vst [vmem:[%s327 + $0x38] sm:$0xf] %v2418
      %2475 = vst [vmem:[%s327 + $0x3c] sm:$0xf] %v2419
      %2476 = vst [vmem:[%s327 + $0x40] sm:$0xf] %v2420
      %2477 = vst [vmem:[%s327 + $0x44] sm:$0xf] %v2421
      %2478 = vst [vmem:[%s327 + $0x48] sm:$0xf] %v2422
      %2479 = vst [vmem:[%s327 + $0x4c] sm:$0xf] %v2423
      %2480 = vst [vmem:[%s327 + $0x50] sm:$0xf] %v2424
      %2481 = vst [vmem:[%s327 + $0x54] sm:$0xf] %v2425
      %2482 = vst [vmem:[%s327 + $0x58] sm:$0xf] %v2426
      %2483 = vst [vmem:[%s327 + $0x5c] sm:$0xf] %v2427
      %2484 = vst [vmem:[%s327 + $0x60] sm:$0xf] %v2428
      %2485 = vst [vmem:[%s327 + $0x64] sm:$0xf] %v2429
      %2486 = vst [vmem:[%s327 + $0x68] sm:$0xf] %v2430
      %2487 = vst [vmem:[%s327 + $0x6c] sm:$0xf] %v2431
      %v2488 = vlaneseq
      %v2489 = vshrl.u32 %v2488, 7
      %v2490 = vadd.s32 %v2489, 8
      %v2491 = vadd.s32 %v2489, 16
      %v2492 = vadd.s32 %v2489, 24
      %v2493 = vadd.s32 %v2489, 32
      %v2494 = vadd.s32 %v2489, 40
      %v2495 = vadd.s32 %v2489, 48
      %v2496 = vadd.s32 %v2489, 56
      %v2497 = vadd.s32 %v2489, 64
      %v2498 = vadd.s32 %v2489, 72
      %v2499 = vadd.s32 %v2489, 80
      %v2500 = vadd.s32 %v2489, 88
      %v2501 = vadd.s32 %v2489, 96
      %v2502 = vadd.s32 %v2489, 104
      %v2503 = vadd.s32 %v2489, 112
      %v2504 = vadd.s32 %v2489, 120
      %v2505 = vadd.s32 %v2489, 128
      %v2506 = vadd.s32 %v2489, 136
      %v2507 = vadd.s32 %v2489, 144
      %v2508 = vadd.s32 %v2489, 152
      %v2509 = vadd.s32 %v2489, 160
      %v2510 = vadd.s32 %v2489, 168
      %v2511 = vadd.s32 %v2489, 176
      %v2512 = vadd.s32 %v2489, 184
      %v2513 = vadd.s32 %v2489, 192
      %v2514 = vadd.s32 %v2489, 200
      %v2515 = vadd.s32 %v2489, 208
      %v2516 = vadd.s32 %v2489, 216
      %vm2517 = vcmp.lt.s32.totalorder %v2489, 0
      %v2518 = vsub.s32 0, %v2489
      %v2519 = vsel %vm2517, %v2518, %v2489
      %v2520 = vshrl.u32 %v2519, 4
      %v2521 = vand.u32 %v2519, 15
      %v2522 = vsub.s32 0, %v2521
      %v2523 = vsel %vm2517, %v2522, %v2521
      %vm2524 = vcmp.lt.s32.totalorder %v2490, 0
      %v2525 = vsub.s32 0, %v2490
      %v2526 = vsel %vm2524, %v2525, %v2490
      %v2527 = vshrl.u32 %v2526, 4
      %v2528 = vand.u32 %v2526, 15
      %v2529 = vsub.s32 0, %v2528
      %v2530 = vsel %vm2524, %v2529, %v2528
      %vm2531 = vcmp.lt.s32.totalorder %v2491, 0
      %v2532 = vsub.s32 0, %v2491
      %v2533 = vsel %vm2531, %v2532, %v2491
      %v2534 = vshrl.u32 %v2533, 4
      %v2535 = vand.u32 %v2533, 15
      %v2536 = vsub.s32 0, %v2535
      %v2537 = vsel %vm2531, %v2536, %v2535
      %vm2538 = vcmp.lt.s32.totalorder %v2492, 0
      %v2539 = vsub.s32 0, %v2492
      %v2540 = vsel %vm2538, %v2539, %v2492
      %v2541 = vshrl.u32 %v2540, 4
      %v2542 = vand.u32 %v2540, 15
      %v2543 = vsub.s32 0, %v2542
      %v2544 = vsel %vm2538, %v2543, %v2542
      %vm2545 = vcmp.lt.s32.totalorder %v2493, 0
      %v2546 = vsub.s32 0, %v2493
      %v2547 = vsel %vm2545, %v2546, %v2493
      %v2548 = vshrl.u32 %v2547, 4
      %v2549 = vand.u32 %v2547, 15
      %v2550 = vsub.s32 0, %v2549
      %v2551 = vsel %vm2545, %v2550, %v2549
      %vm2552 = vcmp.lt.s32.totalorder %v2494, 0
      %v2553 = vsub.s32 0, %v2494
      %v2554 = vsel %vm2552, %v2553, %v2494
      %v2555 = vshrl.u32 %v2554, 4
      %v2556 = vand.u32 %v2554, 15
      %v2557 = vsub.s32 0, %v2556
      %v2558 = vsel %vm2552, %v2557, %v2556
      %vm2559 = vcmp.lt.s32.totalorder %v2495, 0
      %v2560 = vsub.s32 0, %v2495
      %v2561 = vsel %vm2559, %v2560, %v2495
      %v2562 = vshrl.u32 %v2561, 4
      %v2563 = vand.u32 %v2561, 15
      %v2564 = vsub.s32 0, %v2563
      %v2565 = vsel %vm2559, %v2564, %v2563
      %vm2566 = vcmp.lt.s32.totalorder %v2496, 0
      %v2567 = vsub.s32 0, %v2496
      %v2568 = vsel %vm2566, %v2567, %v2496
      %v2569 = vshrl.u32 %v2568, 4
      %v2570 = vand.u32 %v2568, 15
      %v2571 = vsub.s32 0, %v2570
      %v2572 = vsel %vm2566, %v2571, %v2570
      %vm2573 = vcmp.lt.s32.totalorder %v2497, 0
      %v2574 = vsub.s32 0, %v2497
      %v2575 = vsel %vm2573, %v2574, %v2497
      %v2576 = vshrl.u32 %v2575, 4
      %v2577 = vand.u32 %v2575, 15
      %v2578 = vsub.s32 0, %v2577
      %v2579 = vsel %vm2573, %v2578, %v2577
      %vm2580 = vcmp.lt.s32.totalorder %v2498, 0
      %v2581 = vsub.s32 0, %v2498
      %v2582 = vsel %vm2580, %v2581, %v2498
      %v2583 = vshrl.u32 %v2582, 4
      %v2584 = vand.u32 %v2582, 15
      %v2585 = vsub.s32 0, %v2584
      %v2586 = vsel %vm2580, %v2585, %v2584
      %vm2587 = vcmp.lt.s32.totalorder %v2499, 0
      %v2588 = vsub.s32 0, %v2499
      %v2589 = vsel %vm2587, %v2588, %v2499
      %v2590 = vshrl.u32 %v2589, 4
      %v2591 = vand.u32 %v2589, 15
      %v2592 = vsub.s32 0, %v2591
      %v2593 = vsel %vm2587, %v2592, %v2591
      %vm2594 = vcmp.lt.s32.totalorder %v2500, 0
      %v2595 = vsub.s32 0, %v2500
      %v2596 = vsel %vm2594, %v2595, %v2500
      %v2597 = vshrl.u32 %v2596, 4
      %v2598 = vand.u32 %v2596, 15
      %v2599 = vsub.s32 0, %v2598
      %v2600 = vsel %vm2594, %v2599, %v2598
      %vm2601 = vcmp.lt.s32.totalorder %v2501, 0
      %v2602 = vsub.s32 0, %v2501
      %v2603 = vsel %vm2601, %v2602, %v2501
      %v2604 = vshrl.u32 %v2603, 4
      %v2605 = vand.u32 %v2603, 15
      %v2606 = vsub.s32 0, %v2605
      %v2607 = vsel %vm2601, %v2606, %v2605
      %vm2608 = vcmp.lt.s32.totalorder %v2502, 0
      %v2609 = vsub.s32 0, %v2502
      %v2610 = vsel %vm2608, %v2609, %v2502
      %v2611 = vshrl.u32 %v2610, 4
      %v2612 = vand.u32 %v2610, 15
      %v2613 = vsub.s32 0, %v2612
      %v2614 = vsel %vm2608, %v2613, %v2612
      %vm2615 = vcmp.lt.s32.totalorder %v2503, 0
      %v2616 = vsub.s32 0, %v2503
      %v2617 = vsel %vm2615, %v2616, %v2503
      %v2618 = vshrl.u32 %v2617, 4
      %v2619 = vand.u32 %v2617, 15
      %v2620 = vsub.s32 0, %v2619
      %v2621 = vsel %vm2615, %v2620, %v2619
      %vm2622 = vcmp.lt.s32.totalorder %v2504, 0
      %v2623 = vsub.s32 0, %v2504
      %v2624 = vsel %vm2622, %v2623, %v2504
      %v2625 = vshrl.u32 %v2624, 4
      %v2626 = vand.u32 %v2624, 15
      %v2627 = vsub.s32 0, %v2626
      %v2628 = vsel %vm2622, %v2627, %v2626
      %vm2629 = vcmp.lt.s32.totalorder %v2505, 0
      %v2630 = vsub.s32 0, %v2505
      %v2631 = vsel %vm2629, %v2630, %v2505
      %v2632 = vshrl.u32 %v2631, 4
      %v2633 = vand.u32 %v2631, 15
      %v2634 = vsub.s32 0, %v2633
      %v2635 = vsel %vm2629, %v2634, %v2633
      %vm2636 = vcmp.lt.s32.totalorder %v2506, 0
      %v2637 = vsub.s32 0, %v2506
      %v2638 = vsel %vm2636, %v2637, %v2506
      %v2639 = vshrl.u32 %v2638, 4
      %v2640 = vand.u32 %v2638, 15
      %v2641 = vsub.s32 0, %v2640
      %v2642 = vsel %vm2636, %v2641, %v2640
      %vm2643 = vcmp.lt.s32.totalorder %v2507, 0
      %v2644 = vsub.s32 0, %v2507
      %v2645 = vsel %vm2643, %v2644, %v2507
      %v2646 = vshrl.u32 %v2645, 4
      %v2647 = vand.u32 %v2645, 15
      %v2648 = vsub.s32 0, %v2647
      %v2649 = vsel %vm2643, %v2648, %v2647
      %vm2650 = vcmp.lt.s32.totalorder %v2508, 0
      %v2651 = vsub.s32 0, %v2508
      %v2652 = vsel %vm2650, %v2651, %v2508
      %v2653 = vshrl.u32 %v2652, 4
      %v2654 = vand.u32 %v2652, 15
      %v2655 = vsub.s32 0, %v2654
      %v2656 = vsel %vm2650, %v2655, %v2654
      %vm2657 = vcmp.lt.s32.totalorder %v2509, 0
      %v2658 = vsub.s32 0, %v2509
      %v2659 = vsel %vm2657, %v2658, %v2509
      %v2660 = vshrl.u32 %v2659, 4
      %v2661 = vand.u32 %v2659, 15
      %v2662 = vsub.s32 0, %v2661
      %v2663 = vsel %vm2657, %v2662, %v2661
      %vm2664 = vcmp.lt.s32.totalorder %v2510, 0
      %v2665 = vsub.s32 0, %v2510
      %v2666 = vsel %vm2664, %v2665, %v2510
      %v2667 = vshrl.u32 %v2666, 4
      %v2668 = vand.u32 %v2666, 15
      %v2669 = vsub.s32 0, %v2668
      %v2670 = vsel %vm2664, %v2669, %v2668
      %vm2671 = vcmp.lt.s32.totalorder %v2511, 0
      %v2672 = vsub.s32 0, %v2511
      %v2673 = vsel %vm2671, %v2672, %v2511
      %v2674 = vshrl.u32 %v2673, 4
      %v2675 = vand.u32 %v2673, 15
      %v2676 = vsub.s32 0, %v2675
      %v2677 = vsel %vm2671, %v2676, %v2675
      %vm2678 = vcmp.lt.s32.totalorder %v2512, 0
      %v2679 = vsub.s32 0, %v2512
      %v2680 = vsel %vm2678, %v2679, %v2512
      %v2681 = vshrl.u32 %v2680, 4
      %v2682 = vand.u32 %v2680, 15
      %v2683 = vsub.s32 0, %v2682
      %v2684 = vsel %vm2678, %v2683, %v2682
      %vm2685 = vcmp.lt.s32.totalorder %v2513, 0
      %v2686 = vsub.s32 0, %v2513
      %v2687 = vsel %vm2685, %v2686, %v2513
      %v2688 = vshrl.u32 %v2687, 4
      %v2689 = vand.u32 %v2687, 15
      %v2690 = vsub.s32 0, %v2689
      %v2691 = vsel %vm2685, %v2690, %v2689
      %vm2692 = vcmp.lt.s32.totalorder %v2514, 0
      %v2693 = vsub.s32 0, %v2514
      %v2694 = vsel %vm2692, %v2693, %v2514
      %v2695 = vshrl.u32 %v2694, 4
      %v2696 = vand.u32 %v2694, 15
      %v2697 = vsub.s32 0, %v2696
      %v2698 = vsel %vm2692, %v2697, %v2696
      %vm2699 = vcmp.lt.s32.totalorder %v2515, 0
      %v2700 = vsub.s32 0, %v2515
      %v2701 = vsel %vm2699, %v2700, %v2515
      %v2702 = vshrl.u32 %v2701, 4
      %v2703 = vand.u32 %v2701, 15
      %v2704 = vsub.s32 0, %v2703
      %v2705 = vsel %vm2699, %v2704, %v2703
      %vm2706 = vcmp.lt.s32.totalorder %v2516, 0
      %v2707 = vsub.s32 0, %v2516
      %v2708 = vsel %vm2706, %v2707, %v2516
      %v2709 = vshrl.u32 %v2708, 4
      %v2710 = vand.u32 %v2708, 15
      %v2711 = vsub.s32 0, %v2710
      %v2712 = vsel %vm2706, %v2711, %v2710
      %vm2713 = vcmp.ne.s32.totalorder %v2523, 0
      %vm2714 = vcmp.ne.s32.totalorder %v2530, 0
      %vm2715 = vcmp.ne.s32.totalorder %v2537, 0
      %vm2716 = vcmp.ne.s32.totalorder %v2544, 0
      %vm2717 = vcmp.ne.s32.totalorder %v2551, 0
      %vm2718 = vcmp.ne.s32.totalorder %v2558, 0
      %vm2719 = vcmp.ne.s32.totalorder %v2565, 0
      %vm2720 = vcmp.ne.s32.totalorder %v2572, 0
      %vm2721 = vcmp.ne.s32.totalorder %v2579, 0
      %vm2722 = vcmp.ne.s32.totalorder %v2586, 0
      %vm2723 = vcmp.ne.s32.totalorder %v2593, 0
      %vm2724 = vcmp.ne.s32.totalorder %v2600, 0
      %vm2725 = vcmp.ne.s32.totalorder %v2607, 0
      %vm2726 = vcmp.ne.s32.totalorder %v2614, 0
      %vm2727 = vcmp.ne.s32.totalorder %v2621, 0
      %vm2728 = vcmp.ne.s32.totalorder %v2628, 0
      %vm2729 = vcmp.ne.s32.totalorder %v2635, 0
      %vm2730 = vcmp.ne.s32.totalorder %v2642, 0
      %vm2731 = vcmp.ne.s32.totalorder %v2649, 0
      %vm2732 = vcmp.ne.s32.totalorder %v2656, 0
      %vm2733 = vcmp.ne.s32.totalorder %v2663, 0
      %vm2734 = vcmp.ne.s32.totalorder %v2670, 0
      %vm2735 = vcmp.ne.s32.totalorder %v2677, 0
      %vm2736 = vcmp.ne.s32.totalorder %v2684, 0
      %vm2737 = vcmp.ne.s32.totalorder %v2691, 0
      %vm2738 = vcmp.ne.s32.totalorder %v2698, 0
      %vm2739 = vcmp.ne.s32.totalorder %v2705, 0
      %vm2740 = vcmp.ne.s32.totalorder %v2712, 0
      %vm2741 = vcmp.lt.s32.totalorder %v2523, 0
      %vm2742 = vcmp.lt.s32.totalorder %v2530, 0
      %vm2743 = vcmp.lt.s32.totalorder %v2537, 0
      %vm2744 = vcmp.lt.s32.totalorder %v2544, 0
      %vm2745 = vcmp.lt.s32.totalorder %v2551, 0
      %vm2746 = vcmp.lt.s32.totalorder %v2558, 0
      %vm2747 = vcmp.lt.s32.totalorder %v2565, 0
      %vm2748 = vcmp.lt.s32.totalorder %v2572, 0
      %vm2749 = vcmp.lt.s32.totalorder %v2579, 0
      %vm2750 = vcmp.lt.s32.totalorder %v2586, 0
      %vm2751 = vcmp.lt.s32.totalorder %v2593, 0
      %vm2752 = vcmp.lt.s32.totalorder %v2600, 0
      %vm2753 = vcmp.lt.s32.totalorder %v2607, 0
      %vm2754 = vcmp.lt.s32.totalorder %v2614, 0
      %vm2755 = vcmp.lt.s32.totalorder %v2621, 0
      %vm2756 = vcmp.lt.s32.totalorder %v2628, 0
      %vm2757 = vcmp.lt.s32.totalorder %v2635, 0
      %vm2758 = vcmp.lt.s32.totalorder %v2642, 0
      %vm2759 = vcmp.lt.s32.totalorder %v2649, 0
      %vm2760 = vcmp.lt.s32.totalorder %v2656, 0
      %vm2761 = vcmp.lt.s32.totalorder %v2663, 0
      %vm2762 = vcmp.lt.s32.totalorder %v2670, 0
      %vm2763 = vcmp.lt.s32.totalorder %v2677, 0
      %vm2764 = vcmp.lt.s32.totalorder %v2684, 0
      %vm2765 = vcmp.lt.s32.totalorder %v2691, 0
      %vm2766 = vcmp.lt.s32.totalorder %v2698, 0
      %vm2767 = vcmp.lt.s32.totalorder %v2705, 0
      %vm2768 = vcmp.lt.s32.totalorder %v2712, 0
      %vm2769 = vmand %vm2741, %vm2713
      %vm2770 = vmand %vm2742, %vm2714
      %vm2771 = vmand %vm2743, %vm2715
      %vm2772 = vmand %vm2744, %vm2716
      %vm2773 = vmand %vm2745, %vm2717
      %vm2774 = vmand %vm2746, %vm2718
      %vm2775 = vmand %vm2747, %vm2719
      %vm2776 = vmand %vm2748, %vm2720
      %vm2777 = vmand %vm2749, %vm2721
      %vm2778 = vmand %vm2750, %vm2722
      %vm2779 = vmand %vm2751, %vm2723
      %vm2780 = vmand %vm2752, %vm2724
      %vm2781 = vmand %vm2753, %vm2725
      %vm2782 = vmand %vm2754, %vm2726
      %vm2783 = vmand %vm2755, %vm2727
      %vm2784 = vmand %vm2756, %vm2728
      %vm2785 = vmand %vm2757, %vm2729
      %vm2786 = vmand %vm2758, %vm2730
      %vm2787 = vmand %vm2759, %vm2731
      %vm2788 = vmand %vm2760, %vm2732
      %vm2789 = vmand %vm2761, %vm2733
      %vm2790 = vmand %vm2762, %vm2734
      %vm2791 = vmand %vm2763, %vm2735
      %vm2792 = vmand %vm2764, %vm2736
      %vm2793 = vmand %vm2765, %vm2737
      %vm2794 = vmand %vm2766, %vm2738
      %vm2795 = vmand %vm2767, %vm2739
      %vm2796 = vmand %vm2768, %vm2740
      %v2797 = vadd.s32 %v2523, 16
      %v2798 = vadd.s32 %v2530, 16
      %v2799 = vadd.s32 %v2537, 16
      %v2800 = vadd.s32 %v2544, 16
      %v2801 = vadd.s32 %v2551, 16
      %v2802 = vadd.s32 %v2558, 16
      %v2803 = vadd.s32 %v2565, 16
      %v2804 = vadd.s32 %v2572, 16
      %v2805 = vadd.s32 %v2579, 16
      %v2806 = vadd.s32 %v2586, 16
      %v2807 = vadd.s32 %v2593, 16
      %v2808 = vadd.s32 %v2600, 16
      %v2809 = vadd.s32 %v2607, 16
      %v2810 = vadd.s32 %v2614, 16
      %v2811 = vadd.s32 %v2621, 16
      %v2812 = vadd.s32 %v2628, 16
      %v2813 = vadd.s32 %v2635, 16
      %v2814 = vadd.s32 %v2642, 16
      %v2815 = vadd.s32 %v2649, 16
      %v2816 = vadd.s32 %v2656, 16
      %v2817 = vadd.s32 %v2663, 16
      %v2818 = vadd.s32 %v2670, 16
      %v2819 = vadd.s32 %v2677, 16
      %v2820 = vadd.s32 %v2684, 16
      %v2821 = vadd.s32 %v2691, 16
      %v2822 = vadd.s32 %v2698, 16
      %v2823 = vadd.s32 %v2705, 16
      %v2824 = vadd.s32 %v2712, 16
      %v2825 = vsel %vm2769, %v2797, %v2523
      %v2826 = vsel %vm2770, %v2798, %v2530
      %v2827 = vsel %vm2771, %v2799, %v2537
      %v2828 = vsel %vm2772, %v2800, %v2544
      %v2829 = vsel %vm2773, %v2801, %v2551
      %v2830 = vsel %vm2774, %v2802, %v2558
      %v2831 = vsel %vm2775, %v2803, %v2565
      %v2832 = vsel %vm2776, %v2804, %v2572
      %v2833 = vsel %vm2777, %v2805, %v2579
      %v2834 = vsel %vm2778, %v2806, %v2586
      %v2835 = vsel %vm2779, %v2807, %v2593
      %v2836 = vsel %vm2780, %v2808, %v2600
      %v2837 = vsel %vm2781, %v2809, %v2607
      %v2838 = vsel %vm2782, %v2810, %v2614
      %v2839 = vsel %vm2783, %v2811, %v2621
      %v2840 = vsel %vm2784, %v2812, %v2628
      %v2841 = vsel %vm2785, %v2813, %v2635
      %v2842 = vsel %vm2786, %v2814, %v2642
      %v2843 = vsel %vm2787, %v2815, %v2649
      %v2844 = vsel %vm2788, %v2816, %v2656
      %v2845 = vsel %vm2789, %v2817, %v2663
      %v2846 = vsel %vm2790, %v2818, %v2670
      %v2847 = vsel %vm2791, %v2819, %v2677
      %v2848 = vsel %vm2792, %v2820, %v2684
      %v2849 = vsel %vm2793, %v2821, %v2691
      %v2850 = vsel %vm2794, %v2822, %v2698
      %v2851 = vsel %vm2795, %v2823, %v2705
      %v2852 = vsel %vm2796, %v2824, %v2712
      %vm2853 = vcmp.lt.s32.totalorder %v2825, 14
      %vm2854 = vcmp.lt.s32.totalorder %v2826, 14
      %vm2855 = vcmp.lt.s32.totalorder %v2827, 14
      %vm2856 = vcmp.lt.s32.totalorder %v2828, 14
      %vm2857 = vcmp.lt.s32.totalorder %v2829, 14
      %vm2858 = vcmp.lt.s32.totalorder %v2830, 14
      %vm2859 = vcmp.lt.s32.totalorder %v2831, 14
      %vm2860 = vcmp.lt.s32.totalorder %v2832, 14
      %vm2861 = vcmp.lt.s32.totalorder %v2833, 14
      %vm2862 = vcmp.lt.s32.totalorder %v2834, 14
      %vm2863 = vcmp.lt.s32.totalorder %v2835, 14
      %vm2864 = vcmp.lt.s32.totalorder %v2836, 14
      %vm2865 = vcmp.lt.s32.totalorder %v2837, 14
      %vm2866 = vcmp.lt.s32.totalorder %v2838, 14
      %vm2867 = vcmp.lt.s32.totalorder %v2839, 14
      %vm2868 = vcmp.lt.s32.totalorder %v2840, 14
      %vm2869 = vcmp.lt.s32.totalorder %v2841, 14
      %vm2870 = vcmp.lt.s32.totalorder %v2842, 14
      %vm2871 = vcmp.lt.s32.totalorder %v2843, 14
      %vm2872 = vcmp.lt.s32.totalorder %v2844, 14
      %vm2873 = vcmp.lt.s32.totalorder %v2845, 14
      %vm2874 = vcmp.lt.s32.totalorder %v2846, 14
      %vm2875 = vcmp.lt.s32.totalorder %v2847, 14
      %vm2876 = vcmp.lt.s32.totalorder %v2848, 14
      %vm2877 = vcmp.lt.s32.totalorder %v2849, 14
      %vm2878 = vcmp.lt.s32.totalorder %v2850, 14
      %vm2879 = vcmp.lt.s32.totalorder %v2851, 14
      %vm2880 = vcmp.lt.s32.totalorder %v2852, 14
      %v2881 = vsel %vm2853, 1, 0
      %v2882 = vsel %vm2854, 1, 0
      %v2883 = vsel %vm2855, 1, 0
      %v2884 = vsel %vm2856, 1, 0
      %v2885 = vsel %vm2857, 1, 0
      %v2886 = vsel %vm2858, 1, 0
      %v2887 = vsel %vm2859, 1, 0
      %v2888 = vsel %vm2860, 1, 0
      %v2889 = vsel %vm2861, 1, 0
      %v2890 = vsel %vm2862, 1, 0
      %v2891 = vsel %vm2863, 1, 0
      %v2892 = vsel %vm2864, 1, 0
      %v2893 = vsel %vm2865, 1, 0
      %v2894 = vsel %vm2866, 1, 0
      %v2895 = vsel %vm2867, 1, 0
      %v2896 = vsel %vm2868, 1, 0
      %v2897 = vsel %vm2869, 1, 0
      %v2898 = vsel %vm2870, 1, 0
      %v2899 = vsel %vm2871, 1, 0
      %v2900 = vsel %vm2872, 1, 0
      %v2901 = vsel %vm2873, 1, 0
      %v2902 = vsel %vm2874, 1, 0
      %v2903 = vsel %vm2875, 1, 0
      %v2904 = vsel %vm2876, 1, 0
      %v2905 = vsel %vm2877, 1, 0
      %v2906 = vsel %vm2878, 1, 0
      %v2907 = vsel %vm2879, 1, 0
      %v2908 = vsel %vm2880, 1, 0
      %v2909 = vcvt.s32.f32 %v2881
      %v2910 = vcvt.s32.f32 %v2882
      %v2911 = vcvt.s32.f32 %v2883
      %v2912 = vcvt.s32.f32 %v2884
      %v2913 = vcvt.s32.f32 %v2885
      %v2914 = vcvt.s32.f32 %v2886
      %v2915 = vcvt.s32.f32 %v2887
      %v2916 = vcvt.s32.f32 %v2888
      %v2917 = vcvt.s32.f32 %v2889
      %v2918 = vcvt.s32.f32 %v2890
      %v2919 = vcvt.s32.f32 %v2891
      %v2920 = vcvt.s32.f32 %v2892
      %v2921 = vcvt.s32.f32 %v2893
      %v2922 = vcvt.s32.f32 %v2894
      %v2923 = vcvt.s32.f32 %v2895
      %v2924 = vcvt.s32.f32 %v2896
      %v2925 = vcvt.s32.f32 %v2897
      %v2926 = vcvt.s32.f32 %v2898
      %v2927 = vcvt.s32.f32 %v2899
      %v2928 = vcvt.s32.f32 %v2900
      %v2929 = vcvt.s32.f32 %v2901
      %v2930 = vcvt.s32.f32 %v2902
      %v2931 = vcvt.s32.f32 %v2903
      %v2932 = vcvt.s32.f32 %v2904
      %v2933 = vcvt.s32.f32 %v2905
      %v2934 = vcvt.s32.f32 %v2906
      %v2935 = vcvt.s32.f32 %v2907
      %v2936 = vcvt.s32.f32 %v2908
      %v2937 = vmul.f32 %v2320, %v2909
      %v2938 = vmul.f32 %v2321, %v2910
      %v2939 = vmul.f32 %v2322, %v2911
      %v2940 = vmul.f32 %v2323, %v2912
      %v2941 = vmul.f32 %v2324, %v2913
      %v2942 = vmul.f32 %v2325, %v2914
      %v2943 = vmul.f32 %v2326, %v2915
      %v2944 = vmul.f32 %v2327, %v2916
      %v2945 = vmul.f32 %v2328, %v2917
      %v2946 = vmul.f32 %v2329, %v2918
      %v2947 = vmul.f32 %v2330, %v2919
      %v2948 = vmul.f32 %v2331, %v2920
      %v2949 = vmul.f32 %v2332, %v2921
      %v2950 = vmul.f32 %v2333, %v2922
      %v2951 = vmul.f32 %v2334, %v2923
      %v2952 = vmul.f32 %v2335, %v2924
      %v2953 = vmul.f32 %v2336, %v2925
      %v2954 = vmul.f32 %v2337, %v2926
      %v2955 = vmul.f32 %v2338, %v2927
      %v2956 = vmul.f32 %v2339, %v2928
      %v2957 = vmul.f32 %v2340, %v2929
      %v2958 = vmul.f32 %v2341, %v2930
      %v2959 = vmul.f32 %v2342, %v2931
      %v2960 = vmul.f32 %v2343, %v2932
      %v2961 = vmul.f32 %v2344, %v2933
      %v2962 = vmul.f32 %v2345, %v2934
      %v2963 = vmul.f32 %v2346, %v2935
      %v2964 = vmul.f32 %v2347, %v2936
      %v2965 = vld [vmem:[#allocation2] sm:$0x1]
      %v2966 = vadd.f32 %v2937, %v2938
      %v2967 = vadd.f32 %v2966, %v2939
      %v2968 = vadd.f32 %v2967, %v2940
      %v2969 = vadd.f32 %v2968, %v2941
      %v2970 = vadd.f32 %v2969, %v2942
      %v2971 = vadd.f32 %v2970, %v2943
      %v2972 = vadd.f32 %v2971, %v2944
      %v2973 = vadd.f32 %v2972, %v2945
      %v2974 = vadd.f32 %v2973, %v2946
      %v2975 = vadd.f32 %v2974, %v2947
      %v2976 = vadd.f32 %v2975, %v2948
      %v2977 = vadd.f32 %v2976, %v2949
      %v2978 = vadd.f32 %v2977, %v2950
      %v2979 = vadd.f32 %v2978, %v2951
      %v2980 = vadd.f32 %v2979, %v2952
      %v2981 = vadd.f32 %v2980, %v2953
      %v2982 = vadd.f32 %v2981, %v2954
      %v2983 = vadd.f32 %v2982, %v2955
      %v2984 = vadd.f32 %v2983, %v2956
      %v2985 = vadd.f32 %v2984, %v2957
      %v2986 = vadd.f32 %v2985, %v2958
      %v2987 = vadd.f32 %v2986, %v2959
      %v2988 = vadd.f32 %v2987, %v2960
      %v2989 = vadd.f32 %v2988, %v2961
      %v2990 = vadd.f32 %v2989, %v2962
      %v2991 = vadd.f32 %v2990, %v2963
      %v2992 = vadd.f32 %v2991, %v2964
      %v2993 = vrot.slane %v2992, 4
      %v2994 = vadd.f32 %v2992, %v2993
      %v2995 = vrot.slane %v2994, 2
      %v2996 = vadd.f32 %v2994, %v2995
      %v2997 = vrot.slane %v2996, 1
      %v2998 = vadd.f32 %v2996, %v2997
      %v2999 = vadd.f32 %v2965, %v2998
      %3000 = vst [vmem:[#allocation2] sm:$0x1] %v2999
      %v3001 = vld [vmem:[#allocation3] sm:$0x1]
      %v3002 = vmul.f32 %v2937, %v2320
      %v3003 = vmul.f32 %v2938, %v2321
      %v3004 = vmul.f32 %v2939, %v2322
      %v3005 = vmul.f32 %v2940, %v2323
      %v3006 = vmul.f32 %v2941, %v2324
      %v3007 = vmul.f32 %v2942, %v2325
      %v3008 = vmul.f32 %v2943, %v2326
      %v3009 = vmul.f32 %v2944, %v2327
      %v3010 = vmul.f32 %v2945, %v2328
      %v3011 = vmul.f32 %v2946, %v2329
      %v3012 = vmul.f32 %v2947, %v2330
      %v3013 = vmul.f32 %v2948, %v2331
      %v3014 = vmul.f32 %v2949, %v2332
      %v3015 = vmul.f32 %v2950, %v2333
      %v3016 = vmul.f32 %v2951, %v2334
      %v3017 = vmul.f32 %v2952, %v2335
      %v3018 = vmul.f32 %v2953, %v2336
      %v3019 = vmul.f32 %v2954, %v2337
      %v3020 = vmul.f32 %v2955, %v2338
      %v3021 = vmul.f32 %v2956, %v2339
      %v3022 = vmul.f32 %v2957, %v2340
      %v3023 = vmul.f32 %v2958, %v2341
      %v3024 = vmul.f32 %v2959, %v2342
      %v3025 = vmul.f32 %v2960, %v2343
      %v3026 = vmul.f32 %v2961, %v2344
      %v3027 = vmul.f32 %v2962, %v2345
      %v3028 = vmul.f32 %v2963, %v2346
      %v3029 = vmul.f32 %v2964, %v2347
      %v3030 = vadd.f32 %v3002, %v3003
      %v3031 = vadd.f32 %v3030, %v3004
      %v3032 = vadd.f32 %v3031, %v3005
      %v3033 = vadd.f32 %v3032, %v3006
      %v3034 = vadd.f32 %v3033, %v3007
      %v3035 = vadd.f32 %v3034, %v3008
      %v3036 = vadd.f32 %v3035, %v3009
      %v3037 = vadd.f32 %v3036, %v3010
      %v3038 = vadd.f32 %v3037, %v3011
      %v3039 = vadd.f32 %v3038, %v3012
      %v3040 = vadd.f32 %v3039, %v3013
      %v3041 = vadd.f32 %v3040, %v3014
      %v3042 = vadd.f32 %v3041, %v3015
      %v3043 = vadd.f32 %v3042, %v3016
      %v3044 = vadd.f32 %v3043, %v3017
      %v3045 = vadd.f32 %v3044, %v3018
      %v3046 = vadd.f32 %v3045, %v3019
      %v3047 = vadd.f32 %v3046, %v3020
      %v3048 = vadd.f32 %v3047, %v3021
      %v3049 = vadd.f32 %v3048, %v3022
      %v3050 = vadd.f32 %v3049, %v3023
      %v3051 = vadd.f32 %v3050, %v3024
      %v3052 = vadd.f32 %v3051, %v3025
      %v3053 = vadd.f32 %v3052, %v3026
      %v3054 = vadd.f32 %v3053, %v3027
      %v3055 = vadd.f32 %v3054, %v3028
      %v3056 = vadd.f32 %v3055, %v3029
      %v3057 = vrot.slane %v3056, 4
      %v3058 = vadd.f32 %v3056, %v3057
      %v3059 = vrot.slane %v3058, 2
      %v3060 = vadd.f32 %v3058, %v3059
      %v3061 = vrot.slane %v3060, 1
      %v3062 = vadd.f32 %v3060, %v3061
      %v3063 = vadd.f32 %v3001, %v3062
      %3064 = vst [vmem:[#allocation3] sm:$0x1] %v3063
      %p3065 = scmp.eq.s32.totalorder %s23, 1
      // Predicated region
      $region41: #{conv2d_bn_relu.2} parent=35 // pred_check
        %p3066 = pneg %p3065
      $region42: #{conv2d_bn_relu.2} parent=35 // pred_check_branch
        %3068 = sbr.rel (%p3066) target = $region44
      $region43: #{conv2d_bn_relu.2} parent=35 // pred_region
        %v3069 = vld [vmem:[#allocation2] sm:$0x1]
        %v3070 = vmul.f32 %v3069, 0.0025510204
        %v3071 = vld [vmem:[#allocation3] sm:$0x1]
        %v3072 = vmul.f32 %v3071, 0.0025510204
        %v3073 = vmul.f32 %v3070, %v3070
        %v3074 = vsub.f32 %v3072, %v3073
        %v3075 = vmax.f32 %v3074, 0.0
        %v3076 = vld [vmem:[%s316] sm:$0x1]
        %v3077 = vadd.f32 %v3075, 1e-05
        %v3078 = vrsqrt.pop %v3077
        %v3079 = vmul.f32 %v3076, %v3078
        %3080 = vst [vmem:[%s330] sm:$0x1] %v3079
        %v3081 = vld [vmem:[%s319] sm:$0x1]
        %v3082 = vmul.f32 %v3070, %v3079
        %v3083 = vsub.f32 %v3081, %v3082
        %3084 = vst [vmem:[%s333] sm:$0x1] %v3083
      $region44: #{conv2d_bn_relu.2} parent=35 // pred_fallthru
        _
      %p3085 = scmp.lt.s32.totalorder %s23, 1
      %s3086 = scalar_select %p3085, %s23, 1
      %p3087 = scmp.lt.s32.totalorder %s22, 0
      %s3088 = scalar_select %p3087, %s22, 0
      %s3089 = smul.addr %s3086, 28
      %s3090 = sadd.s32 %s3088, %s3089
      %s3091 = smul.addr %s3090, 4
      %s3092 = scalar_lea.vmem %s4, %s3091
      %p3093 = scmp.lt.s32.totalorder %s22, 0
      %s3094 = scalar_select %p3093, %s22, 0
      %s3095 = scalar_lea.vmem %s5, %s3094
      %p3096 = scmp.lt.s32.totalorder %s22, 0
      %s3097 = scalar_select %p3096, %s22, 0
      %s3098 = scalar_lea.vmem %s6, %s3097
      // Predicated region
      $region45: #{conv2d_bn_relu.2} parent=35 // pred_check
        %p3099 = pneg %p154
      $region46: #{conv2d_bn_relu.2} parent=35 // pred_check_branch
        %3101 = sbr.rel (%p3099) target = $region48
      $region47: #{conv2d_bn_relu.2} parent=35 // pred_region
        _
      $region48: #{conv2d_bn_relu.2} parent=35 // pred_fallthru
        _
      // Predicated region
      $region49: #{conv2d_bn_relu.2} parent=35 // pred_check
        %p3102 = pneg %p180
      $region50: #{conv2d_bn_relu.2} parent=35 // pred_check_branch
        %3104 = sbr.rel (%p3102) target = $region52
      $region51: #{conv2d_bn_relu.2} parent=35 // pred_region
        _
      $region52: #{conv2d_bn_relu.2} parent=35 // pred_fallthru
        _
      // Predicated region
      $region53: #{conv2d_bn_relu.2} parent=35 // pred_check
        %p3105 = pneg %p206
      $region54: #{conv2d_bn_relu.2} parent=35 // pred_check_branch
        %3107 = sbr.rel (%p3105) target = $region56
      $region55: #{conv2d_bn_relu.2} parent=35 // pred_region
        _
      $region56: #{conv2d_bn_relu.2} parent=35 // pred_fallthru
        _
      // Predicated region
      $region57: #{conv2d_bn_relu.2} parent=35 // pred_check
        %p3108 = pneg %p180
      $region58: #{conv2d_bn_relu.2} parent=35 // pred_check_branch
        %3110 = sbr.rel (%p3108) target = $region60
      $region59: #{conv2d_bn_relu.2} parent=35 // pred_region
        %p3111 = scmp.lt.s32.totalorder %s22, 0
        %s3112 = scalar_select %p3111, %s22, 0
        %s3113 = scalar_lea.vmem %s5, %s3112
      $region60: #{conv2d_bn_relu.2} parent=35 // pred_fallthru
        _
      // Predicated region
      $region61: #{conv2d_bn_relu.2} parent=35 // pred_check
        %p3114 = pneg %p206
      $region62: #{conv2d_bn_relu.2} parent=35 // pred_check_branch
        %3116 = sbr.rel (%p3114) target = $region64
      $region63: #{conv2d_bn_relu.2} parent=35 // pred_region
        %p3117 = scmp.lt.s32.totalorder %s22, 0
        %s3118 = scalar_select %p3117, %s22, 0
        %s3119 = scalar_lea.vmem %s6, %s3118
      $region64: #{conv2d_bn_relu.2} parent=35 // pred_fallthru
        _
    $region36: #{conv2d_bn_relu.2} parent=5 // pred_fallthru
      _
    %p3120 = scmp.le.s32.totalorder 2, %s13
    // Predicated region
    $region65: #{conv2d_bn_relu.2} parent=5 // pred_check
      %p3121 = pneg %p3120
    $region66: #{conv2d_bn_relu.2} parent=5 // pred_check_branch
      %3123 = sbr.rel (%p3121) target = $region68
    $region67: #{conv2d_bn_relu.2} parent=5 // pred_region
      %s3124 = ssub.s32 %s13, 2
      // Predicated region
      $region69: #{conv2d_bn_relu.2} parent=67 // pred_check
        %p3125 = pneg %p160
      $region70: #{conv2d_bn_relu.2} parent=67 // pred_check_branch
        %3127 = sbr.rel (%p3125) target = $region72
      $region71: #{conv2d_bn_relu.2} parent=67 // pred_region
        %p3128 = scmp.lt.s32.totalorder %s25, 1
        %s3129 = scalar_select %p3128, %s25, 1
        %p3130 = scmp.lt.s32.totalorder %s24, 0
        %s3131 = scalar_select %p3130, %s24, 0
        %s3132 = smul.addr %s3129, 28
        %s3133 = sadd.s32 %s3131, %s3132
        %s3134 = smul.addr %s3133, 4
        %s3135 = scalar_lea.vmem %s4, %s3134
      $region72: #{conv2d_bn_relu.2} parent=67 // pred_fallthru
        _
    $region68: #{conv2d_bn_relu.2} parent=5 // pred_fallthru
      _
  $region6: #{conv2d_bn_relu.2} parent=0 // loop_footer
    %s17 = sadd.s32 1, %s13
  $region7: #{conv2d_bn_relu.2} parent=0 // loop_footer_branch
    %12 = sbr.rel target = $region3
  $region8: #{conv2d_bn_relu.2} parent=0 // loop_exit
    _

</llo_original>
